<compile_context>
chip_gen: v5e
topology: v5e:2x2
jax: 0.10.0
libtpu: 0.0.40
codegen_flags: <defaults>
</compile_context>

<pallas_src>
import functools

import jax
import jax.numpy as jnp
from jax.experimental import pallas as pl
from jax.experimental.pallas import tpu as pltpu


# ---------------------------------------------------------------------------
# Fused kernel: image MLP (noc_net) + PointNet (cad_net) x2 + TripletMarginLoss
# ---------------------------------------------------------------------------
def _retrieval_head_kernel(sc_ref, pos_ref, neg_ref,
                           iw1_ref, ib1_ref, iw2_ref, ib2_ref,
                           cw1_ref, cb1_ref, cw2_ref, cb2_ref,
                           loss_ref, *, n_shapes, n_points, margin, eps):
    bf16 = jnp.bfloat16

    # ---- noc_net = make_image_mlp(): Linear -> ReLU -> Linear -> ReLU ------
    # bf16 MXU operands, f32 accumulate; bias/ReLU epilogue in f32.
    x = sc_ref[...].astype(bf16)                                  # (B, C)
    h = jnp.dot(x, iw1_ref[...], preferred_element_type=jnp.float32)
    h = jnp.maximum(h + ib1_ref[...], 0.0)                        # (B, 1024) f32
    y = jnp.dot(h.astype(bf16), iw2_ref[...],
                preferred_element_type=jnp.float32)
    noc = jnp.maximum(y + ib2_ref[...], 0.0)                      # (B, E) f32

    # ---- cad_net (PointNet stand-in): shared per-point MLP + max pool ------
    # TODO(synk): PointNet is defined outside this module; a canonical shared
    # per-point MLP + max-pool encoder is implemented here as the stand-in.
    def pointnet(pts_ref):
        p = pts_ref[...].astype(bf16)                             # (B*N, 3)
        h1 = jnp.dot(p, cw1_ref[...], preferred_element_type=jnp.float32)
        h1 = jnp.maximum(h1 + cb1_ref[...], 0.0)                  # (B*N, 64) f32
        f = jnp.dot(h1.astype(bf16), cw2_ref[...],
                    preferred_element_type=jnp.float32) + cb2_ref[...]
        # per-shape max pool: free reshape (tile-aligned) + one sublane reduce
        f = f.reshape(n_shapes, n_points, f.shape[-1])            # (B, N, E)
        return jnp.max(f, axis=1)                                 # (B, E) f32

    pos = pointnet(pos_ref)
    neg = pointnet(neg_ref)

    # ---- nn.TripletMarginLoss(margin, p=2, eps=1e-6, reduction='mean') -----
    #   d(x, y) = || x - y + eps ||_2 ;  loss = mean(relu(d(a,p) - d(a,n) + m))
    d_ap = jnp.sqrt(jnp.sum((noc - pos + eps) ** 2, axis=-1, keepdims=True))
    d_an = jnp.sqrt(jnp.sum((noc - neg + eps) ** 2, axis=-1, keepdims=True))
    hinge = jnp.maximum(d_ap - d_an + margin, 0.0)                # (B, 1)
    loss_ref[...] = jnp.sum(hinge, axis=0, keepdims=True) * (1.0 / n_shapes)


# ---------------------------------------------------------------------------
# RetrievalHead.forward (training branch, baseline=False, mode='pointnet_image')
# ---------------------------------------------------------------------------
def retrieval_head_forward_train(params, shape_code, pos_cads, neg_cads,
                                 margin=0.5, eps=1e-6):
    B, N, _ = pos_cads.shape
    vm = pl.BlockSpec(memory_space=pltpu.MemorySpace.VMEM)   # whole-array blocks
    kernel = functools.partial(_retrieval_head_kernel, n_shapes=B, n_points=N,
                               margin=float(margin), eps=float(eps))
    loss = pl.pallas_call(
        kernel,
        out_shape=jax.ShapeDtypeStruct((1, 1), jnp.float32),
        in_specs=[vm] * 11,
        out_specs=vm,
    )(shape_code,
      pos_cads.reshape(B * N, 3),      # view-only reshapes, no HBM copies
      neg_cads.reshape(B * N, 3),
      params["img_w1"], params["img_b1"], params["img_w2"], params["img_b2"],
      params["cad_w1"], params["cad_b1"], params["cad_w2"], params["cad_b2"])
    return {"loss_triplet": loss[0, 0]}
    # TODO(synk): inference paths (_perform_baseline / _embedding_lookup,
    # embedding_lookup, nearest_points_retrieval) rely on external helpers and
    # Python dict/string bookkeeping with no clean Pallas equivalent.


def init_params(key, shape_code_size=32, hidden=1024, embedding_dim=128,
                pointnet_hidden=64):
    ks = jax.random.split(key, 4)

    def lin(k, fan_in, fan_out):
        # Stored (in, out) so kernels compute y = x @ W + b; bf16 storage
        # halves weight DMA and hits the single-pass bf16 MXU path.
        w = 0.05 * jax.random.normal(k, (fan_in, fan_out), jnp.float32)
        return w.astype(jnp.bfloat16)

    return {
        "img_w1": lin(ks[0], shape_code_size, hidden),
        "img_b1": jnp.zeros((1, hidden), jnp.float32),
        "img_w2": lin(ks[1], hidden, embedding_dim),
        "img_b2": jnp.zeros((1, embedding_dim), jnp.float32),
        "cad_w1": lin(ks[2], 3, pointnet_hidden),
        "cad_b1": jnp.zeros((1, pointnet_hidden), jnp.float32),
        "cad_w2": lin(ks[3], pointnet_hidden, embedding_dim),
        "cad_b2": jnp.zeros((1, embedding_dim), jnp.float32),
    }


# Pure-JAX reference mirroring the kernel's precision choices (bf16 matmuls,
# f32 epilogue) -- used only for the correctness check in __main__.
def _ref_forward(params, sc, pos, neg, margin=0.5, eps=1e-6):
    bf16 = jnp.bfloat16
    h = jnp.maximum(jnp.dot(sc.astype(bf16), params["img_w1"],
                            preferred_element_type=jnp.float32)
                    + params["img_b1"], 0.0)
    noc = jnp.maximum(jnp.dot(h.astype(bf16), params["img_w2"],
                              preferred_element_type=jnp.float32)
                      + params["img_b2"], 0.0)

    def pnet(pts):
        B, N, _ = pts.shape
        p = pts.reshape(B * N, 3).astype(bf16)
        h1 = jnp.maximum(jnp.dot(p, params["cad_w1"],
                                 preferred_element_type=jnp.float32)
                         + params["cad_b1"], 0.0)
        f = jnp.dot(h1.astype(bf16), params["cad_w2"],
                    preferred_element_type=jnp.float32) + params["cad_b2"]
        return jnp.max(f.reshape(B, N, -1), axis=1)

    pe, ne = pnet(pos), pnet(neg)
    d_ap = jnp.sqrt(jnp.sum((noc - pe + eps) ** 2, axis=-1))
    d_an = jnp.sqrt(jnp.sum((noc - ne + eps) ** 2, axis=-1))
    return jnp.mean(jnp.maximum(d_ap - d_an + margin, 0.0))


if __name__ == "__main__":
    key = jax.random.PRNGKey(0)
    B = 8                 # number of training instances (triplets)
    SHAPE_CODE = 32       # shape_code_size
    EMB = 128             # cad_net.embedding_dim
    N_PTS = 128           # points per CAD model

    k_sc, k_pos, k_neg, k_par = jax.random.split(key, 4)
    shape_code = jax.random.normal(k_sc, (B, SHAPE_CODE), jnp.float32)
    pos_cads = jax.random.normal(k_pos, (B, N_PTS, 3), jnp.float32)
    neg_cads = jax.random.normal(k_neg, (B, N_PTS, 3), jnp.float32)
    params = init_params(k_par, SHAPE_CODE, 1024, EMB, 64)

    fwd = jax.jit(retrieval_head_forward_train)
    losses = fwd(params, shape_code, pos_cads, neg_cads)
    jax.block_until_ready(losses["loss_triplet"])

    ref = _ref_forward(params, shape_code, pos_cads, neg_cads)
    assert jnp.allclose(losses["loss_triplet"], ref, atol=5e-3, rtol=5e-3), (
        float(losses["loss_triplet"]), float(ref))
    print("KERNEL_OK")
</pallas_src>

<mosaic_0001>
module attributes {stable_mosaic.version = 11 : i64} {
  func.func @_retrieval_head_kernel(%arg0: memref<8x32xf32, #tpu.memory_space<vmem>>, %arg1: memref<1024x3xf32, #tpu.memory_space<vmem>>, %arg2: memref<1024x3xf32, #tpu.memory_space<vmem>>, %arg3: memref<32x1024xbf16, #tpu.memory_space<vmem>>, %arg4: memref<1x1024xf32, #tpu.memory_space<vmem>>, %arg5: memref<1024x128xbf16, #tpu.memory_space<vmem>>, %arg6: memref<1x128xf32, #tpu.memory_space<vmem>>, %arg7: memref<3x64xbf16, #tpu.memory_space<vmem>>, %arg8: memref<1x64xf32, #tpu.memory_space<vmem>>, %arg9: memref<64x128xbf16, #tpu.memory_space<vmem>>, %arg10: memref<1x128xf32, #tpu.memory_space<vmem>>, %arg11: memref<1x1xf32, #tpu.memory_space<vmem>>) attributes {dimension_semantics = [], scalar_prefetch = 0 : i64, scratch_operands = 0 : i64, tpu.core_type = #tpu.core_type<tc>} {
    %c0 = arith.constant 0 : index
    %c0_0 = arith.constant 0 : index
    %0 = vector.load %arg0[%c0, %c0_0] : memref<8x32xf32, #tpu.memory_space<vmem>>, vector<8x32xf32>
    %1 = arith.truncf %0 : vector<8x32xf32> to vector<8x32xbf16>
    %c0_1 = arith.constant 0 : index
    %c0_2 = arith.constant 0 : index
    %2 = vector.load %arg3[%c0_1, %c0_2] : memref<32x1024xbf16, #tpu.memory_space<vmem>>, vector<32x1024xbf16>
    %cst = arith.constant dense<0.000000e+00> : vector<8x1024xf32>
    %3 = tpu.matmul %1, %2, %cst {dimension_numbers = #tpu.dot_dimension_numbers<[1], [0], [0], [1], [0, 0, 1, 1], [], []>} : vector<8x32xbf16>, vector<32x1024xbf16>, vector<8x1024xf32> -> vector<8x1024xf32>
    %c0_3 = arith.constant 0 : index
    %c0_4 = arith.constant 0 : index
    %4 = vector.load %arg4[%c0_3, %c0_4] : memref<1x1024xf32, #tpu.memory_space<vmem>>, vector<1x1024xf32>
    %5 = vector.broadcast %4 : vector<1x1024xf32> to vector<8x1024xf32>
    %6 = arith.addf %3, %5 : vector<8x1024xf32>
    %cst_5 = arith.constant 0.000000e+00 : f32
    %7 = vector.broadcast %cst_5 : f32 to vector<8x1024xf32>
    %8 = arith.maximumf %6, %7 : vector<8x1024xf32>
    %9 = arith.truncf %8 : vector<8x1024xf32> to vector<8x1024xbf16>
    %c0_6 = arith.constant 0 : index
    %c0_7 = arith.constant 0 : index
    %10 = vector.load %arg5[%c0_6, %c0_7] : memref<1024x128xbf16, #tpu.memory_space<vmem>>, vector<1024x128xbf16>
    %cst_8 = arith.constant dense<0.000000e+00> : vector<8x128xf32>
    %11 = tpu.matmul %9, %10, %cst_8 {dimension_numbers = #tpu.dot_dimension_numbers<[1], [0], [0], [1], [0, 0, 1, 1], [], []>} : vector<8x1024xbf16>, vector<1024x128xbf16>, vector<8x128xf32> -> vector<8x128xf32>
    %c0_9 = arith.constant 0 : index
    %c0_10 = arith.constant 0 : index
    %12 = vector.load %arg6[%c0_9, %c0_10] : memref<1x128xf32, #tpu.memory_space<vmem>>, vector<1x128xf32>
    %13 = vector.broadcast %12 : vector<1x128xf32> to vector<8x128xf32>
    %14 = arith.addf %11, %13 : vector<8x128xf32>
    %cst_11 = arith.constant 0.000000e+00 : f32
    %15 = vector.broadcast %cst_11 : f32 to vector<8x128xf32>
    %16 = arith.maximumf %14, %15 : vector<8x128xf32>
    %c0_12 = arith.constant 0 : index
    %c0_13 = arith.constant 0 : index
    %17 = vector.load %arg1[%c0_12, %c0_13] : memref<1024x3xf32, #tpu.memory_space<vmem>>, vector<1024x3xf32>
    %18 = arith.truncf %17 : vector<1024x3xf32> to vector<1024x3xbf16>
    %c0_14 = arith.constant 0 : index
    %c0_15 = arith.constant 0 : index
    %19 = vector.load %arg7[%c0_14, %c0_15] : memref<3x64xbf16, #tpu.memory_space<vmem>>, vector<3x64xbf16>
    %cst_16 = arith.constant dense<0.000000e+00> : vector<1024x64xf32>
    %20 = tpu.matmul %18, %19, %cst_16 {dimension_numbers = #tpu.dot_dimension_numbers<[1], [0], [0], [1], [0, 0, 1, 1], [], []>} : vector<1024x3xbf16>, vector<3x64xbf16>, vector<1024x64xf32> -> vector<1024x64xf32>
    %c0_17 = arith.constant 0 : index
    %c0_18 = arith.constant 0 : index
    %21 = vector.load %arg8[%c0_17, %c0_18] : memref<1x64xf32, #tpu.memory_space<vmem>>, vector<1x64xf32>
    %22 = vector.broadcast %21 : vector<1x64xf32> to vector<1024x64xf32>
    %23 = arith.addf %20, %22 : vector<1024x64xf32>
    %cst_19 = arith.constant 0.000000e+00 : f32
    %24 = vector.broadcast %cst_19 : f32 to vector<1024x64xf32>
    %25 = arith.maximumf %23, %24 : vector<1024x64xf32>
    %26 = arith.truncf %25 : vector<1024x64xf32> to vector<1024x64xbf16>
    %c0_20 = arith.constant 0 : index
    %c0_21 = arith.constant 0 : index
    %27 = vector.load %arg9[%c0_20, %c0_21] : memref<64x128xbf16, #tpu.memory_space<vmem>>, vector<64x128xbf16>
    %cst_22 = arith.constant dense<0.000000e+00> : vector<1024x128xf32>
    %28 = tpu.matmul %26, %27, %cst_22 {dimension_numbers = #tpu.dot_dimension_numbers<[1], [0], [0], [1], [0, 0, 1, 1], [], []>} : vector<1024x64xbf16>, vector<64x128xbf16>, vector<1024x128xf32> -> vector<1024x128xf32>
    %c0_23 = arith.constant 0 : index
    %c0_24 = arith.constant 0 : index
    %29 = vector.load %arg10[%c0_23, %c0_24] : memref<1x128xf32, #tpu.memory_space<vmem>>, vector<1x128xf32>
    %30 = vector.broadcast %29 : vector<1x128xf32> to vector<1024x128xf32>
    %31 = arith.addf %28, %30 : vector<1024x128xf32>
    %32 = vector.shape_cast %31 : vector<1024x128xf32> to vector<8x128x128xf32>
    %cst_25 = arith.constant dense<0xFF800000> : vector<8x128xf32>
    %33 = vector.multi_reduction <maximumf>, %32, %cst_25 [1] : vector<8x128x128xf32> to vector<8x128xf32>
    %c0_26 = arith.constant 0 : index
    %c0_27 = arith.constant 0 : index
    %34 = vector.load %arg2[%c0_26, %c0_27] : memref<1024x3xf32, #tpu.memory_space<vmem>>, vector<1024x3xf32>
    %35 = arith.truncf %34 : vector<1024x3xf32> to vector<1024x3xbf16>
    %c0_28 = arith.constant 0 : index
    %c0_29 = arith.constant 0 : index
    %36 = vector.load %arg7[%c0_28, %c0_29] : memref<3x64xbf16, #tpu.memory_space<vmem>>, vector<3x64xbf16>
    %cst_30 = arith.constant dense<0.000000e+00> : vector<1024x64xf32>
    %37 = tpu.matmul %35, %36, %cst_30 {dimension_numbers = #tpu.dot_dimension_numbers<[1], [0], [0], [1], [0, 0, 1, 1], [], []>} : vector<1024x3xbf16>, vector<3x64xbf16>, vector<1024x64xf32> -> vector<1024x64xf32>
    %c0_31 = arith.constant 0 : index
    %c0_32 = arith.constant 0 : index
    %38 = vector.load %arg8[%c0_31, %c0_32] : memref<1x64xf32, #tpu.memory_space<vmem>>, vector<1x64xf32>
    %39 = vector.broadcast %38 : vector<1x64xf32> to vector<1024x64xf32>
    %40 = arith.addf %37, %39 : vector<1024x64xf32>
    %cst_33 = arith.constant 0.000000e+00 : f32
    %41 = vector.broadcast %cst_33 : f32 to vector<1024x64xf32>
    %42 = arith.maximumf %40, %41 : vector<1024x64xf32>
    %43 = arith.truncf %42 : vector<1024x64xf32> to vector<1024x64xbf16>
    %c0_34 = arith.constant 0 : index
    %c0_35 = arith.constant 0 : index
    %44 = vector.load %arg9[%c0_34, %c0_35] : memref<64x128xbf16, #tpu.memory_space<vmem>>, vector<64x128xbf16>
    %cst_36 = arith.constant dense<0.000000e+00> : vector<1024x128xf32>
    %45 = tpu.matmul %43, %44, %cst_36 {dimension_numbers = #tpu.dot_dimension_numbers<[1], [0], [0], [1], [0, 0, 1, 1], [], []>} : vector<1024x64xbf16>, vector<64x128xbf16>, vector<1024x128xf32> -> vector<1024x128xf32>
    %c0_37 = arith.constant 0 : index
    %c0_38 = arith.constant 0 : index
    %46 = vector.load %arg10[%c0_37, %c0_38] : memref<1x128xf32, #tpu.memory_space<vmem>>, vector<1x128xf32>
    %47 = vector.broadcast %46 : vector<1x128xf32> to vector<1024x128xf32>
    %48 = arith.addf %45, %47 : vector<1024x128xf32>
    %49 = vector.shape_cast %48 : vector<1024x128xf32> to vector<8x128x128xf32>
    %cst_39 = arith.constant dense<0xFF800000> : vector<8x128xf32>
    %50 = vector.multi_reduction <maximumf>, %49, %cst_39 [1] : vector<8x128x128xf32> to vector<8x128xf32>
    %51 = arith.subf %16, %33 : vector<8x128xf32>
    %cst_40 = arith.constant 9.99999997E-7 : f32
    %52 = vector.broadcast %cst_40 : f32 to vector<8x128xf32>
    %53 = arith.addf %51, %52 : vector<8x128xf32>
    %54 = arith.mulf %53, %53 : vector<8x128xf32>
    %cst_41 = arith.constant dense<0.000000e+00> : vector<8xf32>
    %55 = vector.multi_reduction <add>, %54, %cst_41 [1] : vector<8x128xf32> to vector<8xf32>
    %56 = vector.shape_cast %55 : vector<8xf32> to vector<8x1xf32>
    %57 = math.sqrt %56 : vector<8x1xf32>
    %58 = arith.subf %16, %50 : vector<8x128xf32>
    %cst_42 = arith.constant 9.99999997E-7 : f32
    %59 = vector.broadcast %cst_42 : f32 to vector<8x128xf32>
    %60 = arith.addf %58, %59 : vector<8x128xf32>
    %61 = arith.mulf %60, %60 : vector<8x128xf32>
    %cst_43 = arith.constant dense<0.000000e+00> : vector<8xf32>
    %62 = vector.multi_reduction <add>, %61, %cst_43 [1] : vector<8x128xf32> to vector<8xf32>
    %63 = vector.shape_cast %62 : vector<8xf32> to vector<8x1xf32>
    %64 = math.sqrt %63 : vector<8x1xf32>
    %65 = arith.subf %57, %64 : vector<8x1xf32>
    %cst_44 = arith.constant 5.000000e-01 : f32
    %66 = vector.broadcast %cst_44 : f32 to vector<8x1xf32>
    %67 = arith.addf %65, %66 : vector<8x1xf32>
    %cst_45 = arith.constant 0.000000e+00 : f32
    %68 = vector.broadcast %cst_45 : f32 to vector<8x1xf32>
    %69 = arith.maximumf %67, %68 : vector<8x1xf32>
    %cst_46 = arith.constant dense<0.000000e+00> : vector<1xf32>
    %70 = vector.multi_reduction <add>, %69, %cst_46 [0] : vector<8x1xf32> to vector<1xf32>
    %71 = vector.shape_cast %70 : vector<1xf32> to vector<1x1xf32>
    %cst_47 = arith.constant 1.250000e-01 : f32
    %72 = vector.broadcast %cst_47 : f32 to vector<1x1xf32>
    %73 = arith.mulf %71, %72 : vector<1x1xf32>
    %c0_48 = arith.constant 0 : index
    %c0_49 = arith.constant 0 : index
    %74 = vector.load %arg11[%c0_48, %c0_49] : memref<1x1xf32, #tpu.memory_space<vmem>>, vector<1x1xf32>
    tpu.vector_store %arg11[%c0_48, %c0_49], %73 {strides = array<i32>} : memref<1x1xf32, #tpu.memory_space<vmem>>, vector<1x1xf32>,
    return
  }
}

</mosaic_0001>

<llo_original>
// kernel: retrieval_head_forward_train.1
$region0: #{retrieval_head_forward_train.1}
  #allocation0 [shape = 'u32[]', space=smem, size = 0x4, offset = 0x4, fixed_abs, tag = 'smem constant byte address 0x4 - core index']
  #allocation1 [shape = 'u32[72,128]{1,0:T(1,128)}', space=vmem, size = 0x9000, scoped, tag = 'internal scratch']
  %s0 = inlined_call_operand.vmem [shape: f32[8,32], index: 0, kind: input, shape index: {}]
  %s1 = inlined_call_operand.vmem [shape: f32[1024,3], index: 1, kind: input, shape index: {}]
  %s2 = inlined_call_operand.vmem [shape: f32[1024,3], index: 2, kind: input, shape index: {}]
  %s3 = inlined_call_operand.vmem [shape: bf16[32,1024], index: 3, kind: input, shape index: {}]
  %s4 = inlined_call_operand.vmem [shape: f32[1,1024], index: 4, kind: input, shape index: {}]
  %s5 = inlined_call_operand.vmem [shape: bf16[1024,128], index: 5, kind: input, shape index: {}]
  %s6 = inlined_call_operand.vmem [shape: f32[1,128], index: 6, kind: input, shape index: {}]
  %s7 = inlined_call_operand.vmem [shape: bf16[3,64], index: 7, kind: input, shape index: {}]
  %s8 = inlined_call_operand.vmem [shape: f32[1,64], index: 8, kind: input, shape index: {}]
  %s9 = inlined_call_operand.vmem [shape: bf16[64,128], index: 9, kind: input, shape index: {}]
  %s10 = inlined_call_operand.vmem [shape: f32[1,128], index: 10, kind: input, shape index: {}]
  %s11 = inlined_call_operand.hbm [shape: f32[1,1], index: 11, kind: output, shape index: {}]
  %s12 = sld [smem:[#allocation0]]
  $region54: #{retrieval_head_forward_train.1} parent=0
    _
  %s14 = ssub.s32 1, %s12
  %s15 = scalar_select 0, %s14, %s12
  $region1: #{retrieval_head_forward_train.1} parent=0
    #allocation2 [shape = 'u8[512]{0}', space=vmem, size = 0x400, scoped, tag = 'output window, operand 0, single buffered']
    #allocation3 [shape = 's32[1]{0}', space=sflag, size = 0x4, scoped, tag = 'scoped memory for retrieval_head_forward_train.1']
    %16 = vsyncpa [#allocation3], 0
    // Predicated region
    $region2: #{retrieval_head_forward_train.1} parent=1 // pred_check
      _
    $region3: #{retrieval_head_forward_train.1} parent=1 // pred_check_branch
      %18 = sbr.rel (0) target = $region5
    $region4: #{retrieval_head_forward_train.1} parent=1 // pred_region
      _
    $region5: #{retrieval_head_forward_train.1} parent=1 // pred_fallthru
      _
    // Predicated region
    $region6: #{retrieval_head_forward_train.1} parent=1 // pred_check
      _
    $region7: #{retrieval_head_forward_train.1} parent=1 // pred_check_branch
      %20 = sbr.rel (0) target = $region9
    $region8: #{retrieval_head_forward_train.1} parent=1 // pred_region
      _
    $region9: #{retrieval_head_forward_train.1} parent=1 // pred_fallthru
      _
    // Predicated region
    $region10: #{retrieval_head_forward_train.1} parent=1 // pred_check
      _
    $region11: #{retrieval_head_forward_train.1} parent=1 // pred_check_branch
      %22 = sbr.rel (0) target = $region13
    $region12: #{retrieval_head_forward_train.1} parent=1 // pred_region
      _
    $region13: #{retrieval_head_forward_train.1} parent=1 // pred_fallthru
      _
    // Predicated region
    $region14: #{retrieval_head_forward_train.1} parent=1 // pred_check
      _
    $region15: #{retrieval_head_forward_train.1} parent=1 // pred_check_branch
      %24 = sbr.rel (0) target = $region17
    $region16: #{retrieval_head_forward_train.1} parent=1 // pred_region
      _
    $region17: #{retrieval_head_forward_train.1} parent=1 // pred_fallthru
      _
    // Predicated region
    $region18: #{retrieval_head_forward_train.1} parent=1 // pred_check
      _
    $region19: #{retrieval_head_forward_train.1} parent=1 // pred_check_branch
      %26 = sbr.rel (0) target = $region21
    $region20: #{retrieval_head_forward_train.1} parent=1 // pred_region
      _
    $region21: #{retrieval_head_forward_train.1} parent=1 // pred_fallthru
      _
    // Predicated region
    $region22: #{retrieval_head_forward_train.1} parent=1 // pred_check
      _
    $region23: #{retrieval_head_forward_train.1} parent=1 // pred_check_branch
      %28 = sbr.rel (0) target = $region25
    $region24: #{retrieval_head_forward_train.1} parent=1 // pred_region
      _
    $region25: #{retrieval_head_forward_train.1} parent=1 // pred_fallthru
      _
    // Predicated region
    $region26: #{retrieval_head_forward_train.1} parent=1 // pred_check
      _
    $region27: #{retrieval_head_forward_train.1} parent=1 // pred_check_branch
      %30 = sbr.rel (0) target = $region29
    $region28: #{retrieval_head_forward_train.1} parent=1 // pred_region
      _
    $region29: #{retrieval_head_forward_train.1} parent=1 // pred_fallthru
      _
    // Predicated region
    $region30: #{retrieval_head_forward_train.1} parent=1 // pred_check
      _
    $region31: #{retrieval_head_forward_train.1} parent=1 // pred_check_branch
      %32 = sbr.rel (0) target = $region33
    $region32: #{retrieval_head_forward_train.1} parent=1 // pred_region
      _
    $region33: #{retrieval_head_forward_train.1} parent=1 // pred_fallthru
      _
    // Predicated region
    $region34: #{retrieval_head_forward_train.1} parent=1 // pred_check
      _
    $region35: #{retrieval_head_forward_train.1} parent=1 // pred_check_branch
      %34 = sbr.rel (0) target = $region37
    $region36: #{retrieval_head_forward_train.1} parent=1 // pred_region
      _
    $region37: #{retrieval_head_forward_train.1} parent=1 // pred_fallthru
      _
    // Predicated region
    $region38: #{retrieval_head_forward_train.1} parent=1 // pred_check
      _
    $region39: #{retrieval_head_forward_train.1} parent=1 // pred_check_branch
      %36 = sbr.rel (0) target = $region41
    $region40: #{retrieval_head_forward_train.1} parent=1 // pred_region
      _
    $region41: #{retrieval_head_forward_train.1} parent=1 // pred_fallthru
      _
    // Predicated region
    $region42: #{retrieval_head_forward_train.1} parent=1 // pred_check
      _
    $region43: #{retrieval_head_forward_train.1} parent=1 // pred_check_branch
      %38 = sbr.rel (0) target = $region45
    $region44: #{retrieval_head_forward_train.1} parent=1 // pred_region
      _
    $region45: #{retrieval_head_forward_train.1} parent=1 // pred_fallthru
      _
    %v40 = vld [vmem:[%s0] sm:$0xff]
    %v41 = vpack.c.bf16 %v40, %v40
    %v42 = vld [vmem:[%s3] sm:$0xff]
    %v43 = vld [vmem:[%s3 + $0x8] sm:$0xff]
    %v44 = vld [vmem:[%s3 + $0x10] sm:$0xff]
    %v45 = vld [vmem:[%s3 + $0x18] sm:$0xff]
    %v46 = vld [vmem:[%s3 + $0x20] sm:$0xff]
    %v47 = vld [vmem:[%s3 + $0x28] sm:$0xff]
    %v48 = vld [vmem:[%s3 + $0x30] sm:$0xff]
    %v49 = vld [vmem:[%s3 + $0x38] sm:$0xff]
    %v50 = vld [vmem:[%s3 + $0x40] sm:$0xff]
    %v51 = vld [vmem:[%s3 + $0x48] sm:$0xff]
    %v52 = vld [vmem:[%s3 + $0x50] sm:$0xff]
    %v53 = vld [vmem:[%s3 + $0x58] sm:$0xff]
    %v54 = vld [vmem:[%s3 + $0x60] sm:$0xff]
    %v55 = vld [vmem:[%s3 + $0x68] sm:$0xff]
    %v56 = vld [vmem:[%s3 + $0x70] sm:$0xff]
    %v57 = vld [vmem:[%s3 + $0x78] sm:$0xff]
    %v58 = vld [vmem:[%s4] sm:$0xff]
    %v60 = vperm.slane %v58, 0
    %v61 = vperm.slane %v58, 1
    %v62 = vperm.slane %v58, 2
    %v63 = vperm.slane %v58, 3
    %v64 = vperm.slane %v58, 4
    %v65 = vperm.slane %v58, 5
    %v66 = vperm.slane %v58, 6
    %v67 = vperm.slane %v58, 7
    %v92 = vunpack.c.l.b16 %v42
    %v93 = vunpack.c.h.b16 %v42
    %v94 = vunpack.c.l.b16 %v43
    %v95 = vunpack.c.h.b16 %v43
    %v96 = vunpack.c.l.b16 %v44
    %v97 = vunpack.c.h.b16 %v44
    %v98 = vunpack.c.l.b16 %v45
    %v99 = vunpack.c.h.b16 %v45
    %v100 = vunpack.c.l.b16 %v46
    %v101 = vunpack.c.h.b16 %v46
    %v102 = vunpack.c.l.b16 %v47
    %v103 = vunpack.c.h.b16 %v47
    %v104 = vunpack.c.l.b16 %v48
    %v105 = vunpack.c.h.b16 %v48
    %v106 = vunpack.c.l.b16 %v49
    %v107 = vunpack.c.h.b16 %v49
    %v108 = vunpack.c.l.b16 %v50
    %v109 = vunpack.c.h.b16 %v50
    %v110 = vunpack.c.l.b16 %v51
    %v111 = vunpack.c.h.b16 %v51
    %v112 = vunpack.c.l.b16 %v52
    %v113 = vunpack.c.h.b16 %v52
    %v114 = vunpack.c.l.b16 %v53
    %v115 = vunpack.c.h.b16 %v53
    %v116 = vunpack.c.l.b16 %v54
    %v117 = vunpack.c.h.b16 %v54
    %v118 = vunpack.c.l.b16 %v55
    %v119 = vunpack.c.h.b16 %v55
    %v120 = vunpack.c.l.b16 %v56
    %v121 = vunpack.c.h.b16 %v56
    %v122 = vunpack.c.l.b16 %v57
    %v123 = vunpack.c.h.b16 %v57
    %v124 = vpack.c.b16 %v100, %v92
    %v125 = vpack.c.b16 %v101, %v93
    %v126 = vpack.c.b16 %v102, %v94
    %v127 = vpack.c.b16 %v103, %v95
    %v128 = vpack.c.b16 %v104, %v96
    %v129 = vpack.c.b16 %v105, %v97
    %v130 = vpack.c.b16 %v106, %v98
    %v131 = vpack.c.b16 %v107, %v99
    %v132 = vpack.c.b16 %v116, %v108
    %v133 = vpack.c.b16 %v117, %v109
    %v134 = vpack.c.b16 %v118, %v110
    %v135 = vpack.c.b16 %v119, %v111
    %v136 = vpack.c.b16 %v120, %v112
    %v137 = vpack.c.b16 %v121, %v113
    %v138 = vpack.c.b16 %v122, %v114
    %v139 = vpack.c.b16 %v123, %v115
    %vm156 = vcmask 261120
    %v158 = vsel %vm156, %v41, 0
    %160 = vmatpush.bf16.msra.mxu0 0
    %161 = vmatpush.bf16.msra.mxu0 0
    %162 = vmatpush.bf16.msra.mxu0 0
    %163 = vmatpush.bf16.msra.mxu0 0
    %164 = vmatpush.bf16.msra.mxu0 0
    %165 = vmatpush.bf16.msra.mxu0 0
    %166 = vmatpush.bf16.msra.mxu0 %v132
    %167 = vmatpush.bf16.msra.mxu0 %v124
    %168 = vmatmul.bf16.gmra.mxu0 %v158
    %v169 = vpop.f32.mrf.mxu0
    %v170 = vadd.f32 %v60, %v169
    %v171 = vpop.f32.mrf.mxu0
    %172 = vdwg.mxu0
    %173 = vmatpush.bf16.msra.mxu0 0
    %174 = vmatpush.bf16.msra.mxu0 0
    %175 = vmatpush.bf16.msra.mxu0 0
    %176 = vmatpush.bf16.msra.mxu0 0
    %177 = vmatpush.bf16.msra.mxu0 0
    %178 = vmatpush.bf16.msra.mxu0 0
    %179 = vmatpush.bf16.msra.mxu0 %v133
    %180 = vmatpush.bf16.msra.mxu0 %v125
    %181 = vmatmul.bf16.gmra.mxu0 %v158
    %v182 = vpop.f32.mrf.mxu0
    %v183 = vadd.f32 %v61, %v182
    %v184 = vpop.f32.mrf.mxu0
    %185 = vdwg.mxu0
    %186 = vmatpush.bf16.msra.mxu0 0
    %187 = vmatpush.bf16.msra.mxu0 0
    %188 = vmatpush.bf16.msra.mxu0 0
    %189 = vmatpush.bf16.msra.mxu0 0
    %190 = vmatpush.bf16.msra.mxu0 0
    %191 = vmatpush.bf16.msra.mxu0 0
    %192 = vmatpush.bf16.msra.mxu0 %v134
    %193 = vmatpush.bf16.msra.mxu0 %v126
    %194 = vmatmul.bf16.gmra.mxu0 %v158
    %v195 = vpop.f32.mrf.mxu0
    %v196 = vadd.f32 %v62, %v195
    %v197 = vpop.f32.mrf.mxu0
    %198 = vdwg.mxu0
    %199 = vmatpush.bf16.msra.mxu0 0
    %200 = vmatpush.bf16.msra.mxu0 0
    %201 = vmatpush.bf16.msra.mxu0 0
    %202 = vmatpush.bf16.msra.mxu0 0
    %203 = vmatpush.bf16.msra.mxu0 0
    %204 = vmatpush.bf16.msra.mxu0 0
    %205 = vmatpush.bf16.msra.mxu0 %v135
    %206 = vmatpush.bf16.msra.mxu0 %v127
    %207 = vmatmul.bf16.gmra.mxu0 %v158
    %v208 = vpop.f32.mrf.mxu0
    %v209 = vadd.f32 %v63, %v208
    %v210 = vpop.f32.mrf.mxu0
    %211 = vdwg.mxu0
    %212 = vmatpush.bf16.msra.mxu0 0
    %213 = vmatpush.bf16.msra.mxu0 0
    %214 = vmatpush.bf16.msra.mxu0 0
    %215 = vmatpush.bf16.msra.mxu0 0
    %216 = vmatpush.bf16.msra.mxu0 0
    %217 = vmatpush.bf16.msra.mxu0 0
    %218 = vmatpush.bf16.msra.mxu0 %v136
    %219 = vmatpush.bf16.msra.mxu0 %v128
    %220 = vmatmul.bf16.gmra.mxu0 %v158
    %v221 = vpop.f32.mrf.mxu0
    %v222 = vadd.f32 %v64, %v221
    %v223 = vpop.f32.mrf.mxu0
    %224 = vdwg.mxu0
    %225 = vmatpush.bf16.msra.mxu0 0
    %226 = vmatpush.bf16.msra.mxu0 0
    %227 = vmatpush.bf16.msra.mxu0 0
    %228 = vmatpush.bf16.msra.mxu0 0
    %229 = vmatpush.bf16.msra.mxu0 0
    %230 = vmatpush.bf16.msra.mxu0 0
    %231 = vmatpush.bf16.msra.mxu0 %v137
    %232 = vmatpush.bf16.msra.mxu0 %v129
    %233 = vmatmul.bf16.gmra.mxu0 %v158
    %v234 = vpop.f32.mrf.mxu0
    %v235 = vadd.f32 %v65, %v234
    %v236 = vpop.f32.mrf.mxu0
    %237 = vdwg.mxu0
    %238 = vmatpush.bf16.msra.mxu0 0
    %239 = vmatpush.bf16.msra.mxu0 0
    %240 = vmatpush.bf16.msra.mxu0 0
    %241 = vmatpush.bf16.msra.mxu0 0
    %242 = vmatpush.bf16.msra.mxu0 0
    %243 = vmatpush.bf16.msra.mxu0 0
    %244 = vmatpush.bf16.msra.mxu0 %v138
    %245 = vmatpush.bf16.msra.mxu0 %v130
    %246 = vmatmul.bf16.gmra.mxu0 %v158
    %v247 = vpop.f32.mrf.mxu0
    %v248 = vadd.f32 %v66, %v247
    %v249 = vpop.f32.mrf.mxu0
    %250 = vdwg.mxu0
    %251 = vmatpush.bf16.msra.mxu0 0
    %252 = vmatpush.bf16.msra.mxu0 0
    %253 = vmatpush.bf16.msra.mxu0 0
    %254 = vmatpush.bf16.msra.mxu0 0
    %255 = vmatpush.bf16.msra.mxu0 0
    %256 = vmatpush.bf16.msra.mxu0 0
    %257 = vmatpush.bf16.msra.mxu0 %v139
    %258 = vmatpush.bf16.msra.mxu0 %v131
    %259 = vmatmul.bf16.gmra.mxu0 %v158
    %v260 = vpop.f32.mrf.mxu0
    %v261 = vadd.f32 %v67, %v260
    %v262 = vpop.f32.mrf.mxu0
    %263 = vdwg.mxu0
    %v264 = vmax.f32 %v170, 0.0
    %v265 = vmax.f32 %v183, 0.0
    %v266 = vmax.f32 %v196, 0.0
    %v267 = vmax.f32 %v209, 0.0
    %v268 = vmax.f32 %v222, 0.0
    %v269 = vmax.f32 %v235, 0.0
    %v270 = vmax.f32 %v248, 0.0
    %v271 = vmax.f32 %v261, 0.0
    %v272 = vpack.c.bf16 %v264, %v264
    %v273 = vpack.c.bf16 %v265, %v265
    %v274 = vpack.c.bf16 %v266, %v266
    %v275 = vpack.c.bf16 %v267, %v267
    %v276 = vpack.c.bf16 %v268, %v268
    %v277 = vpack.c.bf16 %v269, %v269
    %v278 = vpack.c.bf16 %v270, %v270
    %v279 = vpack.c.bf16 %v271, %v271
    %v280 = vld [vmem:[%s5] sm:$0xf]
    %v281 = vld [vmem:[%s5 + $0x4] sm:$0xf]
    %v282 = vld [vmem:[%s5 + $0x8] sm:$0xf]
    %v283 = vld [vmem:[%s5 + $0xc] sm:$0xf]
    %v284 = vld [vmem:[%s5 + $0x10] sm:$0xf]
    %v285 = vld [vmem:[%s5 + $0x14] sm:$0xf]
    %v286 = vld [vmem:[%s5 + $0x18] sm:$0xf]
    %v287 = vld [vmem:[%s5 + $0x1c] sm:$0xf]
    %v288 = vld [vmem:[%s5 + $0x20] sm:$0xf]
    %v289 = vld [vmem:[%s5 + $0x24] sm:$0xf]
    %v290 = vld [vmem:[%s5 + $0x28] sm:$0xf]
    %v291 = vld [vmem:[%s5 + $0x2c] sm:$0xf]
    %v292 = vld [vmem:[%s5 + $0x30] sm:$0xf]
    %v293 = vld [vmem:[%s5 + $0x34] sm:$0xf]
    %v294 = vld [vmem:[%s5 + $0x38] sm:$0xf]
    %v295 = vld [vmem:[%s5 + $0x3c] sm:$0xf]
    %v296 = vld [vmem:[%s5 + $0x40] sm:$0xf]
    %v297 = vld [vmem:[%s5 + $0x44] sm:$0xf]
    %v298 = vld [vmem:[%s5 + $0x48] sm:$0xf]
    %v299 = vld [vmem:[%s5 + $0x4c] sm:$0xf]
    %v300 = vld [vmem:[%s5 + $0x50] sm:$0xf]
    %v301 = vld [vmem:[%s5 + $0x54] sm:$0xf]
    %v302 = vld [vmem:[%s5 + $0x58] sm:$0xf]
    %v303 = vld [vmem:[%s5 + $0x5c] sm:$0xf]
    %v304 = vld [vmem:[%s5 + $0x60] sm:$0xf]
    %v305 = vld [vmem:[%s5 + $0x64] sm:$0xf]
    %v306 = vld [vmem:[%s5 + $0x68] sm:$0xf]
    %v307 = vld [vmem:[%s5 + $0x6c] sm:$0xf]
    %v308 = vld [vmem:[%s5 + $0x70] sm:$0xf]
    %v309 = vld [vmem:[%s5 + $0x74] sm:$0xf]
    %v310 = vld [vmem:[%s5 + $0x78] sm:$0xf]
    %v311 = vld [vmem:[%s5 + $0x7c] sm:$0xf]
    %v312 = vld [vmem:[%s5 + $0x80] sm:$0xf]
    %v313 = vld [vmem:[%s5 + $0x84] sm:$0xf]
    %v314 = vld [vmem:[%s5 + $0x88] sm:$0xf]
    %v315 = vld [vmem:[%s5 + $0x8c] sm:$0xf]
    %v316 = vld [vmem:[%s5 + $0x90] sm:$0xf]
    %v317 = vld [vmem:[%s5 + $0x94] sm:$0xf]
    %v318 = vld [vmem:[%s5 + $0x98] sm:$0xf]
    %v319 = vld [vmem:[%s5 + $0x9c] sm:$0xf]
    %v320 = vld [vmem:[%s5 + $0xa0] sm:$0xf]
    %v321 = vld [vmem:[%s5 + $0xa4] sm:$0xf]
    %v322 = vld [vmem:[%s5 + $0xa8] sm:$0xf]
    %v323 = vld [vmem:[%s5 + $0xac] sm:$0xf]
    %v324 = vld [vmem:[%s5 + $0xb0] sm:$0xf]
    %v325 = vld [vmem:[%s5 + $0xb4] sm:$0xf]
    %v326 = vld [vmem:[%s5 + $0xb8] sm:$0xf]
    %v327 = vld [vmem:[%s5 + $0xbc] sm:$0xf]
    %v328 = vld [vmem:[%s5 + $0xc0] sm:$0xf]
    %v329 = vld [vmem:[%s5 + $0xc4] sm:$0xf]
    %v330 = vld [vmem:[%s5 + $0xc8] sm:$0xf]
    %v331 = vld [vmem:[%s5 + $0xcc] sm:$0xf]
    %v332 = vld [vmem:[%s5 + $0xd0] sm:$0xf]
    %v333 = vld [vmem:[%s5 + $0xd4] sm:$0xf]
    %v334 = vld [vmem:[%s5 + $0xd8] sm:$0xf]
    %v335 = vld [vmem:[%s5 + $0xdc] sm:$0xf]
    %v336 = vld [vmem:[%s5 + $0xe0] sm:$0xf]
    %v337 = vld [vmem:[%s5 + $0xe4] sm:$0xf]
    %v338 = vld [vmem:[%s5 + $0xe8] sm:$0xf]
    %v339 = vld [vmem:[%s5 + $0xec] sm:$0xf]
    %v340 = vld [vmem:[%s5 + $0xf0] sm:$0xf]
    %v341 = vld [vmem:[%s5 + $0xf4] sm:$0xf]
    %v342 = vld [vmem:[%s5 + $0xf8] sm:$0xf]
    %v343 = vld [vmem:[%s5 + $0xfc] sm:$0xf]
    %v344 = vld [vmem:[%s5 + $0x100] sm:$0xf]
    %v345 = vld [vmem:[%s5 + $0x104] sm:$0xf]
    %v346 = vld [vmem:[%s5 + $0x108] sm:$0xf]
    %v347 = vld [vmem:[%s5 + $0x10c] sm:$0xf]
    %v348 = vld [vmem:[%s5 + $0x110] sm:$0xf]
    %v349 = vld [vmem:[%s5 + $0x114] sm:$0xf]
    %v350 = vld [vmem:[%s5 + $0x118] sm:$0xf]
    %v351 = vld [vmem:[%s5 + $0x11c] sm:$0xf]
    %v352 = vld [vmem:[%s5 + $0x120] sm:$0xf]
    %v353 = vld [vmem:[%s5 + $0x124] sm:$0xf]
    %v354 = vld [vmem:[%s5 + $0x128] sm:$0xf]
    %v355 = vld [vmem:[%s5 + $0x12c] sm:$0xf]
    %v356 = vld [vmem:[%s5 + $0x130] sm:$0xf]
    %v357 = vld [vmem:[%s5 + $0x134] sm:$0xf]
    %v358 = vld [vmem:[%s5 + $0x138] sm:$0xf]
    %v359 = vld [vmem:[%s5 + $0x13c] sm:$0xf]
    %v360 = vld [vmem:[%s5 + $0x140] sm:$0xf]
    %v361 = vld [vmem:[%s5 + $0x144] sm:$0xf]
    %v362 = vld [vmem:[%s5 + $0x148] sm:$0xf]
    %v363 = vld [vmem:[%s5 + $0x14c] sm:$0xf]
    %v364 = vld [vmem:[%s5 + $0x150] sm:$0xf]
    %v365 = vld [vmem:[%s5 + $0x154] sm:$0xf]
    %v366 = vld [vmem:[%s5 + $0x158] sm:$0xf]
    %v367 = vld [vmem:[%s5 + $0x15c] sm:$0xf]
    %v368 = vld [vmem:[%s5 + $0x160] sm:$0xf]
    %v369 = vld [vmem:[%s5 + $0x164] sm:$0xf]
    %v370 = vld [vmem:[%s5 + $0x168] sm:$0xf]
    %v371 = vld [vmem:[%s5 + $0x16c] sm:$0xf]
    %v372 = vld [vmem:[%s5 + $0x170] sm:$0xf]
    %v373 = vld [vmem:[%s5 + $0x174] sm:$0xf]
    %v374 = vld [vmem:[%s5 + $0x178] sm:$0xf]
    %v375 = vld [vmem:[%s5 + $0x17c] sm:$0xf]
    %v376 = vld [vmem:[%s5 + $0x180] sm:$0xf]
    %v377 = vld [vmem:[%s5 + $0x184] sm:$0xf]
    %v378 = vld [vmem:[%s5 + $0x188] sm:$0xf]
    %v379 = vld [vmem:[%s5 + $0x18c] sm:$0xf]
    %v380 = vld [vmem:[%s5 + $0x190] sm:$0xf]
    %v381 = vld [vmem:[%s5 + $0x194] sm:$0xf]
    %v382 = vld [vmem:[%s5 + $0x198] sm:$0xf]
    %v383 = vld [vmem:[%s5 + $0x19c] sm:$0xf]
    %v384 = vld [vmem:[%s5 + $0x1a0] sm:$0xf]
    %v385 = vld [vmem:[%s5 + $0x1a4] sm:$0xf]
    %v386 = vld [vmem:[%s5 + $0x1a8] sm:$0xf]
    %v387 = vld [vmem:[%s5 + $0x1ac] sm:$0xf]
    %v388 = vld [vmem:[%s5 + $0x1b0] sm:$0xf]
    %v389 = vld [vmem:[%s5 + $0x1b4] sm:$0xf]
    %v390 = vld [vmem:[%s5 + $0x1b8] sm:$0xf]
    %v391 = vld [vmem:[%s5 + $0x1bc] sm:$0xf]
    %v392 = vld [vmem:[%s5 + $0x1c0] sm:$0xf]
    %v393 = vld [vmem:[%s5 + $0x1c4] sm:$0xf]
    %v394 = vld [vmem:[%s5 + $0x1c8] sm:$0xf]
    %v395 = vld [vmem:[%s5 + $0x1cc] sm:$0xf]
    %v396 = vld [vmem:[%s5 + $0x1d0] sm:$0xf]
    %v397 = vld [vmem:[%s5 + $0x1d4] sm:$0xf]
    %v398 = vld [vmem:[%s5 + $0x1d8] sm:$0xf]
    %v399 = vld [vmem:[%s5 + $0x1dc] sm:$0xf]
    %v400 = vld [vmem:[%s5 + $0x1e0] sm:$0xf]
    %v401 = vld [vmem:[%s5 + $0x1e4] sm:$0xf]
    %v402 = vld [vmem:[%s5 + $0x1e8] sm:$0xf]
    %v403 = vld [vmem:[%s5 + $0x1ec] sm:$0xf]
    %v404 = vld [vmem:[%s5 + $0x1f0] sm:$0xf]
    %v405 = vld [vmem:[%s5 + $0x1f4] sm:$0xf]
    %v406 = vld [vmem:[%s5 + $0x1f8] sm:$0xf]
    %v407 = vld [vmem:[%s5 + $0x1fc] sm:$0xf]
    %v408 = vld [vmem:[%s6] sm:$0x1]
    %v410 = vperm.slane %v408, 0
    %v540 = vunpack.c.l.b16 %v280
    %v541 = vunpack.c.l.b16 %v281
    %v542 = vunpack.c.l.b16 %v282
    %v543 = vunpack.c.l.b16 %v283
    %v544 = vunpack.c.l.b16 %v284
    %v545 = vunpack.c.l.b16 %v285
    %v546 = vunpack.c.l.b16 %v286
    %v547 = vunpack.c.l.b16 %v287
    %v548 = vunpack.c.l.b16 %v288
    %v549 = vunpack.c.l.b16 %v289
    %v550 = vunpack.c.l.b16 %v290
    %v551 = vunpack.c.l.b16 %v291
    %v552 = vunpack.c.l.b16 %v292
    %v553 = vunpack.c.l.b16 %v293
    %v554 = vunpack.c.l.b16 %v294
    %v555 = vunpack.c.l.b16 %v295
    %v556 = vunpack.c.l.b16 %v296
    %v557 = vunpack.c.l.b16 %v297
    %v558 = vunpack.c.l.b16 %v298
    %v559 = vunpack.c.l.b16 %v299
    %v560 = vunpack.c.l.b16 %v300
    %v561 = vunpack.c.l.b16 %v301
    %v562 = vunpack.c.l.b16 %v302
    %v563 = vunpack.c.l.b16 %v303
    %v564 = vunpack.c.l.b16 %v304
    %v565 = vunpack.c.l.b16 %v305
    %v566 = vunpack.c.l.b16 %v306
    %v567 = vunpack.c.l.b16 %v307
    %v568 = vunpack.c.l.b16 %v308
    %v569 = vunpack.c.l.b16 %v309
    %v570 = vunpack.c.l.b16 %v310
    %v571 = vunpack.c.l.b16 %v311
    %v572 = vunpack.c.l.b16 %v312
    %v573 = vunpack.c.l.b16 %v313
    %v574 = vunpack.c.l.b16 %v314
    %v575 = vunpack.c.l.b16 %v315
    %v576 = vunpack.c.l.b16 %v316
    %v577 = vunpack.c.l.b16 %v317
    %v578 = vunpack.c.l.b16 %v318
    %v579 = vunpack.c.l.b16 %v319
    %v580 = vunpack.c.l.b16 %v320
    %v581 = vunpack.c.l.b16 %v321
    %v582 = vunpack.c.l.b16 %v322
    %v583 = vunpack.c.l.b16 %v323
    %v584 = vunpack.c.l.b16 %v324
    %v585 = vunpack.c.l.b16 %v325
    %v586 = vunpack.c.l.b16 %v326
    %v587 = vunpack.c.l.b16 %v327
    %v588 = vunpack.c.l.b16 %v328
    %v589 = vunpack.c.l.b16 %v329
    %v590 = vunpack.c.l.b16 %v330
    %v591 = vunpack.c.l.b16 %v331
    %v592 = vunpack.c.l.b16 %v332
    %v593 = vunpack.c.l.b16 %v333
    %v594 = vunpack.c.l.b16 %v334
    %v595 = vunpack.c.l.b16 %v335
    %v596 = vunpack.c.l.b16 %v336
    %v597 = vunpack.c.l.b16 %v337
    %v598 = vunpack.c.l.b16 %v338
    %v599 = vunpack.c.l.b16 %v339
    %v600 = vunpack.c.l.b16 %v340
    %v601 = vunpack.c.l.b16 %v341
    %v602 = vunpack.c.l.b16 %v342
    %v603 = vunpack.c.l.b16 %v343
    %v604 = vunpack.c.l.b16 %v344
    %v605 = vunpack.c.l.b16 %v345
    %v606 = vunpack.c.l.b16 %v346
    %v607 = vunpack.c.l.b16 %v347
    %v608 = vunpack.c.l.b16 %v348
    %v609 = vunpack.c.l.b16 %v349
    %v610 = vunpack.c.l.b16 %v350
    %v611 = vunpack.c.l.b16 %v351
    %v612 = vunpack.c.l.b16 %v352
    %v613 = vunpack.c.l.b16 %v353
    %v614 = vunpack.c.l.b16 %v354
    %v615 = vunpack.c.l.b16 %v355
    %v616 = vunpack.c.l.b16 %v356
    %v617 = vunpack.c.l.b16 %v357
    %v618 = vunpack.c.l.b16 %v358
    %v619 = vunpack.c.l.b16 %v359
    %v620 = vunpack.c.l.b16 %v360
    %v621 = vunpack.c.l.b16 %v361
    %v622 = vunpack.c.l.b16 %v362
    %v623 = vunpack.c.l.b16 %v363
    %v624 = vunpack.c.l.b16 %v364
    %v625 = vunpack.c.l.b16 %v365
    %v626 = vunpack.c.l.b16 %v366
    %v627 = vunpack.c.l.b16 %v367
    %v628 = vunpack.c.l.b16 %v368
    %v629 = vunpack.c.l.b16 %v369
    %v630 = vunpack.c.l.b16 %v370
    %v631 = vunpack.c.l.b16 %v371
    %v632 = vunpack.c.l.b16 %v372
    %v633 = vunpack.c.l.b16 %v373
    %v634 = vunpack.c.l.b16 %v374
    %v635 = vunpack.c.l.b16 %v375
    %v636 = vunpack.c.l.b16 %v376
    %v637 = vunpack.c.l.b16 %v377
    %v638 = vunpack.c.l.b16 %v378
    %v639 = vunpack.c.l.b16 %v379
    %v640 = vunpack.c.l.b16 %v380
    %v641 = vunpack.c.l.b16 %v381
    %v642 = vunpack.c.l.b16 %v382
    %v643 = vunpack.c.l.b16 %v383
    %v644 = vunpack.c.l.b16 %v384
    %v645 = vunpack.c.l.b16 %v385
    %v646 = vunpack.c.l.b16 %v386
    %v647 = vunpack.c.l.b16 %v387
    %v648 = vunpack.c.l.b16 %v388
    %v649 = vunpack.c.l.b16 %v389
    %v650 = vunpack.c.l.b16 %v390
    %v651 = vunpack.c.l.b16 %v391
    %v652 = vunpack.c.l.b16 %v392
    %v653 = vunpack.c.l.b16 %v393
    %v654 = vunpack.c.l.b16 %v394
    %v655 = vunpack.c.l.b16 %v395
    %v656 = vunpack.c.l.b16 %v396
    %v657 = vunpack.c.l.b16 %v397
    %v658 = vunpack.c.l.b16 %v398
    %v659 = vunpack.c.l.b16 %v399
    %v660 = vunpack.c.l.b16 %v400
    %v661 = vunpack.c.l.b16 %v401
    %v662 = vunpack.c.l.b16 %v402
    %v663 = vunpack.c.l.b16 %v403
    %v664 = vunpack.c.l.b16 %v404
    %v665 = vunpack.c.l.b16 %v405
    %v666 = vunpack.c.l.b16 %v406
    %v667 = vunpack.c.l.b16 %v407
    %v668 = vpack.c.b16 %v541, %v540
    %v669 = vpack.c.b16 %v543, %v542
    %v670 = vpack.c.b16 %v545, %v544
    %v671 = vpack.c.b16 %v547, %v546
    %v672 = vpack.c.b16 %v549, %v548
    %v673 = vpack.c.b16 %v551, %v550
    %v674 = vpack.c.b16 %v553, %v552
    %v675 = vpack.c.b16 %v555, %v554
    %v676 = vpack.c.b16 %v557, %v556
    %v677 = vpack.c.b16 %v559, %v558
    %v678 = vpack.c.b16 %v561, %v560
    %v679 = vpack.c.b16 %v563, %v562
    %v680 = vpack.c.b16 %v565, %v564
    %v681 = vpack.c.b16 %v567, %v566
    %v682 = vpack.c.b16 %v569, %v568
    %v683 = vpack.c.b16 %v571, %v570
    %v684 = vpack.c.b16 %v573, %v572
    %v685 = vpack.c.b16 %v575, %v574
    %v686 = vpack.c.b16 %v577, %v576
    %v687 = vpack.c.b16 %v579, %v578
    %v688 = vpack.c.b16 %v581, %v580
    %v689 = vpack.c.b16 %v583, %v582
    %v690 = vpack.c.b16 %v585, %v584
    %v691 = vpack.c.b16 %v587, %v586
    %v692 = vpack.c.b16 %v589, %v588
    %v693 = vpack.c.b16 %v591, %v590
    %v694 = vpack.c.b16 %v593, %v592
    %v695 = vpack.c.b16 %v595, %v594
    %v696 = vpack.c.b16 %v597, %v596
    %v697 = vpack.c.b16 %v599, %v598
    %v698 = vpack.c.b16 %v601, %v600
    %v699 = vpack.c.b16 %v603, %v602
    %v700 = vpack.c.b16 %v605, %v604
    %v701 = vpack.c.b16 %v607, %v606
    %v702 = vpack.c.b16 %v609, %v608
    %v703 = vpack.c.b16 %v611, %v610
    %v704 = vpack.c.b16 %v613, %v612
    %v705 = vpack.c.b16 %v615, %v614
    %v706 = vpack.c.b16 %v617, %v616
    %v707 = vpack.c.b16 %v619, %v618
    %v708 = vpack.c.b16 %v621, %v620
    %v709 = vpack.c.b16 %v623, %v622
    %v710 = vpack.c.b16 %v625, %v624
    %v711 = vpack.c.b16 %v627, %v626
    %v712 = vpack.c.b16 %v629, %v628
    %v713 = vpack.c.b16 %v631, %v630
    %v714 = vpack.c.b16 %v633, %v632
    %v715 = vpack.c.b16 %v635, %v634
    %v716 = vpack.c.b16 %v637, %v636
    %v717 = vpack.c.b16 %v639, %v638
    %v718 = vpack.c.b16 %v641, %v640
    %v719 = vpack.c.b16 %v643, %v642
    %v720 = vpack.c.b16 %v645, %v644
    %v721 = vpack.c.b16 %v647, %v646
    %v722 = vpack.c.b16 %v649, %v648
    %v723 = vpack.c.b16 %v651, %v650
    %v724 = vpack.c.b16 %v653, %v652
    %v725 = vpack.c.b16 %v655, %v654
    %v726 = vpack.c.b16 %v657, %v656
    %v727 = vpack.c.b16 %v659, %v658
    %v728 = vpack.c.b16 %v661, %v660
    %v729 = vpack.c.b16 %v663, %v662
    %v730 = vpack.c.b16 %v665, %v664
    %v731 = vpack.c.b16 %v667, %v666
    %796 = vmatpush.bf16.msra.mxu0 %v675
    %797 = vmatpush.bf16.msra.mxu0 %v674
    %798 = vmatpush.bf16.msra.mxu0 %v673
    %799 = vmatpush.bf16.msra.mxu0 %v672
    %800 = vmatpush.bf16.msra.mxu0 %v671
    %801 = vmatpush.bf16.msra.mxu0 %v670
    %802 = vmatpush.bf16.msra.mxu0 %v669
    %803 = vmatpush.bf16.msra.mxu0 %v668
    %804 = vmatmul.bf16.gmra.mxu0 %v272
    %v805 = vpop.f32.mrf.mxu0
    %v806 = vadd.f32 %v410, %v805
    %v807 = vpop.f32.mrf.mxu0
    %808 = vdwg.mxu0
    %809 = vmatpush.bf16.msra.mxu0 %v683
    %810 = vmatpush.bf16.msra.mxu0 %v682
    %811 = vmatpush.bf16.msra.mxu0 %v681
    %812 = vmatpush.bf16.msra.mxu0 %v680
    %813 = vmatpush.bf16.msra.mxu0 %v679
    %814 = vmatpush.bf16.msra.mxu0 %v678
    %815 = vmatpush.bf16.msra.mxu0 %v677
    %816 = vmatpush.bf16.msra.mxu0 %v676
    %817 = vmatmul.bf16.gmra.mxu0 %v273
    %v818 = vpop.f32.mrf.mxu0
    %v819 = vadd.f32 %v806, %v818
    %v820 = vpop.f32.mrf.mxu0
    %821 = vdwg.mxu0
    %822 = vmatpush.bf16.msra.mxu0 %v691
    %823 = vmatpush.bf16.msra.mxu0 %v690
    %824 = vmatpush.bf16.msra.mxu0 %v689
    %825 = vmatpush.bf16.msra.mxu0 %v688
    %826 = vmatpush.bf16.msra.mxu0 %v687
    %827 = vmatpush.bf16.msra.mxu0 %v686
    %828 = vmatpush.bf16.msra.mxu0 %v685
    %829 = vmatpush.bf16.msra.mxu0 %v684
    %830 = vmatmul.bf16.gmra.mxu0 %v274
    %v831 = vpop.f32.mrf.mxu0
    %v832 = vadd.f32 %v819, %v831
    %v833 = vpop.f32.mrf.mxu0
    %834 = vdwg.mxu0
    %835 = vmatpush.bf16.msra.mxu0 %v699
    %836 = vmatpush.bf16.msra.mxu0 %v698
    %837 = vmatpush.bf16.msra.mxu0 %v697
    %838 = vmatpush.bf16.msra.mxu0 %v696
    %839 = vmatpush.bf16.msra.mxu0 %v695
    %840 = vmatpush.bf16.msra.mxu0 %v694
    %841 = vmatpush.bf16.msra.mxu0 %v693
    %842 = vmatpush.bf16.msra.mxu0 %v692
    %843 = vmatmul.bf16.gmra.mxu0 %v275
    %v844 = vpop.f32.mrf.mxu0
    %v845 = vadd.f32 %v832, %v844
    %v846 = vpop.f32.mrf.mxu0
    %847 = vdwg.mxu0
    %848 = vmatpush.bf16.msra.mxu0 %v707
    %849 = vmatpush.bf16.msra.mxu0 %v706
    %850 = vmatpush.bf16.msra.mxu0 %v705
    %851 = vmatpush.bf16.msra.mxu0 %v704
    %852 = vmatpush.bf16.msra.mxu0 %v703
    %853 = vmatpush.bf16.msra.mxu0 %v702
    %854 = vmatpush.bf16.msra.mxu0 %v701
    %855 = vmatpush.bf16.msra.mxu0 %v700
    %856 = vmatmul.bf16.gmra.mxu0 %v276
    %v857 = vpop.f32.mrf.mxu0
    %v858 = vadd.f32 %v845, %v857
    %v859 = vpop.f32.mrf.mxu0
    %860 = vdwg.mxu0
    %861 = vmatpush.bf16.msra.mxu0 %v715
    %862 = vmatpush.bf16.msra.mxu0 %v714
    %863 = vmatpush.bf16.msra.mxu0 %v713
    %864 = vmatpush.bf16.msra.mxu0 %v712
    %865 = vmatpush.bf16.msra.mxu0 %v711
    %866 = vmatpush.bf16.msra.mxu0 %v710
    %867 = vmatpush.bf16.msra.mxu0 %v709
    %868 = vmatpush.bf16.msra.mxu0 %v708
    %869 = vmatmul.bf16.gmra.mxu0 %v277
    %v870 = vpop.f32.mrf.mxu0
    %v871 = vadd.f32 %v858, %v870
    %v872 = vpop.f32.mrf.mxu0
    %873 = vdwg.mxu0
    %874 = vmatpush.bf16.msra.mxu0 %v723
    %875 = vmatpush.bf16.msra.mxu0 %v722
    %876 = vmatpush.bf16.msra.mxu0 %v721
    %877 = vmatpush.bf16.msra.mxu0 %v720
    %878 = vmatpush.bf16.msra.mxu0 %v719
    %879 = vmatpush.bf16.msra.mxu0 %v718
    %880 = vmatpush.bf16.msra.mxu0 %v717
    %881 = vmatpush.bf16.msra.mxu0 %v716
    %882 = vmatmul.bf16.gmra.mxu0 %v278
    %v883 = vpop.f32.mrf.mxu0
    %v884 = vadd.f32 %v871, %v883
    %v885 = vpop.f32.mrf.mxu0
    %886 = vdwg.mxu0
    %887 = vmatpush.bf16.msra.mxu0 %v731
    %888 = vmatpush.bf16.msra.mxu0 %v730
    %889 = vmatpush.bf16.msra.mxu0 %v729
    %890 = vmatpush.bf16.msra.mxu0 %v728
    %891 = vmatpush.bf16.msra.mxu0 %v727
    %892 = vmatpush.bf16.msra.mxu0 %v726
    %893 = vmatpush.bf16.msra.mxu0 %v725
    %894 = vmatpush.bf16.msra.mxu0 %v724
    %895 = vmatmul.bf16.gmra.mxu0 %v279
    %v896 = vpop.f32.mrf.mxu0
    %v897 = vadd.f32 %v884, %v896
    %v898 = vpop.f32.mrf.mxu0
    %899 = vdwg.mxu0
    %v900 = vmax.f32 %v897, 0.0
    %v901 = vld [vmem:[%s1] sm:$0xff]
    %v902 = vld [vmem:[%s1 + $0x8] sm:$0xff]
    %v903 = vld [vmem:[%s1 + $0x10] sm:$0xff]
    %v904 = vld [vmem:[%s1 + $0x18] sm:$0xff]
    %v905 = vld [vmem:[%s1 + $0x20] sm:$0xff]
    %v906 = vld [vmem:[%s1 + $0x28] sm:$0xff]
    %v907 = vld [vmem:[%s1 + $0x30] sm:$0xff]
    %v908 = vld [vmem:[%s1 + $0x38] sm:$0xff]
    %v909 = vld [vmem:[%s1 + $0x40] sm:$0xff]
    %v910 = vld [vmem:[%s1 + $0x48] sm:$0xff]
    %v911 = vld [vmem:[%s1 + $0x50] sm:$0xff]
    %v912 = vld [vmem:[%s1 + $0x58] sm:$0xff]
    %v913 = vld [vmem:[%s1 + $0x60] sm:$0xff]
    %v914 = vld [vmem:[%s1 + $0x68] sm:$0xff]
    %v915 = vld [vmem:[%s1 + $0x70] sm:$0xff]
    %v916 = vld [vmem:[%s1 + $0x78] sm:$0xff]
    %v917 = vld [vmem:[%s1 + $0x80] sm:$0xff]
    %v918 = vld [vmem:[%s1 + $0x88] sm:$0xff]
    %v919 = vld [vmem:[%s1 + $0x90] sm:$0xff]
    %v920 = vld [vmem:[%s1 + $0x98] sm:$0xff]
    %v921 = vld [vmem:[%s1 + $0xa0] sm:$0xff]
    %v922 = vld [vmem:[%s1 + $0xa8] sm:$0xff]
    %v923 = vld [vmem:[%s1 + $0xb0] sm:$0xff]
    %v924 = vld [vmem:[%s1 + $0xb8] sm:$0xff]
    %v925 = vld [vmem:[%s1 + $0xc0] sm:$0xff]
    %v926 = vld [vmem:[%s1 + $0xc8] sm:$0xff]
    %v927 = vld [vmem:[%s1 + $0xd0] sm:$0xff]
    %v928 = vld [vmem:[%s1 + $0xd8] sm:$0xff]
    %v929 = vld [vmem:[%s1 + $0xe0] sm:$0xff]
    %v930 = vld [vmem:[%s1 + $0xe8] sm:$0xff]
    %v931 = vld [vmem:[%s1 + $0xf0] sm:$0xff]
    %v932 = vld [vmem:[%s1 + $0xf8] sm:$0xff]
    %v933 = vld [vmem:[%s1 + $0x100] sm:$0xff]
    %v934 = vld [vmem:[%s1 + $0x108] sm:$0xff]
    %v935 = vld [vmem:[%s1 + $0x110] sm:$0xff]
    %v936 = vld [vmem:[%s1 + $0x118] sm:$0xff]
    %v937 = vld [vmem:[%s1 + $0x120] sm:$0xff]
    %v938 = vld [vmem:[%s1 + $0x128] sm:$0xff]
    %v939 = vld [vmem:[%s1 + $0x130] sm:$0xff]
    %v940 = vld [vmem:[%s1 + $0x138] sm:$0xff]
    %v941 = vld [vmem:[%s1 + $0x140] sm:$0xff]
    %v942 = vld [vmem:[%s1 + $0x148] sm:$0xff]
    %v943 = vld [vmem:[%s1 + $0x150] sm:$0xff]
    %v944 = vld [vmem:[%s1 + $0x158] sm:$0xff]
    %v945 = vld [vmem:[%s1 + $0x160] sm:$0xff]
    %v946 = vld [vmem:[%s1 + $0x168] sm:$0xff]
    %v947 = vld [vmem:[%s1 + $0x170] sm:$0xff]
    %v948 = vld [vmem:[%s1 + $0x178] sm:$0xff]
    %v949 = vld [vmem:[%s1 + $0x180] sm:$0xff]
    %v950 = vld [vmem:[%s1 + $0x188] sm:$0xff]
    %v951 = vld [vmem:[%s1 + $0x190] sm:$0xff]
    %v952 = vld [vmem:[%s1 + $0x198] sm:$0xff]
    %v953 = vld [vmem:[%s1 + $0x1a0] sm:$0xff]
    %v954 = vld [vmem:[%s1 + $0x1a8] sm:$0xff]
    %v955 = vld [vmem:[%s1 + $0x1b0] sm:$0xff]
    %v956 = vld [vmem:[%s1 + $0x1b8] sm:$0xff]
    %v957 = vld [vmem:[%s1 + $0x1c0] sm:$0xff]
    %v958 = vld [vmem:[%s1 + $0x1c8] sm:$0xff]
    %v959 = vld [vmem:[%s1 + $0x1d0] sm:$0xff]
    %v960 = vld [vmem:[%s1 + $0x1d8] sm:$0xff]
    %v961 = vld [vmem:[%s1 + $0x1e0] sm:$0xff]
    %v962 = vld [vmem:[%s1 + $0x1e8] sm:$0xff]
    %v963 = vld [vmem:[%s1 + $0x1f0] sm:$0xff]
    %v964 = vld [vmem:[%s1 + $0x1f8] sm:$0xff]
    %v965 = vld [vmem:[%s1 + $0x200] sm:$0xff]
    %v966 = vld [vmem:[%s1 + $0x208] sm:$0xff]
    %v967 = vld [vmem:[%s1 + $0x210] sm:$0xff]
    %v968 = vld [vmem:[%s1 + $0x218] sm:$0xff]
    %v969 = vld [vmem:[%s1 + $0x220] sm:$0xff]
    %v970 = vld [vmem:[%s1 + $0x228] sm:$0xff]
    %v971 = vld [vmem:[%s1 + $0x230] sm:$0xff]
    %v972 = vld [vmem:[%s1 + $0x238] sm:$0xff]
    %v973 = vld [vmem:[%s1 + $0x240] sm:$0xff]
    %v974 = vld [vmem:[%s1 + $0x248] sm:$0xff]
    %v975 = vld [vmem:[%s1 + $0x250] sm:$0xff]
    %v976 = vld [vmem:[%s1 + $0x258] sm:$0xff]
    %v977 = vld [vmem:[%s1 + $0x260] sm:$0xff]
    %v978 = vld [vmem:[%s1 + $0x268] sm:$0xff]
    %v979 = vld [vmem:[%s1 + $0x270] sm:$0xff]
    %v980 = vld [vmem:[%s1 + $0x278] sm:$0xff]
    %v981 = vld [vmem:[%s1 + $0x280] sm:$0xff]
    %v982 = vld [vmem:[%s1 + $0x288] sm:$0xff]
    %v983 = vld [vmem:[%s1 + $0x290] sm:$0xff]
    %v984 = vld [vmem:[%s1 + $0x298] sm:$0xff]
    %v985 = vld [vmem:[%s1 + $0x2a0] sm:$0xff]
    %v986 = vld [vmem:[%s1 + $0x2a8] sm:$0xff]
    %v987 = vld [vmem:[%s1 + $0x2b0] sm:$0xff]
    %v988 = vld [vmem:[%s1 + $0x2b8] sm:$0xff]
    %v989 = vld [vmem:[%s1 + $0x2c0] sm:$0xff]
    %v990 = vld [vmem:[%s1 + $0x2c8] sm:$0xff]
    %v991 = vld [vmem:[%s1 + $0x2d0] sm:$0xff]
    %v992 = vld [vmem:[%s1 + $0x2d8] sm:$0xff]
    %v993 = vld [vmem:[%s1 + $0x2e0] sm:$0xff]
    %v994 = vld [vmem:[%s1 + $0x2e8] sm:$0xff]
    %v995 = vld [vmem:[%s1 + $0x2f0] sm:$0xff]
    %v996 = vld [vmem:[%s1 + $0x2f8] sm:$0xff]
    %v997 = vld [vmem:[%s1 + $0x300] sm:$0xff]
    %v998 = vld [vmem:[%s1 + $0x308] sm:$0xff]
    %v999 = vld [vmem:[%s1 + $0x310] sm:$0xff]
    %v1000 = vld [vmem:[%s1 + $0x318] sm:$0xff]
    %v1001 = vld [vmem:[%s1 + $0x320] sm:$0xff]
    %v1002 = vld [vmem:[%s1 + $0x328] sm:$0xff]
    %v1003 = vld [vmem:[%s1 + $0x330] sm:$0xff]
    %v1004 = vld [vmem:[%s1 + $0x338] sm:$0xff]
    %v1005 = vld [vmem:[%s1 + $0x340] sm:$0xff]
    %v1006 = vld [vmem:[%s1 + $0x348] sm:$0xff]
    %v1007 = vld [vmem:[%s1 + $0x350] sm:$0xff]
    %v1008 = vld [vmem:[%s1 + $0x358] sm:$0xff]
    %v1009 = vld [vmem:[%s1 + $0x360] sm:$0xff]
    %v1010 = vld [vmem:[%s1 + $0x368] sm:$0xff]
    %v1011 = vld [vmem:[%s1 + $0x370] sm:$0xff]
    %v1012 = vld [vmem:[%s1 + $0x378] sm:$0xff]
    %v1013 = vld [vmem:[%s1 + $0x380] sm:$0xff]
    %v1014 = vld [vmem:[%s1 + $0x388] sm:$0xff]
    %v1015 = vld [vmem:[%s1 + $0x390] sm:$0xff]
    %v1016 = vld [vmem:[%s1 + $0x398] sm:$0xff]
    %v1017 = vld [vmem:[%s1 + $0x3a0] sm:$0xff]
    %v1018 = vld [vmem:[%s1 + $0x3a8] sm:$0xff]
    %v1019 = vld [vmem:[%s1 + $0x3b0] sm:$0xff]
    %v1020 = vld [vmem:[%s1 + $0x3b8] sm:$0xff]
    %v1021 = vld [vmem:[%s1 + $0x3c0] sm:$0xff]
    %v1022 = vld [vmem:[%s1 + $0x3c8] sm:$0xff]
    %v1023 = vld [vmem:[%s1 + $0x3d0] sm:$0xff]
    %v1024 = vld [vmem:[%s1 + $0x3d8] sm:$0xff]
    %v1025 = vld [vmem:[%s1 + $0x3e0] sm:$0xff]
    %v1026 = vld [vmem:[%s1 + $0x3e8] sm:$0xff]
    %v1027 = vld [vmem:[%s1 + $0x3f0] sm:$0xff]
    %v1028 = vld [vmem:[%s1 + $0x3f8] sm:$0xff]
    %v1029 = vpack.c.bf16 %v902, %v901
    %v1030 = vpack.c.bf16 %v904, %v903
    %v1031 = vpack.c.bf16 %v906, %v905
    %v1032 = vpack.c.bf16 %v908, %v907
    %v1033 = vpack.c.bf16 %v910, %v909
    %v1034 = vpack.c.bf16 %v912, %v911
    %v1035 = vpack.c.bf16 %v914, %v913
    %v1036 = vpack.c.bf16 %v916, %v915
    %v1037 = vpack.c.bf16 %v918, %v917
    %v1038 = vpack.c.bf16 %v920, %v919
    %v1039 = vpack.c.bf16 %v922, %v921
    %v1040 = vpack.c.bf16 %v924, %v923
    %v1041 = vpack.c.bf16 %v926, %v925
    %v1042 = vpack.c.bf16 %v928, %v927
    %v1043 = vpack.c.bf16 %v930, %v929
    %v1044 = vpack.c.bf16 %v932, %v931
    %v1045 = vpack.c.bf16 %v934, %v933
    %v1046 = vpack.c.bf16 %v936, %v935
    %v1047 = vpack.c.bf16 %v938, %v937
    %v1048 = vpack.c.bf16 %v940, %v939
    %v1049 = vpack.c.bf16 %v942, %v941
    %v1050 = vpack.c.bf16 %v944, %v943
    %v1051 = vpack.c.bf16 %v946, %v945
    %v1052 = vpack.c.bf16 %v948, %v947
    %v1053 = vpack.c.bf16 %v950, %v949
    %v1054 = vpack.c.bf16 %v952, %v951
    %v1055 = vpack.c.bf16 %v954, %v953
    %v1056 = vpack.c.bf16 %v956, %v955
    %v1057 = vpack.c.bf16 %v958, %v957
    %v1058 = vpack.c.bf16 %v960, %v959
    %v1059 = vpack.c.bf16 %v962, %v961
    %v1060 = vpack.c.bf16 %v964, %v963
    %v1061 = vpack.c.bf16 %v966, %v965
    %v1062 = vpack.c.bf16 %v968, %v967
    %v1063 = vpack.c.bf16 %v970, %v969
    %v1064 = vpack.c.bf16 %v972, %v971
    %v1065 = vpack.c.bf16 %v974, %v973
    %v1066 = vpack.c.bf16 %v976, %v975
    %v1067 = vpack.c.bf16 %v978, %v977
    %v1068 = vpack.c.bf16 %v980, %v979
    %v1069 = vpack.c.bf16 %v982, %v981
    %v1070 = vpack.c.bf16 %v984, %v983
    %v1071 = vpack.c.bf16 %v986, %v985
    %v1072 = vpack.c.bf16 %v988, %v987
    %v1073 = vpack.c.bf16 %v990, %v989
    %v1074 = vpack.c.bf16 %v992, %v991
    %v1075 = vpack.c.bf16 %v994, %v993
    %v1076 = vpack.c.bf16 %v996, %v995
    %v1077 = vpack.c.bf16 %v998, %v997
    %v1078 = vpack.c.bf16 %v1000, %v999
    %v1079 = vpack.c.bf16 %v1002, %v1001
    %v1080 = vpack.c.bf16 %v1004, %v1003
    %v1081 = vpack.c.bf16 %v1006, %v1005
    %v1082 = vpack.c.bf16 %v1008, %v1007
    %v1083 = vpack.c.bf16 %v1010, %v1009
    %v1084 = vpack.c.bf16 %v1012, %v1011
    %v1085 = vpack.c.bf16 %v1014, %v1013
    %v1086 = vpack.c.bf16 %v1016, %v1015
    %v1087 = vpack.c.bf16 %v1018, %v1017
    %v1088 = vpack.c.bf16 %v1020, %v1019
    %v1089 = vpack.c.bf16 %v1022, %v1021
    %v1090 = vpack.c.bf16 %v1024, %v1023
    %v1091 = vpack.c.bf16 %v1026, %v1025
    %v1092 = vpack.c.bf16 %v1028, %v1027
    %v1093 = vld [vmem:[%s7] sm:$0x3]
    %v1094 = vld [vmem:[%s8] sm:$0x1]
    %v1096 = vperm.slane %v1094, 0
    %vm1098 = vcmask 23552
    %v1100 = vsel %vm1098, %v1029, 0
    %v1103 = vsel %vm1098, %v1030, 0
    %v1106 = vsel %vm1098, %v1031, 0
    %v1109 = vsel %vm1098, %v1032, 0
    %v1112 = vsel %vm1098, %v1033, 0
    %v1115 = vsel %vm1098, %v1034, 0
    %v1118 = vsel %vm1098, %v1035, 0
    %v1121 = vsel %vm1098, %v1036, 0
    %v1124 = vsel %vm1098, %v1037, 0
    %v1127 = vsel %vm1098, %v1038, 0
    %v1130 = vsel %vm1098, %v1039, 0
    %v1133 = vsel %vm1098, %v1040, 0
    %v1136 = vsel %vm1098, %v1041, 0
    %v1139 = vsel %vm1098, %v1042, 0
    %v1142 = vsel %vm1098, %v1043, 0
    %v1145 = vsel %vm1098, %v1044, 0
    %v1148 = vsel %vm1098, %v1045, 0
    %v1151 = vsel %vm1098, %v1046, 0
    %v1154 = vsel %vm1098, %v1047, 0
    %v1157 = vsel %vm1098, %v1048, 0
    %v1160 = vsel %vm1098, %v1049, 0
    %v1163 = vsel %vm1098, %v1050, 0
    %v1166 = vsel %vm1098, %v1051, 0
    %v1169 = vsel %vm1098, %v1052, 0
    %v1172 = vsel %vm1098, %v1053, 0
    %v1175 = vsel %vm1098, %v1054, 0
    %v1178 = vsel %vm1098, %v1055, 0
    %v1181 = vsel %vm1098, %v1056, 0
    %v1184 = vsel %vm1098, %v1057, 0
    %v1187 = vsel %vm1098, %v1058, 0
    %v1190 = vsel %vm1098, %v1059, 0
    %v1193 = vsel %vm1098, %v1060, 0
    %v1196 = vsel %vm1098, %v1061, 0
    %v1199 = vsel %vm1098, %v1062, 0
    %v1202 = vsel %vm1098, %v1063, 0
    %v1205 = vsel %vm1098, %v1064, 0
    %v1208 = vsel %vm1098, %v1065, 0
    %v1211 = vsel %vm1098, %v1066, 0
    %v1214 = vsel %vm1098, %v1067, 0
    %v1217 = vsel %vm1098, %v1068, 0
    %v1220 = vsel %vm1098, %v1069, 0
    %v1223 = vsel %vm1098, %v1070, 0
    %v1226 = vsel %vm1098, %v1071, 0
    %v1229 = vsel %vm1098, %v1072, 0
    %v1232 = vsel %vm1098, %v1073, 0
    %v1235 = vsel %vm1098, %v1074, 0
    %v1238 = vsel %vm1098, %v1075, 0
    %v1241 = vsel %vm1098, %v1076, 0
    %v1244 = vsel %vm1098, %v1077, 0
    %v1247 = vsel %vm1098, %v1078, 0
    %v1250 = vsel %vm1098, %v1079, 0
    %v1253 = vsel %vm1098, %v1080, 0
    %v1256 = vsel %vm1098, %v1081, 0
    %v1259 = vsel %vm1098, %v1082, 0
    %v1262 = vsel %vm1098, %v1083, 0
    %v1265 = vsel %vm1098, %v1084, 0
    %v1268 = vsel %vm1098, %v1085, 0
    %v1271 = vsel %vm1098, %v1086, 0
    %v1274 = vsel %vm1098, %v1087, 0
    %v1277 = vsel %vm1098, %v1088, 0
    %v1280 = vsel %vm1098, %v1089, 0
    %v1283 = vsel %vm1098, %v1090, 0
    %v1286 = vsel %vm1098, %v1091, 0
    %v1289 = vsel %vm1098, %v1092, 0
    %vm1291 = vcmask 1040384
    %vm1292 = vcmask 1041408
    %v1293 = vsel %vm1291, 4294967295, 65535
    %v1294 = vsel %vm1292, %v1293, 0
    %v1296 = vand.u32 %v1093, %v1294
    %1298 = vmatpush.bf16.msra.mxu0 0
    %1299 = vmatpush.bf16.msra.mxu0 0
    %1300 = vmatpush.bf16.msra.mxu0 0
    %1301 = vmatpush.bf16.msra.mxu0 0
    %1302 = vmatpush.bf16.msra.mxu0 0
    %1303 = vmatpush.bf16.msra.mxu0 0
    %1304 = vmatpush.bf16.msra.mxu0 0
    %1305 = vmatpush.bf16.msra.mxu0 %v1296
    %1306 = vmatmul.bf16.gmra.mxu0 %v1100
    %v1307 = vpop.f32.mrf.mxu0
    %v1308 = vadd.f32 %v1096, %v1307
    %v1309 = vpop.f32.mrf.mxu0
    %v1310 = vadd.f32 %v1096, %v1309
    %1311 = vmatmul.bf16.gmra.mxu0 %v1103
    %v1312 = vpop.f32.mrf.mxu0
    %v1313 = vadd.f32 %v1096, %v1312
    %v1314 = vpop.f32.mrf.mxu0
    %v1315 = vadd.f32 %v1096, %v1314
    %1316 = vmatmul.bf16.gmra.mxu0 %v1106
    %v1317 = vpop.f32.mrf.mxu0
    %v1318 = vadd.f32 %v1096, %v1317
    %v1319 = vpop.f32.mrf.mxu0
    %v1320 = vadd.f32 %v1096, %v1319
    %1321 = vmatmul.bf16.gmra.mxu0 %v1109
    %v1322 = vpop.f32.mrf.mxu0
    %v1323 = vadd.f32 %v1096, %v1322
    %v1324 = vpop.f32.mrf.mxu0
    %v1325 = vadd.f32 %v1096, %v1324
    %1326 = vmatmul.bf16.gmra.mxu0 %v1112
    %v1327 = vpop.f32.mrf.mxu0
    %v1328 = vadd.f32 %v1096, %v1327
    %v1329 = vpop.f32.mrf.mxu0
    %v1330 = vadd.f32 %v1096, %v1329
    %1331 = vmatmul.bf16.gmra.mxu0 %v1115
    %v1332 = vpop.f32.mrf.mxu0
    %v1333 = vadd.f32 %v1096, %v1332
    %v1334 = vpop.f32.mrf.mxu0
    %v1335 = vadd.f32 %v1096, %v1334
    %1336 = vmatmul.bf16.gmra.mxu0 %v1118
    %v1337 = vpop.f32.mrf.mxu0
    %v1338 = vadd.f32 %v1096, %v1337
    %v1339 = vpop.f32.mrf.mxu0
    %v1340 = vadd.f32 %v1096, %v1339
    %1341 = vmatmul.bf16.gmra.mxu0 %v1121
    %v1342 = vpop.f32.mrf.mxu0
    %v1343 = vadd.f32 %v1096, %v1342
    %v1344 = vpop.f32.mrf.mxu0
    %v1345 = vadd.f32 %v1096, %v1344
    %1346 = vmatmul.bf16.gmra.mxu0 %v1124
    %v1347 = vpop.f32.mrf.mxu0
    %v1348 = vadd.f32 %v1096, %v1347
    %v1349 = vpop.f32.mrf.mxu0
    %v1350 = vadd.f32 %v1096, %v1349
    %1351 = vmatmul.bf16.gmra.mxu0 %v1127
    %v1352 = vpop.f32.mrf.mxu0
    %v1353 = vadd.f32 %v1096, %v1352
    %v1354 = vpop.f32.mrf.mxu0
    %v1355 = vadd.f32 %v1096, %v1354
    %1356 = vmatmul.bf16.gmra.mxu0 %v1130
    %v1357 = vpop.f32.mrf.mxu0
    %v1358 = vadd.f32 %v1096, %v1357
    %v1359 = vpop.f32.mrf.mxu0
    %v1360 = vadd.f32 %v1096, %v1359
    %1361 = vmatmul.bf16.gmra.mxu0 %v1133
    %v1362 = vpop.f32.mrf.mxu0
    %v1363 = vadd.f32 %v1096, %v1362
    %v1364 = vpop.f32.mrf.mxu0
    %v1365 = vadd.f32 %v1096, %v1364
    %1366 = vmatmul.bf16.gmra.mxu0 %v1136
    %v1367 = vpop.f32.mrf.mxu0
    %v1368 = vadd.f32 %v1096, %v1367
    %v1369 = vpop.f32.mrf.mxu0
    %v1370 = vadd.f32 %v1096, %v1369
    %1371 = vmatmul.bf16.gmra.mxu0 %v1139
    %v1372 = vpop.f32.mrf.mxu0
    %v1373 = vadd.f32 %v1096, %v1372
    %v1374 = vpop.f32.mrf.mxu0
    %v1375 = vadd.f32 %v1096, %v1374
    %1376 = vmatmul.bf16.gmra.mxu0 %v1142
    %v1377 = vpop.f32.mrf.mxu0
    %v1378 = vadd.f32 %v1096, %v1377
    %v1379 = vpop.f32.mrf.mxu0
    %v1380 = vadd.f32 %v1096, %v1379
    %1381 = vmatmul.bf16.gmra.mxu0 %v1145
    %v1382 = vpop.f32.mrf.mxu0
    %v1383 = vadd.f32 %v1096, %v1382
    %v1384 = vpop.f32.mrf.mxu0
    %v1385 = vadd.f32 %v1096, %v1384
    %1386 = vmatmul.bf16.gmra.mxu0 %v1148
    %v1387 = vpop.f32.mrf.mxu0
    %v1388 = vadd.f32 %v1096, %v1387
    %v1389 = vpop.f32.mrf.mxu0
    %v1390 = vadd.f32 %v1096, %v1389
    %1391 = vmatmul.bf16.gmra.mxu0 %v1151
    %v1392 = vpop.f32.mrf.mxu0
    %v1393 = vadd.f32 %v1096, %v1392
    %v1394 = vpop.f32.mrf.mxu0
    %v1395 = vadd.f32 %v1096, %v1394
    %1396 = vmatmul.bf16.gmra.mxu0 %v1154
    %v1397 = vpop.f32.mrf.mxu0
    %v1398 = vadd.f32 %v1096, %v1397
    %v1399 = vpop.f32.mrf.mxu0
    %v1400 = vadd.f32 %v1096, %v1399
    %1401 = vmatmul.bf16.gmra.mxu0 %v1157
    %v1402 = vpop.f32.mrf.mxu0
    %v1403 = vadd.f32 %v1096, %v1402
    %v1404 = vpop.f32.mrf.mxu0
    %v1405 = vadd.f32 %v1096, %v1404
    %1406 = vmatmul.bf16.gmra.mxu0 %v1160
    %v1407 = vpop.f32.mrf.mxu0
    %v1408 = vadd.f32 %v1096, %v1407
    %v1409 = vpop.f32.mrf.mxu0
    %v1410 = vadd.f32 %v1096, %v1409
    %1411 = vmatmul.bf16.gmra.mxu0 %v1163
    %v1412 = vpop.f32.mrf.mxu0
    %v1413 = vadd.f32 %v1096, %v1412
    %v1414 = vpop.f32.mrf.mxu0
    %v1415 = vadd.f32 %v1096, %v1414
    %1416 = vmatmul.bf16.gmra.mxu0 %v1166
    %v1417 = vpop.f32.mrf.mxu0
    %v1418 = vadd.f32 %v1096, %v1417
    %v1419 = vpop.f32.mrf.mxu0
    %v1420 = vadd.f32 %v1096, %v1419
    %1421 = vmatmul.bf16.gmra.mxu0 %v1169
    %v1422 = vpop.f32.mrf.mxu0
    %v1423 = vadd.f32 %v1096, %v1422
    %v1424 = vpop.f32.mrf.mxu0
    %v1425 = vadd.f32 %v1096, %v1424
    %1426 = vmatmul.bf16.gmra.mxu0 %v1172
    %v1427 = vpop.f32.mrf.mxu0
    %v1428 = vadd.f32 %v1096, %v1427
    %v1429 = vpop.f32.mrf.mxu0
    %v1430 = vadd.f32 %v1096, %v1429
    %1431 = vmatmul.bf16.gmra.mxu0 %v1175
    %v1432 = vpop.f32.mrf.mxu0
    %v1433 = vadd.f32 %v1096, %v1432
    %v1434 = vpop.f32.mrf.mxu0
    %v1435 = vadd.f32 %v1096, %v1434
    %1436 = vmatmul.bf16.gmra.mxu0 %v1178
    %v1437 = vpop.f32.mrf.mxu0
    %v1438 = vadd.f32 %v1096, %v1437
    %v1439 = vpop.f32.mrf.mxu0
    %v1440 = vadd.f32 %v1096, %v1439
    %1441 = vmatmul.bf16.gmra.mxu0 %v1181
    %v1442 = vpop.f32.mrf.mxu0
    %v1443 = vadd.f32 %v1096, %v1442
    %v1444 = vpop.f32.mrf.mxu0
    %v1445 = vadd.f32 %v1096, %v1444
    %1446 = vmatmul.bf16.gmra.mxu0 %v1184
    %v1447 = vpop.f32.mrf.mxu0
    %v1448 = vadd.f32 %v1096, %v1447
    %v1449 = vpop.f32.mrf.mxu0
    %v1450 = vadd.f32 %v1096, %v1449
    %1451 = vmatmul.bf16.gmra.mxu0 %v1187
    %v1452 = vpop.f32.mrf.mxu0
    %v1453 = vadd.f32 %v1096, %v1452
    %v1454 = vpop.f32.mrf.mxu0
    %v1455 = vadd.f32 %v1096, %v1454
    %1456 = vmatmul.bf16.gmra.mxu0 %v1190
    %v1457 = vpop.f32.mrf.mxu0
    %v1458 = vadd.f32 %v1096, %v1457
    %v1459 = vpop.f32.mrf.mxu0
    %v1460 = vadd.f32 %v1096, %v1459
    %1461 = vmatmul.bf16.gmra.mxu0 %v1193
    %v1462 = vpop.f32.mrf.mxu0
    %v1463 = vadd.f32 %v1096, %v1462
    %v1464 = vpop.f32.mrf.mxu0
    %v1465 = vadd.f32 %v1096, %v1464
    %1466 = vmatmul.bf16.gmra.mxu0 %v1196
    %v1467 = vpop.f32.mrf.mxu0
    %v1468 = vadd.f32 %v1096, %v1467
    %v1469 = vpop.f32.mrf.mxu0
    %v1470 = vadd.f32 %v1096, %v1469
    %1471 = vmatmul.bf16.gmra.mxu0 %v1199
    %v1472 = vpop.f32.mrf.mxu0
    %v1473 = vadd.f32 %v1096, %v1472
    %v1474 = vpop.f32.mrf.mxu0
    %v1475 = vadd.f32 %v1096, %v1474
    %1476 = vmatmul.bf16.gmra.mxu0 %v1202
    %v1477 = vpop.f32.mrf.mxu0
    %v1478 = vadd.f32 %v1096, %v1477
    %v1479 = vpop.f32.mrf.mxu0
    %v1480 = vadd.f32 %v1096, %v1479
    %1481 = vmatmul.bf16.gmra.mxu0 %v1205
    %v1482 = vpop.f32.mrf.mxu0
    %v1483 = vadd.f32 %v1096, %v1482
    %v1484 = vpop.f32.mrf.mxu0
    %v1485 = vadd.f32 %v1096, %v1484
    %1486 = vmatmul.bf16.gmra.mxu0 %v1208
    %v1487 = vpop.f32.mrf.mxu0
    %v1488 = vadd.f32 %v1096, %v1487
    %v1489 = vpop.f32.mrf.mxu0
    %v1490 = vadd.f32 %v1096, %v1489
    %1491 = vmatmul.bf16.gmra.mxu0 %v1211
    %v1492 = vpop.f32.mrf.mxu0
    %v1493 = vadd.f32 %v1096, %v1492
    %v1494 = vpop.f32.mrf.mxu0
    %v1495 = vadd.f32 %v1096, %v1494
    %1496 = vmatmul.bf16.gmra.mxu0 %v1214
    %v1497 = vpop.f32.mrf.mxu0
    %v1498 = vadd.f32 %v1096, %v1497
    %v1499 = vpop.f32.mrf.mxu0
    %v1500 = vadd.f32 %v1096, %v1499
    %1501 = vmatmul.bf16.gmra.mxu0 %v1217
    %v1502 = vpop.f32.mrf.mxu0
    %v1503 = vadd.f32 %v1096, %v1502
    %v1504 = vpop.f32.mrf.mxu0
    %v1505 = vadd.f32 %v1096, %v1504
    %1506 = vmatmul.bf16.gmra.mxu0 %v1220
    %v1507 = vpop.f32.mrf.mxu0
    %v1508 = vadd.f32 %v1096, %v1507
    %v1509 = vpop.f32.mrf.mxu0
    %v1510 = vadd.f32 %v1096, %v1509
    %1511 = vmatmul.bf16.gmra.mxu0 %v1223
    %v1512 = vpop.f32.mrf.mxu0
    %v1513 = vadd.f32 %v1096, %v1512
    %v1514 = vpop.f32.mrf.mxu0
    %v1515 = vadd.f32 %v1096, %v1514
    %1516 = vmatmul.bf16.gmra.mxu0 %v1226
    %v1517 = vpop.f32.mrf.mxu0
    %v1518 = vadd.f32 %v1096, %v1517
    %v1519 = vpop.f32.mrf.mxu0
    %v1520 = vadd.f32 %v1096, %v1519
    %1521 = vmatmul.bf16.gmra.mxu0 %v1229
    %v1522 = vpop.f32.mrf.mxu0
    %v1523 = vadd.f32 %v1096, %v1522
    %v1524 = vpop.f32.mrf.mxu0
    %v1525 = vadd.f32 %v1096, %v1524
    %1526 = vmatmul.bf16.gmra.mxu0 %v1232
    %v1527 = vpop.f32.mrf.mxu0
    %v1528 = vadd.f32 %v1096, %v1527
    %v1529 = vpop.f32.mrf.mxu0
    %v1530 = vadd.f32 %v1096, %v1529
    %1531 = vmatmul.bf16.gmra.mxu0 %v1235
    %v1532 = vpop.f32.mrf.mxu0
    %v1533 = vadd.f32 %v1096, %v1532
    %v1534 = vpop.f32.mrf.mxu0
    %v1535 = vadd.f32 %v1096, %v1534
    %1536 = vmatmul.bf16.gmra.mxu0 %v1238
    %v1537 = vpop.f32.mrf.mxu0
    %v1538 = vadd.f32 %v1096, %v1537
    %v1539 = vpop.f32.mrf.mxu0
    %v1540 = vadd.f32 %v1096, %v1539
    %1541 = vmatmul.bf16.gmra.mxu0 %v1241
    %v1542 = vpop.f32.mrf.mxu0
    %v1543 = vadd.f32 %v1096, %v1542
    %v1544 = vpop.f32.mrf.mxu0
    %v1545 = vadd.f32 %v1096, %v1544
    %1546 = vmatmul.bf16.gmra.mxu0 %v1244
    %v1547 = vpop.f32.mrf.mxu0
    %v1548 = vadd.f32 %v1096, %v1547
    %v1549 = vpop.f32.mrf.mxu0
    %v1550 = vadd.f32 %v1096, %v1549
    %1551 = vmatmul.bf16.gmra.mxu0 %v1247
    %v1552 = vpop.f32.mrf.mxu0
    %v1553 = vadd.f32 %v1096, %v1552
    %v1554 = vpop.f32.mrf.mxu0
    %v1555 = vadd.f32 %v1096, %v1554
    %1556 = vmatmul.bf16.gmra.mxu0 %v1250
    %v1557 = vpop.f32.mrf.mxu0
    %v1558 = vadd.f32 %v1096, %v1557
    %v1559 = vpop.f32.mrf.mxu0
    %v1560 = vadd.f32 %v1096, %v1559
    %1561 = vmatmul.bf16.gmra.mxu0 %v1253
    %v1562 = vpop.f32.mrf.mxu0
    %v1563 = vadd.f32 %v1096, %v1562
    %v1564 = vpop.f32.mrf.mxu0
    %v1565 = vadd.f32 %v1096, %v1564
    %1566 = vmatmul.bf16.gmra.mxu0 %v1256
    %v1567 = vpop.f32.mrf.mxu0
    %v1568 = vadd.f32 %v1096, %v1567
    %v1569 = vpop.f32.mrf.mxu0
    %v1570 = vadd.f32 %v1096, %v1569
    %1571 = vmatmul.bf16.gmra.mxu0 %v1259
    %v1572 = vpop.f32.mrf.mxu0
    %v1573 = vadd.f32 %v1096, %v1572
    %v1574 = vpop.f32.mrf.mxu0
    %v1575 = vadd.f32 %v1096, %v1574
    %1576 = vmatmul.bf16.gmra.mxu0 %v1262
    %v1577 = vpop.f32.mrf.mxu0
    %v1578 = vadd.f32 %v1096, %v1577
    %v1579 = vpop.f32.mrf.mxu0
    %v1580 = vadd.f32 %v1096, %v1579
    %1581 = vmatmul.bf16.gmra.mxu0 %v1265
    %v1582 = vpop.f32.mrf.mxu0
    %v1583 = vadd.f32 %v1096, %v1582
    %v1584 = vpop.f32.mrf.mxu0
    %v1585 = vadd.f32 %v1096, %v1584
    %1586 = vmatmul.bf16.gmra.mxu0 %v1268
    %v1587 = vpop.f32.mrf.mxu0
    %v1588 = vadd.f32 %v1096, %v1587
    %v1589 = vpop.f32.mrf.mxu0
    %v1590 = vadd.f32 %v1096, %v1589
    %1591 = vmatmul.bf16.gmra.mxu0 %v1271
    %v1592 = vpop.f32.mrf.mxu0
    %v1593 = vadd.f32 %v1096, %v1592
    %v1594 = vpop.f32.mrf.mxu0
    %v1595 = vadd.f32 %v1096, %v1594
    %1596 = vmatmul.bf16.gmra.mxu0 %v1274
    %v1597 = vpop.f32.mrf.mxu0
    %v1598 = vadd.f32 %v1096, %v1597
    %v1599 = vpop.f32.mrf.mxu0
    %v1600 = vadd.f32 %v1096, %v1599
    %1601 = vmatmul.bf16.gmra.mxu0 %v1277
    %v1602 = vpop.f32.mrf.mxu0
    %v1603 = vadd.f32 %v1096, %v1602
    %v1604 = vpop.f32.mrf.mxu0
    %v1605 = vadd.f32 %v1096, %v1604
    %1606 = vmatmul.bf16.gmra.mxu0 %v1280
    %v1607 = vpop.f32.mrf.mxu0
    %v1608 = vadd.f32 %v1096, %v1607
    %v1609 = vpop.f32.mrf.mxu0
    %v1610 = vadd.f32 %v1096, %v1609
    %1611 = vmatmul.bf16.gmra.mxu0 %v1283
    %v1612 = vpop.f32.mrf.mxu0
    %v1613 = vadd.f32 %v1096, %v1612
    %v1614 = vpop.f32.mrf.mxu0
    %v1615 = vadd.f32 %v1096, %v1614
    %1616 = vmatmul.bf16.gmra.mxu0 %v1286
    %v1617 = vpop.f32.mrf.mxu0
    %v1618 = vadd.f32 %v1096, %v1617
    %v1619 = vpop.f32.mrf.mxu0
    %v1620 = vadd.f32 %v1096, %v1619
    %1621 = vmatmul.bf16.gmra.mxu0 %v1289
    %v1622 = vpop.f32.mrf.mxu0
    %v1623 = vadd.f32 %v1096, %v1622
    %v1624 = vpop.f32.mrf.mxu0
    %v1625 = vadd.f32 %v1096, %v1624
    %1626 = vdwg.mxu0
    %v1627 = vmax.f32 %v1308, 0.0
    %v1628 = vmax.f32 %v1310, 0.0
    %v1629 = vmax.f32 %v1313, 0.0
    %v1630 = vmax.f32 %v1315, 0.0
    %v1631 = vmax.f32 %v1318, 0.0
    %v1632 = vmax.f32 %v1320, 0.0
    %v1633 = vmax.f32 %v1323, 0.0
    %v1634 = vmax.f32 %v1325, 0.0
    %v1635 = vmax.f32 %v1328, 0.0
    %v1636 = vmax.f32 %v1330, 0.0
    %v1637 = vmax.f32 %v1333, 0.0
    %v1638 = vmax.f32 %v1335, 0.0
    %v1639 = vmax.f32 %v1338, 0.0
    %v1640 = vmax.f32 %v1340, 0.0
    %v1641 = vmax.f32 %v1343, 0.0
    %v1642 = vmax.f32 %v1345, 0.0
    %v1643 = vmax.f32 %v1348, 0.0
    %v1644 = vmax.f32 %v1350, 0.0
    %v1645 = vmax.f32 %v1353, 0.0
    %v1646 = vmax.f32 %v1355, 0.0
    %v1647 = vmax.f32 %v1358, 0.0
    %v1648 = vmax.f32 %v1360, 0.0
    %v1649 = vmax.f32 %v1363, 0.0
    %v1650 = vmax.f32 %v1365, 0.0
    %v1651 = vmax.f32 %v1368, 0.0
    %v1652 = vmax.f32 %v1370, 0.0
    %v1653 = vmax.f32 %v1373, 0.0
    %v1654 = vmax.f32 %v1375, 0.0
    %v1655 = vmax.f32 %v1378, 0.0
    %v1656 = vmax.f32 %v1380, 0.0
    %v1657 = vmax.f32 %v1383, 0.0
    %v1658 = vmax.f32 %v1385, 0.0
    %v1659 = vmax.f32 %v1388, 0.0
    %v1660 = vmax.f32 %v1390, 0.0
    %v1661 = vmax.f32 %v1393, 0.0
    %v1662 = vmax.f32 %v1395, 0.0
    %v1663 = vmax.f32 %v1398, 0.0
    %v1664 = vmax.f32 %v1400, 0.0
    %v1665 = vmax.f32 %v1403, 0.0
    %v1666 = vmax.f32 %v1405, 0.0
    %v1667 = vmax.f32 %v1408, 0.0
    %v1668 = vmax.f32 %v1410, 0.0
    %v1669 = vmax.f32 %v1413, 0.0
    %v1670 = vmax.f32 %v1415, 0.0
    %v1671 = vmax.f32 %v1418, 0.0
    %v1672 = vmax.f32 %v1420, 0.0
    %v1673 = vmax.f32 %v1423, 0.0
    %v1674 = vmax.f32 %v1425, 0.0
    %v1675 = vmax.f32 %v1428, 0.0
    %v1676 = vmax.f32 %v1430, 0.0
    %v1677 = vmax.f32 %v1433, 0.0
    %v1678 = vmax.f32 %v1435, 0.0
    %v1679 = vmax.f32 %v1438, 0.0
    %v1680 = vmax.f32 %v1440, 0.0
    %v1681 = vmax.f32 %v1443, 0.0
    %v1682 = vmax.f32 %v1445, 0.0
    %v1683 = vmax.f32 %v1448, 0.0
    %v1684 = vmax.f32 %v1450, 0.0
    %v1685 = vmax.f32 %v1453, 0.0
    %v1686 = vmax.f32 %v1455, 0.0
    %v1687 = vmax.f32 %v1458, 0.0
    %v1688 = vmax.f32 %v1460, 0.0
    %v1689 = vmax.f32 %v1463, 0.0
    %v1690 = vmax.f32 %v1465, 0.0
    %v1691 = vmax.f32 %v1468, 0.0
    %v1692 = vmax.f32 %v1470, 0.0
    %v1693 = vmax.f32 %v1473, 0.0
    %v1694 = vmax.f32 %v1475, 0.0
    %v1695 = vmax.f32 %v1478, 0.0
    %v1696 = vmax.f32 %v1480, 0.0
    %v1697 = vmax.f32 %v1483, 0.0
    %v1698 = vmax.f32 %v1485, 0.0
    %v1699 = vmax.f32 %v1488, 0.0
    %v1700 = vmax.f32 %v1490, 0.0
    %v1701 = vmax.f32 %v1493, 0.0
    %v1702 = vmax.f32 %v1495, 0.0
    %v1703 = vmax.f32 %v1498, 0.0
    %v1704 = vmax.f32 %v1500, 0.0
    %v1705 = vmax.f32 %v1503, 0.0
    %v1706 = vmax.f32 %v1505, 0.0
    %v1707 = vmax.f32 %v1508, 0.0
    %v1708 = vmax.f32 %v1510, 0.0
    %v1709 = vmax.f32 %v1513, 0.0
    %v1710 = vmax.f32 %v1515, 0.0
    %v1711 = vmax.f32 %v1518, 0.0
    %v1712 = vmax.f32 %v1520, 0.0
    %v1713 = vmax.f32 %v1523, 0.0
    %v1714 = vmax.f32 %v1525, 0.0
    %v1715 = vmax.f32 %v1528, 0.0
    %v1716 = vmax.f32 %v1530, 0.0
    %v1717 = vmax.f32 %v1533, 0.0
    %v1718 = vmax.f32 %v1535, 0.0
    %v1719 = vmax.f32 %v1538, 0.0
    %v1720 = vmax.f32 %v1540, 0.0
    %v1721 = vmax.f32 %v1543, 0.0
    %v1722 = vmax.f32 %v1545, 0.0
    %v1723 = vmax.f32 %v1548, 0.0
    %v1724 = vmax.f32 %v1550, 0.0
    %v1725 = vmax.f32 %v1553, 0.0
    %v1726 = vmax.f32 %v1555, 0.0
    %v1727 = vmax.f32 %v1558, 0.0
    %v1728 = vmax.f32 %v1560, 0.0
    %v1729 = vmax.f32 %v1563, 0.0
    %v1730 = vmax.f32 %v1565, 0.0
    %v1731 = vmax.f32 %v1568, 0.0
    %v1732 = vmax.f32 %v1570, 0.0
    %v1733 = vmax.f32 %v1573, 0.0
    %v1734 = vmax.f32 %v1575, 0.0
    %v1735 = vmax.f32 %v1578, 0.0
    %v1736 = vmax.f32 %v1580, 0.0
    %v1737 = vmax.f32 %v1583, 0.0
    %v1738 = vmax.f32 %v1585, 0.0
    %v1739 = vmax.f32 %v1588, 0.0
    %v1740 = vmax.f32 %v1590, 0.0
    %v1741 = vmax.f32 %v1593, 0.0
    %v1742 = vmax.f32 %v1595, 0.0
    %v1743 = vmax.f32 %v1598, 0.0
    %v1744 = vmax.f32 %v1600, 0.0
    %v1745 = vmax.f32 %v1603, 0.0
    %v1746 = vmax.f32 %v1605, 0.0
    %v1747 = vmax.f32 %v1608, 0.0
    %v1748 = vmax.f32 %v1610, 0.0
    %v1749 = vmax.f32 %v1613, 0.0
    %v1750 = vmax.f32 %v1615, 0.0
    %v1751 = vmax.f32 %v1618, 0.0
    %v1752 = vmax.f32 %v1620, 0.0
    %v1753 = vmax.f32 %v1623, 0.0
    %v1754 = vmax.f32 %v1625, 0.0
    %v1755 = vpack.c.bf16 %v1628, %v1627
    %v1756 = vpack.c.bf16 %v1630, %v1629
    %v1757 = vpack.c.bf16 %v1632, %v1631
    %v1758 = vpack.c.bf16 %v1634, %v1633
    %v1759 = vpack.c.bf16 %v1636, %v1635
    %v1760 = vpack.c.bf16 %v1638, %v1637
    %v1761 = vpack.c.bf16 %v1640, %v1639
    %v1762 = vpack.c.bf16 %v1642, %v1641
    %v1763 = vpack.c.bf16 %v1644, %v1643
    %v1764 = vpack.c.bf16 %v1646, %v1645
    %v1765 = vpack.c.bf16 %v1648, %v1647
    %v1766 = vpack.c.bf16 %v1650, %v1649
    %v1767 = vpack.c.bf16 %v1652, %v1651
    %v1768 = vpack.c.bf16 %v1654, %v1653
    %v1769 = vpack.c.bf16 %v1656, %v1655
    %v1770 = vpack.c.bf16 %v1658, %v1657
    %v1771 = vpack.c.bf16 %v1660, %v1659
    %v1772 = vpack.c.bf16 %v1662, %v1661
    %v1773 = vpack.c.bf16 %v1664, %v1663
    %v1774 = vpack.c.bf16 %v1666, %v1665
    %v1775 = vpack.c.bf16 %v1668, %v1667
    %v1776 = vpack.c.bf16 %v1670, %v1669
    %v1777 = vpack.c.bf16 %v1672, %v1671
    %v1778 = vpack.c.bf16 %v1674, %v1673
    %v1779 = vpack.c.bf16 %v1676, %v1675
    %v1780 = vpack.c.bf16 %v1678, %v1677
    %v1781 = vpack.c.bf16 %v1680, %v1679
    %v1782 = vpack.c.bf16 %v1682, %v1681
    %v1783 = vpack.c.bf16 %v1684, %v1683
    %v1784 = vpack.c.bf16 %v1686, %v1685
    %v1785 = vpack.c.bf16 %v1688, %v1687
    %v1786 = vpack.c.bf16 %v1690, %v1689
    %v1787 = vpack.c.bf16 %v1692, %v1691
    %v1788 = vpack.c.bf16 %v1694, %v1693
    %v1789 = vpack.c.bf16 %v1696, %v1695
    %v1790 = vpack.c.bf16 %v1698, %v1697
    %v1791 = vpack.c.bf16 %v1700, %v1699
    %v1792 = vpack.c.bf16 %v1702, %v1701
    %v1793 = vpack.c.bf16 %v1704, %v1703
    %v1794 = vpack.c.bf16 %v1706, %v1705
    %v1795 = vpack.c.bf16 %v1708, %v1707
    %v1796 = vpack.c.bf16 %v1710, %v1709
    %v1797 = vpack.c.bf16 %v1712, %v1711
    %v1798 = vpack.c.bf16 %v1714, %v1713
    %v1799 = vpack.c.bf16 %v1716, %v1715
    %v1800 = vpack.c.bf16 %v1718, %v1717
    %v1801 = vpack.c.bf16 %v1720, %v1719
    %v1802 = vpack.c.bf16 %v1722, %v1721
    %v1803 = vpack.c.bf16 %v1724, %v1723
    %v1804 = vpack.c.bf16 %v1726, %v1725
    %v1805 = vpack.c.bf16 %v1728, %v1727
    %v1806 = vpack.c.bf16 %v1730, %v1729
    %v1807 = vpack.c.bf16 %v1732, %v1731
    %v1808 = vpack.c.bf16 %v1734, %v1733
    %v1809 = vpack.c.bf16 %v1736, %v1735
    %v1810 = vpack.c.bf16 %v1738, %v1737
    %v1811 = vpack.c.bf16 %v1740, %v1739
    %v1812 = vpack.c.bf16 %v1742, %v1741
    %v1813 = vpack.c.bf16 %v1744, %v1743
    %v1814 = vpack.c.bf16 %v1746, %v1745
    %v1815 = vpack.c.bf16 %v1748, %v1747
    %v1816 = vpack.c.bf16 %v1750, %v1749
    %v1817 = vpack.c.bf16 %v1752, %v1751
    %v1818 = vpack.c.bf16 %v1754, %v1753
    %v1819 = vld [vmem:[%s9] sm:$0xf]
    %v1820 = vld [vmem:[%s9 + $0x4] sm:$0xf]
    %v1821 = vld [vmem:[%s9 + $0x8] sm:$0xf]
    %v1822 = vld [vmem:[%s9 + $0xc] sm:$0xf]
    %v1823 = vld [vmem:[%s9 + $0x10] sm:$0xf]
    %v1824 = vld [vmem:[%s9 + $0x14] sm:$0xf]
    %v1825 = vld [vmem:[%s9 + $0x18] sm:$0xf]
    %v1826 = vld [vmem:[%s9 + $0x1c] sm:$0xf]
    %v1827 = vld [vmem:[%s10] sm:$0x1]
    %v1829 = vperm.slane %v1827, 0
    %v1839 = vunpack.c.l.b16 %v1819
    %v1840 = vunpack.c.l.b16 %v1820
    %v1841 = vunpack.c.l.b16 %v1821
    %v1842 = vunpack.c.l.b16 %v1822
    %v1843 = vunpack.c.l.b16 %v1823
    %v1844 = vunpack.c.l.b16 %v1824
    %v1845 = vunpack.c.l.b16 %v1825
    %v1846 = vunpack.c.l.b16 %v1826
    %v1847 = vpack.c.b16 %v1840, %v1839
    %v1848 = vpack.c.b16 %v1842, %v1841
    %v1849 = vpack.c.b16 %v1844, %v1843
    %v1850 = vpack.c.b16 %v1846, %v1845
    %vm1855 = vcmask 523264
    %v1857 = vsel %vm1855, %v1755, 0
    %v1860 = vsel %vm1855, %v1756, 0
    %v1863 = vsel %vm1855, %v1757, 0
    %v1866 = vsel %vm1855, %v1758, 0
    %v1869 = vsel %vm1855, %v1759, 0
    %v1872 = vsel %vm1855, %v1760, 0
    %v1875 = vsel %vm1855, %v1761, 0
    %v1878 = vsel %vm1855, %v1762, 0
    %v1881 = vsel %vm1855, %v1763, 0
    %v1884 = vsel %vm1855, %v1764, 0
    %v1887 = vsel %vm1855, %v1765, 0
    %v1890 = vsel %vm1855, %v1766, 0
    %v1893 = vsel %vm1855, %v1767, 0
    %v1896 = vsel %vm1855, %v1768, 0
    %v1899 = vsel %vm1855, %v1769, 0
    %v1902 = vsel %vm1855, %v1770, 0
    %v1905 = vsel %vm1855, %v1771, 0
    %v1908 = vsel %vm1855, %v1772, 0
    %v1911 = vsel %vm1855, %v1773, 0
    %v1914 = vsel %vm1855, %v1774, 0
    %v1917 = vsel %vm1855, %v1775, 0
    %v1920 = vsel %vm1855, %v1776, 0
    %v1923 = vsel %vm1855, %v1777, 0
    %v1926 = vsel %vm1855, %v1778, 0
    %v1929 = vsel %vm1855, %v1779, 0
    %v1932 = vsel %vm1855, %v1780, 0
    %v1935 = vsel %vm1855, %v1781, 0
    %v1938 = vsel %vm1855, %v1782, 0
    %v1941 = vsel %vm1855, %v1783, 0
    %v1944 = vsel %vm1855, %v1784, 0
    %v1947 = vsel %vm1855, %v1785, 0
    %v1950 = vsel %vm1855, %v1786, 0
    %v1953 = vsel %vm1855, %v1787, 0
    %v1956 = vsel %vm1855, %v1788, 0
    %v1959 = vsel %vm1855, %v1789, 0
    %v1962 = vsel %vm1855, %v1790, 0
    %v1965 = vsel %vm1855, %v1791, 0
    %v1968 = vsel %vm1855, %v1792, 0
    %v1971 = vsel %vm1855, %v1793, 0
    %v1974 = vsel %vm1855, %v1794, 0
    %v1977 = vsel %vm1855, %v1795, 0
    %v1980 = vsel %vm1855, %v1796, 0
    %v1983 = vsel %vm1855, %v1797, 0
    %v1986 = vsel %vm1855, %v1798, 0
    %v1989 = vsel %vm1855, %v1799, 0
    %v1992 = vsel %vm1855, %v1800, 0
    %v1995 = vsel %vm1855, %v1801, 0
    %v1998 = vsel %vm1855, %v1802, 0
    %v2001 = vsel %vm1855, %v1803, 0
    %v2004 = vsel %vm1855, %v1804, 0
    %v2007 = vsel %vm1855, %v1805, 0
    %v2010 = vsel %vm1855, %v1806, 0
    %v2013 = vsel %vm1855, %v1807, 0
    %v2016 = vsel %vm1855, %v1808, 0
    %v2019 = vsel %vm1855, %v1809, 0
    %v2022 = vsel %vm1855, %v1810, 0
    %v2025 = vsel %vm1855, %v1811, 0
    %v2028 = vsel %vm1855, %v1812, 0
    %v2031 = vsel %vm1855, %v1813, 0
    %v2034 = vsel %vm1855, %v1814, 0
    %v2037 = vsel %vm1855, %v1815, 0
    %v2040 = vsel %vm1855, %v1816, 0
    %v2043 = vsel %vm1855, %v1817, 0
    %v2046 = vsel %vm1855, %v1818, 0
    %2048 = vmatpush.bf16.msra.mxu0 0
    %2049 = vmatpush.bf16.msra.mxu0 0
    %2050 = vmatpush.bf16.msra.mxu0 0
    %2051 = vmatpush.bf16.msra.mxu0 0
    %2052 = vmatpush.bf16.msra.mxu0 %v1850
    %2053 = vmatpush.bf16.msra.mxu0 %v1849
    %2054 = vmatpush.bf16.msra.mxu0 %v1848
    %2055 = vmatpush.bf16.msra.mxu0 %v1847
    %2056 = vmatmul.bf16.gmra.mxu0 %v1857
    %v2057 = vpop.f32.mrf.mxu0
    %v2058 = vadd.f32 %v1829, %v2057
    %v2059 = vpop.f32.mrf.mxu0
    %v2060 = vadd.f32 %v1829, %v2059
    %2061 = vmatmul.bf16.gmra.mxu0 %v1860
    %v2062 = vpop.f32.mrf.mxu0
    %v2063 = vadd.f32 %v1829, %v2062
    %v2064 = vpop.f32.mrf.mxu0
    %v2065 = vadd.f32 %v1829, %v2064
    %2066 = vmatmul.bf16.gmra.mxu0 %v1863
    %v2067 = vpop.f32.mrf.mxu0
    %v2068 = vadd.f32 %v1829, %v2067
    %v2069 = vpop.f32.mrf.mxu0
    %v2070 = vadd.f32 %v1829, %v2069
    %2071 = vmatmul.bf16.gmra.mxu0 %v1866
    %v2072 = vpop.f32.mrf.mxu0
    %v2073 = vadd.f32 %v1829, %v2072
    %v2074 = vpop.f32.mrf.mxu0
    %v2075 = vadd.f32 %v1829, %v2074
    %2076 = vmatmul.bf16.gmra.mxu0 %v1869
    %v2077 = vpop.f32.mrf.mxu0
    %v2078 = vadd.f32 %v1829, %v2077
    %v2079 = vpop.f32.mrf.mxu0
    %v2080 = vadd.f32 %v1829, %v2079
    %2081 = vmatmul.bf16.gmra.mxu0 %v1872
    %v2082 = vpop.f32.mrf.mxu0
    %v2083 = vadd.f32 %v1829, %v2082
    %v2084 = vpop.f32.mrf.mxu0
    %v2085 = vadd.f32 %v1829, %v2084
    %2086 = vmatmul.bf16.gmra.mxu0 %v1875
    %v2087 = vpop.f32.mrf.mxu0
    %v2088 = vadd.f32 %v1829, %v2087
    %v2089 = vpop.f32.mrf.mxu0
    %v2090 = vadd.f32 %v1829, %v2089
    %2091 = vmatmul.bf16.gmra.mxu0 %v1878
    %v2092 = vpop.f32.mrf.mxu0
    %v2093 = vadd.f32 %v1829, %v2092
    %v2094 = vpop.f32.mrf.mxu0
    %v2095 = vadd.f32 %v1829, %v2094
    %2096 = vmatmul.bf16.gmra.mxu0 %v1881
    %v2097 = vpop.f32.mrf.mxu0
    %v2098 = vadd.f32 %v1829, %v2097
    %v2099 = vpop.f32.mrf.mxu0
    %v2100 = vadd.f32 %v1829, %v2099
    %2101 = vmatmul.bf16.gmra.mxu0 %v1884
    %v2102 = vpop.f32.mrf.mxu0
    %v2103 = vadd.f32 %v1829, %v2102
    %v2104 = vpop.f32.mrf.mxu0
    %v2105 = vadd.f32 %v1829, %v2104
    %2106 = vmatmul.bf16.gmra.mxu0 %v1887
    %v2107 = vpop.f32.mrf.mxu0
    %v2108 = vadd.f32 %v1829, %v2107
    %v2109 = vpop.f32.mrf.mxu0
    %v2110 = vadd.f32 %v1829, %v2109
    %2111 = vmatmul.bf16.gmra.mxu0 %v1890
    %v2112 = vpop.f32.mrf.mxu0
    %v2113 = vadd.f32 %v1829, %v2112
    %v2114 = vpop.f32.mrf.mxu0
    %v2115 = vadd.f32 %v1829, %v2114
    %2116 = vmatmul.bf16.gmra.mxu0 %v1893
    %v2117 = vpop.f32.mrf.mxu0
    %v2118 = vadd.f32 %v1829, %v2117
    %v2119 = vpop.f32.mrf.mxu0
    %v2120 = vadd.f32 %v1829, %v2119
    %2121 = vmatmul.bf16.gmra.mxu0 %v1896
    %v2122 = vpop.f32.mrf.mxu0
    %v2123 = vadd.f32 %v1829, %v2122
    %v2124 = vpop.f32.mrf.mxu0
    %v2125 = vadd.f32 %v1829, %v2124
    %2126 = vmatmul.bf16.gmra.mxu0 %v1899
    %v2127 = vpop.f32.mrf.mxu0
    %v2128 = vadd.f32 %v1829, %v2127
    %v2129 = vpop.f32.mrf.mxu0
    %v2130 = vadd.f32 %v1829, %v2129
    %2131 = vmatmul.bf16.gmra.mxu0 %v1902
    %v2132 = vpop.f32.mrf.mxu0
    %v2133 = vadd.f32 %v1829, %v2132
    %v2134 = vpop.f32.mrf.mxu0
    %v2135 = vadd.f32 %v1829, %v2134
    %2136 = vmatmul.bf16.gmra.mxu0 %v1905
    %v2137 = vpop.f32.mrf.mxu0
    %v2138 = vadd.f32 %v1829, %v2137
    %v2139 = vpop.f32.mrf.mxu0
    %v2140 = vadd.f32 %v1829, %v2139
    %2141 = vmatmul.bf16.gmra.mxu0 %v1908
    %v2142 = vpop.f32.mrf.mxu0
    %v2143 = vadd.f32 %v1829, %v2142
    %v2144 = vpop.f32.mrf.mxu0
    %v2145 = vadd.f32 %v1829, %v2144
    %2146 = vmatmul.bf16.gmra.mxu0 %v1911
    %v2147 = vpop.f32.mrf.mxu0
    %v2148 = vadd.f32 %v1829, %v2147
    %v2149 = vpop.f32.mrf.mxu0
    %v2150 = vadd.f32 %v1829, %v2149
    %2151 = vmatmul.bf16.gmra.mxu0 %v1914
    %v2152 = vpop.f32.mrf.mxu0
    %v2153 = vadd.f32 %v1829, %v2152
    %v2154 = vpop.f32.mrf.mxu0
    %v2155 = vadd.f32 %v1829, %v2154
    %2156 = vmatmul.bf16.gmra.mxu0 %v1917
    %v2157 = vpop.f32.mrf.mxu0
    %v2158 = vadd.f32 %v1829, %v2157
    %v2159 = vpop.f32.mrf.mxu0
    %v2160 = vadd.f32 %v1829, %v2159
    %2161 = vmatmul.bf16.gmra.mxu0 %v1920
    %v2162 = vpop.f32.mrf.mxu0
    %v2163 = vadd.f32 %v1829, %v2162
    %v2164 = vpop.f32.mrf.mxu0
    %v2165 = vadd.f32 %v1829, %v2164
    %2166 = vmatmul.bf16.gmra.mxu0 %v1923
    %v2167 = vpop.f32.mrf.mxu0
    %v2168 = vadd.f32 %v1829, %v2167
    %v2169 = vpop.f32.mrf.mxu0
    %v2170 = vadd.f32 %v1829, %v2169
    %2171 = vmatmul.bf16.gmra.mxu0 %v1926
    %v2172 = vpop.f32.mrf.mxu0
    %v2173 = vadd.f32 %v1829, %v2172
    %v2174 = vpop.f32.mrf.mxu0
    %v2175 = vadd.f32 %v1829, %v2174
    %2176 = vmatmul.bf16.gmra.mxu0 %v1929
    %v2177 = vpop.f32.mrf.mxu0
    %v2178 = vadd.f32 %v1829, %v2177
    %v2179 = vpop.f32.mrf.mxu0
    %v2180 = vadd.f32 %v1829, %v2179
    %2181 = vmatmul.bf16.gmra.mxu0 %v1932
    %v2182 = vpop.f32.mrf.mxu0
    %v2183 = vadd.f32 %v1829, %v2182
    %v2184 = vpop.f32.mrf.mxu0
    %v2185 = vadd.f32 %v1829, %v2184
    %2186 = vmatmul.bf16.gmra.mxu0 %v1935
    %v2187 = vpop.f32.mrf.mxu0
    %v2188 = vadd.f32 %v1829, %v2187
    %v2189 = vpop.f32.mrf.mxu0
    %v2190 = vadd.f32 %v1829, %v2189
    %2191 = vmatmul.bf16.gmra.mxu0 %v1938
    %v2192 = vpop.f32.mrf.mxu0
    %v2193 = vadd.f32 %v1829, %v2192
    %v2194 = vpop.f32.mrf.mxu0
    %v2195 = vadd.f32 %v1829, %v2194
    %2196 = vmatmul.bf16.gmra.mxu0 %v1941
    %v2197 = vpop.f32.mrf.mxu0
    %v2198 = vadd.f32 %v1829, %v2197
    %v2199 = vpop.f32.mrf.mxu0
    %v2200 = vadd.f32 %v1829, %v2199
    %2201 = vmatmul.bf16.gmra.mxu0 %v1944
    %v2202 = vpop.f32.mrf.mxu0
    %v2203 = vadd.f32 %v1829, %v2202
    %v2204 = vpop.f32.mrf.mxu0
    %v2205 = vadd.f32 %v1829, %v2204
    %2206 = vmatmul.bf16.gmra.mxu0 %v1947
    %v2207 = vpop.f32.mrf.mxu0
    %v2208 = vadd.f32 %v1829, %v2207
    %v2209 = vpop.f32.mrf.mxu0
    %v2210 = vadd.f32 %v1829, %v2209
    %2211 = vmatmul.bf16.gmra.mxu0 %v1950
    %v2212 = vpop.f32.mrf.mxu0
    %v2213 = vadd.f32 %v1829, %v2212
    %v2214 = vpop.f32.mrf.mxu0
    %v2215 = vadd.f32 %v1829, %v2214
    %2216 = vmatmul.bf16.gmra.mxu0 %v1953
    %v2217 = vpop.f32.mrf.mxu0
    %v2218 = vadd.f32 %v1829, %v2217
    %v2219 = vpop.f32.mrf.mxu0
    %v2220 = vadd.f32 %v1829, %v2219
    %2221 = vmatmul.bf16.gmra.mxu0 %v1956
    %v2222 = vpop.f32.mrf.mxu0
    %v2223 = vadd.f32 %v1829, %v2222
    %v2224 = vpop.f32.mrf.mxu0
    %v2225 = vadd.f32 %v1829, %v2224
    %2226 = vmatmul.bf16.gmra.mxu0 %v1959
    %v2227 = vpop.f32.mrf.mxu0
    %v2228 = vadd.f32 %v1829, %v2227
    %v2229 = vpop.f32.mrf.mxu0
    %v2230 = vadd.f32 %v1829, %v2229
    %2231 = vmatmul.bf16.gmra.mxu0 %v1962
    %v2232 = vpop.f32.mrf.mxu0
    %v2233 = vadd.f32 %v1829, %v2232
    %v2234 = vpop.f32.mrf.mxu0
    %v2235 = vadd.f32 %v1829, %v2234
    %2236 = vmatmul.bf16.gmra.mxu0 %v1965
    %v2237 = vpop.f32.mrf.mxu0
    %v2238 = vadd.f32 %v1829, %v2237
    %v2239 = vpop.f32.mrf.mxu0
    %v2240 = vadd.f32 %v1829, %v2239
    %2241 = vmatmul.bf16.gmra.mxu0 %v1968
    %v2242 = vpop.f32.mrf.mxu0
    %v2243 = vadd.f32 %v1829, %v2242
    %v2244 = vpop.f32.mrf.mxu0
    %v2245 = vadd.f32 %v1829, %v2244
    %2246 = vmatmul.bf16.gmra.mxu0 %v1971
    %v2247 = vpop.f32.mrf.mxu0
    %v2248 = vadd.f32 %v1829, %v2247
    %v2249 = vpop.f32.mrf.mxu0
    %v2250 = vadd.f32 %v1829, %v2249
    %2251 = vmatmul.bf16.gmra.mxu0 %v1974
    %v2252 = vpop.f32.mrf.mxu0
    %v2253 = vadd.f32 %v1829, %v2252
    %v2254 = vpop.f32.mrf.mxu0
    %v2255 = vadd.f32 %v1829, %v2254
    %2256 = vmatmul.bf16.gmra.mxu0 %v1977
    %v2257 = vpop.f32.mrf.mxu0
    %v2258 = vadd.f32 %v1829, %v2257
    %v2259 = vpop.f32.mrf.mxu0
    %v2260 = vadd.f32 %v1829, %v2259
    %2261 = vmatmul.bf16.gmra.mxu0 %v1980
    %v2262 = vpop.f32.mrf.mxu0
    %v2263 = vadd.f32 %v1829, %v2262
    %v2264 = vpop.f32.mrf.mxu0
    %v2265 = vadd.f32 %v1829, %v2264
    %2266 = vmatmul.bf16.gmra.mxu0 %v1983
    %v2267 = vpop.f32.mrf.mxu0
    %v2268 = vadd.f32 %v1829, %v2267
    %v2269 = vpop.f32.mrf.mxu0
    %v2270 = vadd.f32 %v1829, %v2269
    %2271 = vmatmul.bf16.gmra.mxu0 %v1986
    %v2272 = vpop.f32.mrf.mxu0
    %v2273 = vadd.f32 %v1829, %v2272
    %v2274 = vpop.f32.mrf.mxu0
    %v2275 = vadd.f32 %v1829, %v2274
    %2276 = vmatmul.bf16.gmra.mxu0 %v1989
    %v2277 = vpop.f32.mrf.mxu0
    %v2278 = vadd.f32 %v1829, %v2277
    %v2279 = vpop.f32.mrf.mxu0
    %v2280 = vadd.f32 %v1829, %v2279
    %2281 = vmatmul.bf16.gmra.mxu0 %v1992
    %v2282 = vpop.f32.mrf.mxu0
    %v2283 = vadd.f32 %v1829, %v2282
    %v2284 = vpop.f32.mrf.mxu0
    %v2285 = vadd.f32 %v1829, %v2284
    %2286 = vmatmul.bf16.gmra.mxu0 %v1995
    %v2287 = vpop.f32.mrf.mxu0
    %v2288 = vadd.f32 %v1829, %v2287
    %v2289 = vpop.f32.mrf.mxu0
    %v2290 = vadd.f32 %v1829, %v2289
    %2291 = vmatmul.bf16.gmra.mxu0 %v1998
    %v2292 = vpop.f32.mrf.mxu0
    %v2293 = vadd.f32 %v1829, %v2292
    %v2294 = vpop.f32.mrf.mxu0
    %v2295 = vadd.f32 %v1829, %v2294
    %2296 = vmatmul.bf16.gmra.mxu0 %v2001
    %v2297 = vpop.f32.mrf.mxu0
    %v2298 = vadd.f32 %v1829, %v2297
    %v2299 = vpop.f32.mrf.mxu0
    %v2300 = vadd.f32 %v1829, %v2299
    %2301 = vmatmul.bf16.gmra.mxu0 %v2004
    %v2302 = vpop.f32.mrf.mxu0
    %v2303 = vadd.f32 %v1829, %v2302
    %v2304 = vpop.f32.mrf.mxu0
    %v2305 = vadd.f32 %v1829, %v2304
    %2306 = vmatmul.bf16.gmra.mxu0 %v2007
    %v2307 = vpop.f32.mrf.mxu0
    %v2308 = vadd.f32 %v1829, %v2307
    %v2309 = vpop.f32.mrf.mxu0
    %v2310 = vadd.f32 %v1829, %v2309
    %2311 = vmatmul.bf16.gmra.mxu0 %v2010
    %v2312 = vpop.f32.mrf.mxu0
    %v2313 = vadd.f32 %v1829, %v2312
    %v2314 = vpop.f32.mrf.mxu0
    %v2315 = vadd.f32 %v1829, %v2314
    %2316 = vmatmul.bf16.gmra.mxu0 %v2013
    %v2317 = vpop.f32.mrf.mxu0
    %v2318 = vadd.f32 %v1829, %v2317
    %v2319 = vpop.f32.mrf.mxu0
    %v2320 = vadd.f32 %v1829, %v2319
    %2321 = vmatmul.bf16.gmra.mxu0 %v2016
    %v2322 = vpop.f32.mrf.mxu0
    %v2323 = vadd.f32 %v1829, %v2322
    %v2324 = vpop.f32.mrf.mxu0
    %v2325 = vadd.f32 %v1829, %v2324
    %2326 = vmatmul.bf16.gmra.mxu0 %v2019
    %v2327 = vpop.f32.mrf.mxu0
    %v2328 = vadd.f32 %v1829, %v2327
    %v2329 = vpop.f32.mrf.mxu0
    %v2330 = vadd.f32 %v1829, %v2329
    %2331 = vmatmul.bf16.gmra.mxu0 %v2022
    %v2332 = vpop.f32.mrf.mxu0
    %v2333 = vadd.f32 %v1829, %v2332
    %v2334 = vpop.f32.mrf.mxu0
    %v2335 = vadd.f32 %v1829, %v2334
    %2336 = vmatmul.bf16.gmra.mxu0 %v2025
    %v2337 = vpop.f32.mrf.mxu0
    %v2338 = vadd.f32 %v1829, %v2337
    %v2339 = vpop.f32.mrf.mxu0
    %v2340 = vadd.f32 %v1829, %v2339
    %2341 = vmatmul.bf16.gmra.mxu0 %v2028
    %v2342 = vpop.f32.mrf.mxu0
    %v2343 = vadd.f32 %v1829, %v2342
    %v2344 = vpop.f32.mrf.mxu0
    %v2345 = vadd.f32 %v1829, %v2344
    %2346 = vmatmul.bf16.gmra.mxu0 %v2031
    %v2347 = vpop.f32.mrf.mxu0
    %v2348 = vadd.f32 %v1829, %v2347
    %v2349 = vpop.f32.mrf.mxu0
    %v2350 = vadd.f32 %v1829, %v2349
    %2351 = vmatmul.bf16.gmra.mxu0 %v2034
    %v2352 = vpop.f32.mrf.mxu0
    %v2353 = vadd.f32 %v1829, %v2352
    %v2354 = vpop.f32.mrf.mxu0
    %v2355 = vadd.f32 %v1829, %v2354
    %2356 = vmatmul.bf16.gmra.mxu0 %v2037
    %v2357 = vpop.f32.mrf.mxu0
    %v2358 = vadd.f32 %v1829, %v2357
    %v2359 = vpop.f32.mrf.mxu0
    %v2360 = vadd.f32 %v1829, %v2359
    %2361 = vmatmul.bf16.gmra.mxu0 %v2040
    %v2362 = vpop.f32.mrf.mxu0
    %v2363 = vadd.f32 %v1829, %v2362
    %v2364 = vpop.f32.mrf.mxu0
    %v2365 = vadd.f32 %v1829, %v2364
    %2366 = vmatmul.bf16.gmra.mxu0 %v2043
    %v2367 = vpop.f32.mrf.mxu0
    %v2368 = vadd.f32 %v1829, %v2367
    %v2369 = vpop.f32.mrf.mxu0
    %v2370 = vadd.f32 %v1829, %v2369
    %2371 = vmatmul.bf16.gmra.mxu0 %v2046
    %v2372 = vpop.f32.mrf.mxu0
    %v2373 = vadd.f32 %v1829, %v2372
    %v2374 = vpop.f32.mrf.mxu0
    %v2375 = vadd.f32 %v1829, %v2374
    %2376 = vdwg.mxu0
    %v2377 = vmax.f32 %v2058, %v2060
    %v2378 = vmax.f32 %v2377, %v2063
    %v2379 = vmax.f32 %v2378, %v2065
    %v2380 = vmax.f32 %v2379, %v2068
    %v2381 = vmax.f32 %v2380, %v2070
    %v2382 = vmax.f32 %v2381, %v2073
    %v2383 = vmax.f32 %v2382, %v2075
    %v2384 = vmax.f32 %v2383, %v2078
    %v2385 = vmax.f32 %v2384, %v2080
    %v2386 = vmax.f32 %v2385, %v2083
    %v2387 = vmax.f32 %v2386, %v2085
    %v2388 = vmax.f32 %v2387, %v2088
    %v2389 = vmax.f32 %v2388, %v2090
    %v2390 = vmax.f32 %v2389, %v2093
    %v2391 = vmax.f32 %v2390, %v2095
    %v2392 = vrot.slane %v2391, 4
    %v2393 = vmax.f32 %v2391, %v2392
    %v2394 = vrot.slane %v2393, 2
    %v2395 = vmax.f32 %v2393, %v2394
    %v2396 = vrot.slane %v2395, 1
    %v2397 = vmax.f32 %v2395, %v2396
    %v2398 = vmax.f32 %v2098, %v2100
    %v2399 = vmax.f32 %v2398, %v2103
    %v2400 = vmax.f32 %v2399, %v2105
    %v2401 = vmax.f32 %v2400, %v2108
    %v2402 = vmax.f32 %v2401, %v2110
    %v2403 = vmax.f32 %v2402, %v2113
    %v2404 = vmax.f32 %v2403, %v2115
    %v2405 = vmax.f32 %v2404, %v2118
    %v2406 = vmax.f32 %v2405, %v2120
    %v2407 = vmax.f32 %v2406, %v2123
    %v2408 = vmax.f32 %v2407, %v2125
    %v2409 = vmax.f32 %v2408, %v2128
    %v2410 = vmax.f32 %v2409, %v2130
    %v2411 = vmax.f32 %v2410, %v2133
    %v2412 = vmax.f32 %v2411, %v2135
    %v2413 = vrot.slane %v2412, 4
    %v2414 = vmax.f32 %v2412, %v2413
    %v2415 = vrot.slane %v2414, 2
    %v2416 = vmax.f32 %v2414, %v2415
    %v2417 = vrot.slane %v2416, 1
    %v2418 = vmax.f32 %v2416, %v2417
    %v2419 = vmax.f32 %v2138, %v2140
    %v2420 = vmax.f32 %v2419, %v2143
    %v2421 = vmax.f32 %v2420, %v2145
    %v2422 = vmax.f32 %v2421, %v2148
    %v2423 = vmax.f32 %v2422, %v2150
    %v2424 = vmax.f32 %v2423, %v2153
    %v2425 = vmax.f32 %v2424, %v2155
    %v2426 = vmax.f32 %v2425, %v2158
    %v2427 = vmax.f32 %v2426, %v2160
    %v2428 = vmax.f32 %v2427, %v2163
    %v2429 = vmax.f32 %v2428, %v2165
    %v2430 = vmax.f32 %v2429, %v2168
    %v2431 = vmax.f32 %v2430, %v2170
    %v2432 = vmax.f32 %v2431, %v2173
    %v2433 = vmax.f32 %v2432, %v2175
    %v2434 = vrot.slane %v2433, 4
    %v2435 = vmax.f32 %v2433, %v2434
    %v2436 = vrot.slane %v2435, 2
    %v2437 = vmax.f32 %v2435, %v2436
    %v2438 = vrot.slane %v2437, 1
    %v2439 = vmax.f32 %v2437, %v2438
    %v2440 = vmax.f32 %v2178, %v2180
    %v2441 = vmax.f32 %v2440, %v2183
    %v2442 = vmax.f32 %v2441, %v2185
    %v2443 = vmax.f32 %v2442, %v2188
    %v2444 = vmax.f32 %v2443, %v2190
    %v2445 = vmax.f32 %v2444, %v2193
    %v2446 = vmax.f32 %v2445, %v2195
    %v2447 = vmax.f32 %v2446, %v2198
    %v2448 = vmax.f32 %v2447, %v2200
    %v2449 = vmax.f32 %v2448, %v2203
    %v2450 = vmax.f32 %v2449, %v2205
    %v2451 = vmax.f32 %v2450, %v2208
    %v2452 = vmax.f32 %v2451, %v2210
    %v2453 = vmax.f32 %v2452, %v2213
    %v2454 = vmax.f32 %v2453, %v2215
    %v2455 = vrot.slane %v2454, 4
    %v2456 = vmax.f32 %v2454, %v2455
    %v2457 = vrot.slane %v2456, 2
    %v2458 = vmax.f32 %v2456, %v2457
    %v2459 = vrot.slane %v2458, 1
    %v2460 = vmax.f32 %v2458, %v2459
    %v2461 = vmax.f32 %v2218, %v2220
    %v2462 = vmax.f32 %v2461, %v2223
    %v2463 = vmax.f32 %v2462, %v2225
    %v2464 = vmax.f32 %v2463, %v2228
    %v2465 = vmax.f32 %v2464, %v2230
    %v2466 = vmax.f32 %v2465, %v2233
    %v2467 = vmax.f32 %v2466, %v2235
    %v2468 = vmax.f32 %v2467, %v2238
    %v2469 = vmax.f32 %v2468, %v2240
    %v2470 = vmax.f32 %v2469, %v2243
    %v2471 = vmax.f32 %v2470, %v2245
    %v2472 = vmax.f32 %v2471, %v2248
    %v2473 = vmax.f32 %v2472, %v2250
    %v2474 = vmax.f32 %v2473, %v2253
    %v2475 = vmax.f32 %v2474, %v2255
    %v2476 = vrot.slane %v2475, 4
    %v2477 = vmax.f32 %v2475, %v2476
    %v2478 = vrot.slane %v2477, 2
    %v2479 = vmax.f32 %v2477, %v2478
    %v2480 = vrot.slane %v2479, 1
    %v2481 = vmax.f32 %v2479, %v2480
    %v2482 = vmax.f32 %v2258, %v2260
    %v2483 = vmax.f32 %v2482, %v2263
    %v2484 = vmax.f32 %v2483, %v2265
    %v2485 = vmax.f32 %v2484, %v2268
    %v2486 = vmax.f32 %v2485, %v2270
    %v2487 = vmax.f32 %v2486, %v2273
    %v2488 = vmax.f32 %v2487, %v2275
    %v2489 = vmax.f32 %v2488, %v2278
    %v2490 = vmax.f32 %v2489, %v2280
    %v2491 = vmax.f32 %v2490, %v2283
    %v2492 = vmax.f32 %v2491, %v2285
    %v2493 = vmax.f32 %v2492, %v2288
    %v2494 = vmax.f32 %v2493, %v2290
    %v2495 = vmax.f32 %v2494, %v2293
    %v2496 = vmax.f32 %v2495, %v2295
    %v2497 = vrot.slane %v2496, 4
    %v2498 = vmax.f32 %v2496, %v2497
    %v2499 = vrot.slane %v2498, 2
    %v2500 = vmax.f32 %v2498, %v2499
    %v2501 = vrot.slane %v2500, 1
    %v2502 = vmax.f32 %v2500, %v2501
    %v2503 = vmax.f32 %v2298, %v2300
    %v2504 = vmax.f32 %v2503, %v2303
    %v2505 = vmax.f32 %v2504, %v2305
    %v2506 = vmax.f32 %v2505, %v2308
    %v2507 = vmax.f32 %v2506, %v2310
    %v2508 = vmax.f32 %v2507, %v2313
    %v2509 = vmax.f32 %v2508, %v2315
    %v2510 = vmax.f32 %v2509, %v2318
    %v2511 = vmax.f32 %v2510, %v2320
    %v2512 = vmax.f32 %v2511, %v2323
    %v2513 = vmax.f32 %v2512, %v2325
    %v2514 = vmax.f32 %v2513, %v2328
    %v2515 = vmax.f32 %v2514, %v2330
    %v2516 = vmax.f32 %v2515, %v2333
    %v2517 = vmax.f32 %v2516, %v2335
    %v2518 = vrot.slane %v2517, 4
    %v2519 = vmax.f32 %v2517, %v2518
    %v2520 = vrot.slane %v2519, 2
    %v2521 = vmax.f32 %v2519, %v2520
    %v2522 = vrot.slane %v2521, 1
    %v2523 = vmax.f32 %v2521, %v2522
    %v2524 = vmax.f32 %v2338, %v2340
    %v2525 = vmax.f32 %v2524, %v2343
    %v2526 = vmax.f32 %v2525, %v2345
    %v2527 = vmax.f32 %v2526, %v2348
    %v2528 = vmax.f32 %v2527, %v2350
    %v2529 = vmax.f32 %v2528, %v2353
    %v2530 = vmax.f32 %v2529, %v2355
    %v2531 = vmax.f32 %v2530, %v2358
    %v2532 = vmax.f32 %v2531, %v2360
    %v2533 = vmax.f32 %v2532, %v2363
    %v2534 = vmax.f32 %v2533, %v2365
    %v2535 = vmax.f32 %v2534, %v2368
    %v2536 = vmax.f32 %v2535, %v2370
    %v2537 = vmax.f32 %v2536, %v2373
    %v2538 = vmax.f32 %v2537, %v2375
    %v2539 = vrot.slane %v2538, 4
    %v2540 = vmax.f32 %v2538, %v2539
    %v2541 = vrot.slane %v2540, 2
    %v2542 = vmax.f32 %v2540, %v2541
    %v2543 = vrot.slane %v2542, 1
    %v2544 = vmax.f32 %v2542, %v2543
    %v2545 = vld [vmem:[%s2] sm:$0xff]
    %v2546 = vld [vmem:[%s2 + $0x8] sm:$0xff]
    %v2547 = vld [vmem:[%s2 + $0x10] sm:$0xff]
    %v2548 = vld [vmem:[%s2 + $0x18] sm:$0xff]
    %v2549 = vld [vmem:[%s2 + $0x20] sm:$0xff]
    %v2550 = vld [vmem:[%s2 + $0x28] sm:$0xff]
    %v2551 = vld [vmem:[%s2 + $0x30] sm:$0xff]
    %v2552 = vld [vmem:[%s2 + $0x38] sm:$0xff]
    %v2553 = vld [vmem:[%s2 + $0x40] sm:$0xff]
    %v2554 = vld [vmem:[%s2 + $0x48] sm:$0xff]
    %v2555 = vld [vmem:[%s2 + $0x50] sm:$0xff]
    %v2556 = vld [vmem:[%s2 + $0x58] sm:$0xff]
    %v2557 = vld [vmem:[%s2 + $0x60] sm:$0xff]
    %v2558 = vld [vmem:[%s2 + $0x68] sm:$0xff]
    %v2559 = vld [vmem:[%s2 + $0x70] sm:$0xff]
    %v2560 = vld [vmem:[%s2 + $0x78] sm:$0xff]
    %v2561 = vld [vmem:[%s2 + $0x80] sm:$0xff]
    %v2562 = vld [vmem:[%s2 + $0x88] sm:$0xff]
    %v2563 = vld [vmem:[%s2 + $0x90] sm:$0xff]
    %v2564 = vld [vmem:[%s2 + $0x98] sm:$0xff]
    %v2565 = vld [vmem:[%s2 + $0xa0] sm:$0xff]
    %v2566 = vld [vmem:[%s2 + $0xa8] sm:$0xff]
    %v2567 = vld [vmem:[%s2 + $0xb0] sm:$0xff]
    %v2568 = vld [vmem:[%s2 + $0xb8] sm:$0xff]
    %v2569 = vld [vmem:[%s2 + $0xc0] sm:$0xff]
    %v2570 = vld [vmem:[%s2 + $0xc8] sm:$0xff]
    %v2571 = vld [vmem:[%s2 + $0xd0] sm:$0xff]
    %v2572 = vld [vmem:[%s2 + $0xd8] sm:$0xff]
    %v2573 = vld [vmem:[%s2 + $0xe0] sm:$0xff]
    %v2574 = vld [vmem:[%s2 + $0xe8] sm:$0xff]
    %v2575 = vld [vmem:[%s2 + $0xf0] sm:$0xff]
    %v2576 = vld [vmem:[%s2 + $0xf8] sm:$0xff]
    %v2577 = vld [vmem:[%s2 + $0x100] sm:$0xff]
    %v2578 = vld [vmem:[%s2 + $0x108] sm:$0xff]
    %v2579 = vld [vmem:[%s2 + $0x110] sm:$0xff]
    %v2580 = vld [vmem:[%s2 + $0x118] sm:$0xff]
    %v2581 = vld [vmem:[%s2 + $0x120] sm:$0xff]
    %v2582 = vld [vmem:[%s2 + $0x128] sm:$0xff]
    %v2583 = vld [vmem:[%s2 + $0x130] sm:$0xff]
    %v2584 = vld [vmem:[%s2 + $0x138] sm:$0xff]
    %v2585 = vld [vmem:[%s2 + $0x140] sm:$0xff]
    %v2586 = vld [vmem:[%s2 + $0x148] sm:$0xff]
    %v2587 = vld [vmem:[%s2 + $0x150] sm:$0xff]
    %v2588 = vld [vmem:[%s2 + $0x158] sm:$0xff]
    %v2589 = vld [vmem:[%s2 + $0x160] sm:$0xff]
    %v2590 = vld [vmem:[%s2 + $0x168] sm:$0xff]
    %v2591 = vld [vmem:[%s2 + $0x170] sm:$0xff]
    %v2592 = vld [vmem:[%s2 + $0x178] sm:$0xff]
    %v2593 = vld [vmem:[%s2 + $0x180] sm:$0xff]
    %v2594 = vld [vmem:[%s2 + $0x188] sm:$0xff]
    %v2595 = vld [vmem:[%s2 + $0x190] sm:$0xff]
    %v2596 = vld [vmem:[%s2 + $0x198] sm:$0xff]
    %v2597 = vld [vmem:[%s2 + $0x1a0] sm:$0xff]
    %v2598 = vld [vmem:[%s2 + $0x1a8] sm:$0xff]
    %v2599 = vld [vmem:[%s2 + $0x1b0] sm:$0xff]
    %v2600 = vld [vmem:[%s2 + $0x1b8] sm:$0xff]
    %v2601 = vld [vmem:[%s2 + $0x1c0] sm:$0xff]
    %v2602 = vld [vmem:[%s2 + $0x1c8] sm:$0xff]
    %v2603 = vld [vmem:[%s2 + $0x1d0] sm:$0xff]
    %v2604 = vld [vmem:[%s2 + $0x1d8] sm:$0xff]
    %v2605 = vld [vmem:[%s2 + $0x1e0] sm:$0xff]
    %v2606 = vld [vmem:[%s2 + $0x1e8] sm:$0xff]
    %v2607 = vld [vmem:[%s2 + $0x1f0] sm:$0xff]
    %v2608 = vld [vmem:[%s2 + $0x1f8] sm:$0xff]
    %v2609 = vld [vmem:[%s2 + $0x200] sm:$0xff]
    %v2610 = vld [vmem:[%s2 + $0x208] sm:$0xff]
    %v2611 = vld [vmem:[%s2 + $0x210] sm:$0xff]
    %v2612 = vld [vmem:[%s2 + $0x218] sm:$0xff]
    %v2613 = vld [vmem:[%s2 + $0x220] sm:$0xff]
    %v2614 = vld [vmem:[%s2 + $0x228] sm:$0xff]
    %v2615 = vld [vmem:[%s2 + $0x230] sm:$0xff]
    %v2616 = vld [vmem:[%s2 + $0x238] sm:$0xff]
    %v2617 = vld [vmem:[%s2 + $0x240] sm:$0xff]
    %v2618 = vld [vmem:[%s2 + $0x248] sm:$0xff]
    %v2619 = vld [vmem:[%s2 + $0x250] sm:$0xff]
    %v2620 = vld [vmem:[%s2 + $0x258] sm:$0xff]
    %v2621 = vld [vmem:[%s2 + $0x260] sm:$0xff]
    %v2622 = vld [vmem:[%s2 + $0x268] sm:$0xff]
    %v2623 = vld [vmem:[%s2 + $0x270] sm:$0xff]
    %v2624 = vld [vmem:[%s2 + $0x278] sm:$0xff]
    %v2625 = vld [vmem:[%s2 + $0x280] sm:$0xff]
    %v2626 = vld [vmem:[%s2 + $0x288] sm:$0xff]
    %v2627 = vld [vmem:[%s2 + $0x290] sm:$0xff]
    %v2628 = vld [vmem:[%s2 + $0x298] sm:$0xff]
    %v2629 = vld [vmem:[%s2 + $0x2a0] sm:$0xff]
    %v2630 = vld [vmem:[%s2 + $0x2a8] sm:$0xff]
    %v2631 = vld [vmem:[%s2 + $0x2b0] sm:$0xff]
    %v2632 = vld [vmem:[%s2 + $0x2b8] sm:$0xff]
    %v2633 = vld [vmem:[%s2 + $0x2c0] sm:$0xff]
    %v2634 = vld [vmem:[%s2 + $0x2c8] sm:$0xff]
    %v2635 = vld [vmem:[%s2 + $0x2d0] sm:$0xff]
    %v2636 = vld [vmem:[%s2 + $0x2d8] sm:$0xff]
    %v2637 = vld [vmem:[%s2 + $0x2e0] sm:$0xff]
    %v2638 = vld [vmem:[%s2 + $0x2e8] sm:$0xff]
    %v2639 = vld [vmem:[%s2 + $0x2f0] sm:$0xff]
    %v2640 = vld [vmem:[%s2 + $0x2f8] sm:$0xff]
    %v2641 = vld [vmem:[%s2 + $0x300] sm:$0xff]
    %v2642 = vld [vmem:[%s2 + $0x308] sm:$0xff]
    %v2643 = vld [vmem:[%s2 + $0x310] sm:$0xff]
    %v2644 = vld [vmem:[%s2 + $0x318] sm:$0xff]
    %v2645 = vld [vmem:[%s2 + $0x320] sm:$0xff]
    %v2646 = vld [vmem:[%s2 + $0x328] sm:$0xff]
    %v2647 = vld [vmem:[%s2 + $0x330] sm:$0xff]
    %v2648 = vld [vmem:[%s2 + $0x338] sm:$0xff]
    %v2649 = vld [vmem:[%s2 + $0x340] sm:$0xff]
    %v2650 = vld [vmem:[%s2 + $0x348] sm:$0xff]
    %v2651 = vld [vmem:[%s2 + $0x350] sm:$0xff]
    %v2652 = vld [vmem:[%s2 + $0x358] sm:$0xff]
    %v2653 = vld [vmem:[%s2 + $0x360] sm:$0xff]
    %v2654 = vld [vmem:[%s2 + $0x368] sm:$0xff]
    %v2655 = vld [vmem:[%s2 + $0x370] sm:$0xff]
    %v2656 = vld [vmem:[%s2 + $0x378] sm:$0xff]
    %v2657 = vld [vmem:[%s2 + $0x380] sm:$0xff]
    %v2658 = vld [vmem:[%s2 + $0x388] sm:$0xff]
    %v2659 = vld [vmem:[%s2 + $0x390] sm:$0xff]
    %v2660 = vld [vmem:[%s2 + $0x398] sm:$0xff]
    %v2661 = vld [vmem:[%s2 + $0x3a0] sm:$0xff]
    %v2662 = vld [vmem:[%s2 + $0x3a8] sm:$0xff]
    %v2663 = vld [vmem:[%s2 + $0x3b0] sm:$0xff]
    %v2664 = vld [vmem:[%s2 + $0x3b8] sm:$0xff]
    %v2665 = vld [vmem:[%s2 + $0x3c0] sm:$0xff]
    %v2666 = vld [vmem:[%s2 + $0x3c8] sm:$0xff]
    %v2667 = vld [vmem:[%s2 + $0x3d0] sm:$0xff]
    %v2668 = vld [vmem:[%s2 + $0x3d8] sm:$0xff]
    %v2669 = vld [vmem:[%s2 + $0x3e0] sm:$0xff]
    %v2670 = vld [vmem:[%s2 + $0x3e8] sm:$0xff]
    %v2671 = vld [vmem:[%s2 + $0x3f0] sm:$0xff]
    %v2672 = vld [vmem:[%s2 + $0x3f8] sm:$0xff]
    %v2673 = vpack.c.bf16 %v2546, %v2545
    %v2674 = vpack.c.bf16 %v2548, %v2547
    %v2675 = vpack.c.bf16 %v2550, %v2549
    %v2676 = vpack.c.bf16 %v2552, %v2551
    %v2677 = vpack.c.bf16 %v2554, %v2553
    %v2678 = vpack.c.bf16 %v2556, %v2555
    %v2679 = vpack.c.bf16 %v2558, %v2557
    %v2680 = vpack.c.bf16 %v2560, %v2559
    %v2681 = vpack.c.bf16 %v2562, %v2561
    %v2682 = vpack.c.bf16 %v2564, %v2563
    %v2683 = vpack.c.bf16 %v2566, %v2565
    %v2684 = vpack.c.bf16 %v2568, %v2567
    %v2685 = vpack.c.bf16 %v2570, %v2569
    %v2686 = vpack.c.bf16 %v2572, %v2571
    %v2687 = vpack.c.bf16 %v2574, %v2573
    %v2688 = vpack.c.bf16 %v2576, %v2575
    %v2689 = vpack.c.bf16 %v2578, %v2577
    %v2690 = vpack.c.bf16 %v2580, %v2579
    %v2691 = vpack.c.bf16 %v2582, %v2581
    %v2692 = vpack.c.bf16 %v2584, %v2583
    %v2693 = vpack.c.bf16 %v2586, %v2585
    %v2694 = vpack.c.bf16 %v2588, %v2587
    %v2695 = vpack.c.bf16 %v2590, %v2589
    %v2696 = vpack.c.bf16 %v2592, %v2591
    %v2697 = vpack.c.bf16 %v2594, %v2593
    %v2698 = vpack.c.bf16 %v2596, %v2595
    %v2699 = vpack.c.bf16 %v2598, %v2597
    %v2700 = vpack.c.bf16 %v2600, %v2599
    %v2701 = vpack.c.bf16 %v2602, %v2601
    %v2702 = vpack.c.bf16 %v2604, %v2603
    %v2703 = vpack.c.bf16 %v2606, %v2605
    %v2704 = vpack.c.bf16 %v2608, %v2607
    %v2705 = vpack.c.bf16 %v2610, %v2609
    %v2706 = vpack.c.bf16 %v2612, %v2611
    %v2707 = vpack.c.bf16 %v2614, %v2613
    %v2708 = vpack.c.bf16 %v2616, %v2615
    %v2709 = vpack.c.bf16 %v2618, %v2617
    %v2710 = vpack.c.bf16 %v2620, %v2619
    %v2711 = vpack.c.bf16 %v2622, %v2621
    %v2712 = vpack.c.bf16 %v2624, %v2623
    %v2713 = vpack.c.bf16 %v2626, %v2625
    %v2714 = vpack.c.bf16 %v2628, %v2627
    %v2715 = vpack.c.bf16 %v2630, %v2629
    %v2716 = vpack.c.bf16 %v2632, %v2631
    %v2717 = vpack.c.bf16 %v2634, %v2633
    %v2718 = vpack.c.bf16 %v2636, %v2635
    %v2719 = vpack.c.bf16 %v2638, %v2637
    %v2720 = vpack.c.bf16 %v2640, %v2639
    %v2721 = vpack.c.bf16 %v2642, %v2641
    %v2722 = vpack.c.bf16 %v2644, %v2643
    %v2723 = vpack.c.bf16 %v2646, %v2645
    %v2724 = vpack.c.bf16 %v2648, %v2647
    %v2725 = vpack.c.bf16 %v2650, %v2649
    %v2726 = vpack.c.bf16 %v2652, %v2651
    %v2727 = vpack.c.bf16 %v2654, %v2653
    %v2728 = vpack.c.bf16 %v2656, %v2655
    %v2729 = vpack.c.bf16 %v2658, %v2657
    %v2730 = vpack.c.bf16 %v2660, %v2659
    %v2731 = vpack.c.bf16 %v2662, %v2661
    %v2732 = vpack.c.bf16 %v2664, %v2663
    %v2733 = vpack.c.bf16 %v2666, %v2665
    %v2734 = vpack.c.bf16 %v2668, %v2667
    %v2735 = vpack.c.bf16 %v2670, %v2669
    %v2736 = vpack.c.bf16 %v2672, %v2671
    %v2738 = vsel %vm1098, %v2673, 0
    %v2741 = vsel %vm1098, %v2674, 0
    %v2744 = vsel %vm1098, %v2675, 0
    %v2747 = vsel %vm1098, %v2676, 0
    %v2750 = vsel %vm1098, %v2677, 0
    %v2753 = vsel %vm1098, %v2678, 0
    %v2756 = vsel %vm1098, %v2679, 0
    %v2759 = vsel %vm1098, %v2680, 0
    %v2762 = vsel %vm1098, %v2681, 0
    %v2765 = vsel %vm1098, %v2682, 0
    %v2768 = vsel %vm1098, %v2683, 0
    %v2771 = vsel %vm1098, %v2684, 0
    %v2774 = vsel %vm1098, %v2685, 0
    %v2777 = vsel %vm1098, %v2686, 0
    %v2780 = vsel %vm1098, %v2687, 0
    %v2783 = vsel %vm1098, %v2688, 0
    %v2786 = vsel %vm1098, %v2689, 0
    %v2789 = vsel %vm1098, %v2690, 0
    %v2792 = vsel %vm1098, %v2691, 0
    %v2795 = vsel %vm1098, %v2692, 0
    %v2798 = vsel %vm1098, %v2693, 0
    %v2801 = vsel %vm1098, %v2694, 0
    %v2804 = vsel %vm1098, %v2695, 0
    %v2807 = vsel %vm1098, %v2696, 0
    %v2810 = vsel %vm1098, %v2697, 0
    %v2813 = vsel %vm1098, %v2698, 0
    %v2816 = vsel %vm1098, %v2699, 0
    %v2819 = vsel %vm1098, %v2700, 0
    %v2822 = vsel %vm1098, %v2701, 0
    %v2825 = vsel %vm1098, %v2702, 0
    %v2828 = vsel %vm1098, %v2703, 0
    %v2831 = vsel %vm1098, %v2704, 0
    %v2834 = vsel %vm1098, %v2705, 0
    %v2837 = vsel %vm1098, %v2706, 0
    %v2840 = vsel %vm1098, %v2707, 0
    %v2843 = vsel %vm1098, %v2708, 0
    %v2846 = vsel %vm1098, %v2709, 0
    %v2849 = vsel %vm1098, %v2710, 0
    %v2852 = vsel %vm1098, %v2711, 0
    %v2855 = vsel %vm1098, %v2712, 0
    %v2858 = vsel %vm1098, %v2713, 0
    %v2861 = vsel %vm1098, %v2714, 0
    %v2864 = vsel %vm1098, %v2715, 0
    %v2867 = vsel %vm1098, %v2716, 0
    %v2870 = vsel %vm1098, %v2717, 0
    %v2873 = vsel %vm1098, %v2718, 0
    %v2876 = vsel %vm1098, %v2719, 0
    %v2879 = vsel %vm1098, %v2720, 0
    %v2882 = vsel %vm1098, %v2721, 0
    %v2885 = vsel %vm1098, %v2722, 0
    %v2888 = vsel %vm1098, %v2723, 0
    %v2891 = vsel %vm1098, %v2724, 0
    %v2894 = vsel %vm1098, %v2725, 0
    %v2897 = vsel %vm1098, %v2726, 0
    %v2900 = vsel %vm1098, %v2727, 0
    %v2903 = vsel %vm1098, %v2728, 0
    %v2906 = vsel %vm1098, %v2729, 0
    %v2909 = vsel %vm1098, %v2730, 0
    %v2912 = vsel %vm1098, %v2731, 0
    %v2915 = vsel %vm1098, %v2732, 0
    %v2918 = vsel %vm1098, %v2733, 0
    %v2921 = vsel %vm1098, %v2734, 0
    %v2924 = vsel %vm1098, %v2735, 0
    %v2927 = vsel %vm1098, %v2736, 0
    %2929 = vmatpush.bf16.msra.mxu0 0
    %2930 = vmatpush.bf16.msra.mxu0 0
    %2931 = vmatpush.bf16.msra.mxu0 0
    %2932 = vmatpush.bf16.msra.mxu0 0
    %2933 = vmatpush.bf16.msra.mxu0 0
    %2934 = vmatpush.bf16.msra.mxu0 0
    %2935 = vmatpush.bf16.msra.mxu0 0
    %2936 = vmatpush.bf16.msra.mxu0 %v1296
    %2937 = vmatmul.bf16.gmra.mxu0 %v2738
    %v2938 = vpop.f32.mrf.mxu0
    %v2939 = vadd.f32 %v1096, %v2938
    %v2940 = vpop.f32.mrf.mxu0
    %v2941 = vadd.f32 %v1096, %v2940
    %2942 = vmatmul.bf16.gmra.mxu0 %v2741
    %v2943 = vpop.f32.mrf.mxu0
    %v2944 = vadd.f32 %v1096, %v2943
    %v2945 = vpop.f32.mrf.mxu0
    %v2946 = vadd.f32 %v1096, %v2945
    %2947 = vmatmul.bf16.gmra.mxu0 %v2744
    %v2948 = vpop.f32.mrf.mxu0
    %v2949 = vadd.f32 %v1096, %v2948
    %v2950 = vpop.f32.mrf.mxu0
    %v2951 = vadd.f32 %v1096, %v2950
    %2952 = vmatmul.bf16.gmra.mxu0 %v2747
    %v2953 = vpop.f32.mrf.mxu0
    %v2954 = vadd.f32 %v1096, %v2953
    %v2955 = vpop.f32.mrf.mxu0
    %v2956 = vadd.f32 %v1096, %v2955
    %2957 = vmatmul.bf16.gmra.mxu0 %v2750
    %v2958 = vpop.f32.mrf.mxu0
    %v2959 = vadd.f32 %v1096, %v2958
    %v2960 = vpop.f32.mrf.mxu0
    %v2961 = vadd.f32 %v1096, %v2960
    %2962 = vmatmul.bf16.gmra.mxu0 %v2753
    %v2963 = vpop.f32.mrf.mxu0
    %v2964 = vadd.f32 %v1096, %v2963
    %v2965 = vpop.f32.mrf.mxu0
    %v2966 = vadd.f32 %v1096, %v2965
    %2967 = vmatmul.bf16.gmra.mxu0 %v2756
    %v2968 = vpop.f32.mrf.mxu0
    %v2969 = vadd.f32 %v1096, %v2968
    %v2970 = vpop.f32.mrf.mxu0
    %v2971 = vadd.f32 %v1096, %v2970
    %2972 = vmatmul.bf16.gmra.mxu0 %v2759
    %v2973 = vpop.f32.mrf.mxu0
    %v2974 = vadd.f32 %v1096, %v2973
    %v2975 = vpop.f32.mrf.mxu0
    %v2976 = vadd.f32 %v1096, %v2975
    %2977 = vmatmul.bf16.gmra.mxu0 %v2762
    %v2978 = vpop.f32.mrf.mxu0
    %v2979 = vadd.f32 %v1096, %v2978
    %v2980 = vpop.f32.mrf.mxu0
    %v2981 = vadd.f32 %v1096, %v2980
    %2982 = vmatmul.bf16.gmra.mxu0 %v2765
    %v2983 = vpop.f32.mrf.mxu0
    %v2984 = vadd.f32 %v1096, %v2983
    %v2985 = vpop.f32.mrf.mxu0
    %v2986 = vadd.f32 %v1096, %v2985
    %2987 = vmatmul.bf16.gmra.mxu0 %v2768
    %v2988 = vpop.f32.mrf.mxu0
    %v2989 = vadd.f32 %v1096, %v2988
    %v2990 = vpop.f32.mrf.mxu0
    %v2991 = vadd.f32 %v1096, %v2990
    %2992 = vmatmul.bf16.gmra.mxu0 %v2771
    %v2993 = vpop.f32.mrf.mxu0
    %v2994 = vadd.f32 %v1096, %v2993
    %v2995 = vpop.f32.mrf.mxu0
    %v2996 = vadd.f32 %v1096, %v2995
    %2997 = vmatmul.bf16.gmra.mxu0 %v2774
    %v2998 = vpop.f32.mrf.mxu0
    %v2999 = vadd.f32 %v1096, %v2998
    %v3000 = vpop.f32.mrf.mxu0
    %v3001 = vadd.f32 %v1096, %v3000
    %3002 = vmatmul.bf16.gmra.mxu0 %v2777
    %v3003 = vpop.f32.mrf.mxu0
    %v3004 = vadd.f32 %v1096, %v3003
    %v3005 = vpop.f32.mrf.mxu0
    %v3006 = vadd.f32 %v1096, %v3005
    %3007 = vmatmul.bf16.gmra.mxu0 %v2780
    %v3008 = vpop.f32.mrf.mxu0
    %v3009 = vadd.f32 %v1096, %v3008
    %v3010 = vpop.f32.mrf.mxu0
    %v3011 = vadd.f32 %v1096, %v3010
    %3012 = vmatmul.bf16.gmra.mxu0 %v2783
    %v3013 = vpop.f32.mrf.mxu0
    %v3014 = vadd.f32 %v1096, %v3013
    %v3015 = vpop.f32.mrf.mxu0
    %v3016 = vadd.f32 %v1096, %v3015
    %3017 = vmatmul.bf16.gmra.mxu0 %v2786
    %v3018 = vpop.f32.mrf.mxu0
    %v3019 = vadd.f32 %v1096, %v3018
    %v3020 = vpop.f32.mrf.mxu0
    %v3021 = vadd.f32 %v1096, %v3020
    %3022 = vmatmul.bf16.gmra.mxu0 %v2789
    %v3023 = vpop.f32.mrf.mxu0
    %v3024 = vadd.f32 %v1096, %v3023
    %v3025 = vpop.f32.mrf.mxu0
    %v3026 = vadd.f32 %v1096, %v3025
    %3027 = vmatmul.bf16.gmra.mxu0 %v2792
    %v3028 = vpop.f32.mrf.mxu0
    %v3029 = vadd.f32 %v1096, %v3028
    %v3030 = vpop.f32.mrf.mxu0
    %v3031 = vadd.f32 %v1096, %v3030
    %3032 = vmatmul.bf16.gmra.mxu0 %v2795
    %v3033 = vpop.f32.mrf.mxu0
    %v3034 = vadd.f32 %v1096, %v3033
    %v3035 = vpop.f32.mrf.mxu0
    %v3036 = vadd.f32 %v1096, %v3035
    %3037 = vmatmul.bf16.gmra.mxu0 %v2798
    %v3038 = vpop.f32.mrf.mxu0
    %v3039 = vadd.f32 %v1096, %v3038
    %v3040 = vpop.f32.mrf.mxu0
    %v3041 = vadd.f32 %v1096, %v3040
    %3042 = vmatmul.bf16.gmra.mxu0 %v2801
    %v3043 = vpop.f32.mrf.mxu0
    %v3044 = vadd.f32 %v1096, %v3043
    %v3045 = vpop.f32.mrf.mxu0
    %v3046 = vadd.f32 %v1096, %v3045
    %3047 = vmatmul.bf16.gmra.mxu0 %v2804
    %v3048 = vpop.f32.mrf.mxu0
    %v3049 = vadd.f32 %v1096, %v3048
    %v3050 = vpop.f32.mrf.mxu0
    %v3051 = vadd.f32 %v1096, %v3050
    %3052 = vmatmul.bf16.gmra.mxu0 %v2807
    %v3053 = vpop.f32.mrf.mxu0
    %v3054 = vadd.f32 %v1096, %v3053
    %v3055 = vpop.f32.mrf.mxu0
    %v3056 = vadd.f32 %v1096, %v3055
    %3057 = vmatmul.bf16.gmra.mxu0 %v2810
    %v3058 = vpop.f32.mrf.mxu0
    %v3059 = vadd.f32 %v1096, %v3058
    %v3060 = vpop.f32.mrf.mxu0
    %v3061 = vadd.f32 %v1096, %v3060
    %3062 = vmatmul.bf16.gmra.mxu0 %v2813
    %v3063 = vpop.f32.mrf.mxu0
    %v3064 = vadd.f32 %v1096, %v3063
    %v3065 = vpop.f32.mrf.mxu0
    %v3066 = vadd.f32 %v1096, %v3065
    %3067 = vmatmul.bf16.gmra.mxu0 %v2816
    %v3068 = vpop.f32.mrf.mxu0
    %v3069 = vadd.f32 %v1096, %v3068
    %v3070 = vpop.f32.mrf.mxu0
    %v3071 = vadd.f32 %v1096, %v3070
    %3072 = vmatmul.bf16.gmra.mxu0 %v2819
    %v3073 = vpop.f32.mrf.mxu0
    %v3074 = vadd.f32 %v1096, %v3073
    %v3075 = vpop.f32.mrf.mxu0
    %v3076 = vadd.f32 %v1096, %v3075
    %3077 = vmatmul.bf16.gmra.mxu0 %v2822
    %v3078 = vpop.f32.mrf.mxu0
    %v3079 = vadd.f32 %v1096, %v3078
    %v3080 = vpop.f32.mrf.mxu0
    %v3081 = vadd.f32 %v1096, %v3080
    %3082 = vmatmul.bf16.gmra.mxu0 %v2825
    %v3083 = vpop.f32.mrf.mxu0
    %v3084 = vadd.f32 %v1096, %v3083
    %v3085 = vpop.f32.mrf.mxu0
    %v3086 = vadd.f32 %v1096, %v3085
    %3087 = vmatmul.bf16.gmra.mxu0 %v2828
    %v3088 = vpop.f32.mrf.mxu0
    %v3089 = vadd.f32 %v1096, %v3088
    %v3090 = vpop.f32.mrf.mxu0
    %v3091 = vadd.f32 %v1096, %v3090
    %3092 = vmatmul.bf16.gmra.mxu0 %v2831
    %v3093 = vpop.f32.mrf.mxu0
    %v3094 = vadd.f32 %v1096, %v3093
    %v3095 = vpop.f32.mrf.mxu0
    %v3096 = vadd.f32 %v1096, %v3095
    %3097 = vmatmul.bf16.gmra.mxu0 %v2834
    %v3098 = vpop.f32.mrf.mxu0
    %v3099 = vadd.f32 %v1096, %v3098
    %v3100 = vpop.f32.mrf.mxu0
    %v3101 = vadd.f32 %v1096, %v3100
    %3102 = vmatmul.bf16.gmra.mxu0 %v2837
    %v3103 = vpop.f32.mrf.mxu0
    %v3104 = vadd.f32 %v1096, %v3103
    %v3105 = vpop.f32.mrf.mxu0
    %v3106 = vadd.f32 %v1096, %v3105
    %3107 = vmatmul.bf16.gmra.mxu0 %v2840
    %v3108 = vpop.f32.mrf.mxu0
    %v3109 = vadd.f32 %v1096, %v3108
    %v3110 = vpop.f32.mrf.mxu0
    %v3111 = vadd.f32 %v1096, %v3110
    %3112 = vmatmul.bf16.gmra.mxu0 %v2843
    %v3113 = vpop.f32.mrf.mxu0
    %v3114 = vadd.f32 %v1096, %v3113
    %v3115 = vpop.f32.mrf.mxu0
    %v3116 = vadd.f32 %v1096, %v3115
    %3117 = vmatmul.bf16.gmra.mxu0 %v2846
    %v3118 = vpop.f32.mrf.mxu0
    %v3119 = vadd.f32 %v1096, %v3118
    %v3120 = vpop.f32.mrf.mxu0
    %v3121 = vadd.f32 %v1096, %v3120
    %3122 = vmatmul.bf16.gmra.mxu0 %v2849
    %v3123 = vpop.f32.mrf.mxu0
    %v3124 = vadd.f32 %v1096, %v3123
    %v3125 = vpop.f32.mrf.mxu0
    %v3126 = vadd.f32 %v1096, %v3125
    %3127 = vmatmul.bf16.gmra.mxu0 %v2852
    %v3128 = vpop.f32.mrf.mxu0
    %v3129 = vadd.f32 %v1096, %v3128
    %v3130 = vpop.f32.mrf.mxu0
    %v3131 = vadd.f32 %v1096, %v3130
    %3132 = vmatmul.bf16.gmra.mxu0 %v2855
    %v3133 = vpop.f32.mrf.mxu0
    %v3134 = vadd.f32 %v1096, %v3133
    %v3135 = vpop.f32.mrf.mxu0
    %v3136 = vadd.f32 %v1096, %v3135
    %3137 = vmatmul.bf16.gmra.mxu0 %v2858
    %v3138 = vpop.f32.mrf.mxu0
    %v3139 = vadd.f32 %v1096, %v3138
    %v3140 = vpop.f32.mrf.mxu0
    %v3141 = vadd.f32 %v1096, %v3140
    %3142 = vmatmul.bf16.gmra.mxu0 %v2861
    %v3143 = vpop.f32.mrf.mxu0
    %v3144 = vadd.f32 %v1096, %v3143
    %v3145 = vpop.f32.mrf.mxu0
    %v3146 = vadd.f32 %v1096, %v3145
    %3147 = vmatmul.bf16.gmra.mxu0 %v2864
    %v3148 = vpop.f32.mrf.mxu0
    %v3149 = vadd.f32 %v1096, %v3148
    %v3150 = vpop.f32.mrf.mxu0
    %v3151 = vadd.f32 %v1096, %v3150
    %3152 = vmatmul.bf16.gmra.mxu0 %v2867
    %v3153 = vpop.f32.mrf.mxu0
    %v3154 = vadd.f32 %v1096, %v3153
    %v3155 = vpop.f32.mrf.mxu0
    %v3156 = vadd.f32 %v1096, %v3155
    %3157 = vmatmul.bf16.gmra.mxu0 %v2870
    %v3158 = vpop.f32.mrf.mxu0
    %v3159 = vadd.f32 %v1096, %v3158
    %v3160 = vpop.f32.mrf.mxu0
    %v3161 = vadd.f32 %v1096, %v3160
    %3162 = vmatmul.bf16.gmra.mxu0 %v2873
    %v3163 = vpop.f32.mrf.mxu0
    %v3164 = vadd.f32 %v1096, %v3163
    %v3165 = vpop.f32.mrf.mxu0
    %v3166 = vadd.f32 %v1096, %v3165
    %3167 = vmatmul.bf16.gmra.mxu0 %v2876
    %v3168 = vpop.f32.mrf.mxu0
    %v3169 = vadd.f32 %v1096, %v3168
    %v3170 = vpop.f32.mrf.mxu0
    %v3171 = vadd.f32 %v1096, %v3170
    %3172 = vmatmul.bf16.gmra.mxu0 %v2879
    %v3173 = vpop.f32.mrf.mxu0
    %v3174 = vadd.f32 %v1096, %v3173
    %v3175 = vpop.f32.mrf.mxu0
    %v3176 = vadd.f32 %v1096, %v3175
    %3177 = vmatmul.bf16.gmra.mxu0 %v2882
    %v3178 = vpop.f32.mrf.mxu0
    %v3179 = vadd.f32 %v1096, %v3178
    %v3180 = vpop.f32.mrf.mxu0
    %v3181 = vadd.f32 %v1096, %v3180
    %3182 = vmatmul.bf16.gmra.mxu0 %v2885
    %v3183 = vpop.f32.mrf.mxu0
    %v3184 = vadd.f32 %v1096, %v3183
    %v3185 = vpop.f32.mrf.mxu0
    %v3186 = vadd.f32 %v1096, %v3185
    %3187 = vmatmul.bf16.gmra.mxu0 %v2888
    %v3188 = vpop.f32.mrf.mxu0
    %v3189 = vadd.f32 %v1096, %v3188
    %v3190 = vpop.f32.mrf.mxu0
    %v3191 = vadd.f32 %v1096, %v3190
    %3192 = vmatmul.bf16.gmra.mxu0 %v2891
    %v3193 = vpop.f32.mrf.mxu0
    %v3194 = vadd.f32 %v1096, %v3193
    %v3195 = vpop.f32.mrf.mxu0
    %v3196 = vadd.f32 %v1096, %v3195
    %3197 = vmatmul.bf16.gmra.mxu0 %v2894
    %v3198 = vpop.f32.mrf.mxu0
    %v3199 = vadd.f32 %v1096, %v3198
    %v3200 = vpop.f32.mrf.mxu0
    %v3201 = vadd.f32 %v1096, %v3200
    %3202 = vmatmul.bf16.gmra.mxu0 %v2897
    %v3203 = vpop.f32.mrf.mxu0
    %v3204 = vadd.f32 %v1096, %v3203
    %v3205 = vpop.f32.mrf.mxu0
    %v3206 = vadd.f32 %v1096, %v3205
    %3207 = vmatmul.bf16.gmra.mxu0 %v2900
    %v3208 = vpop.f32.mrf.mxu0
    %v3209 = vadd.f32 %v1096, %v3208
    %v3210 = vpop.f32.mrf.mxu0
    %v3211 = vadd.f32 %v1096, %v3210
    %3212 = vmatmul.bf16.gmra.mxu0 %v2903
    %v3213 = vpop.f32.mrf.mxu0
    %v3214 = vadd.f32 %v1096, %v3213
    %v3215 = vpop.f32.mrf.mxu0
    %v3216 = vadd.f32 %v1096, %v3215
    %3217 = vmatmul.bf16.gmra.mxu0 %v2906
    %v3218 = vpop.f32.mrf.mxu0
    %v3219 = vadd.f32 %v1096, %v3218
    %v3220 = vpop.f32.mrf.mxu0
    %v3221 = vadd.f32 %v1096, %v3220
    %3222 = vmatmul.bf16.gmra.mxu0 %v2909
    %v3223 = vpop.f32.mrf.mxu0
    %v3224 = vadd.f32 %v1096, %v3223
    %v3225 = vpop.f32.mrf.mxu0
    %v3226 = vadd.f32 %v1096, %v3225
    %3227 = vmatmul.bf16.gmra.mxu0 %v2912
    %v3228 = vpop.f32.mrf.mxu0
    %v3229 = vadd.f32 %v1096, %v3228
    %v3230 = vpop.f32.mrf.mxu0
    %v3231 = vadd.f32 %v1096, %v3230
    %3232 = vmatmul.bf16.gmra.mxu0 %v2915
    %v3233 = vpop.f32.mrf.mxu0
    %v3234 = vadd.f32 %v1096, %v3233
    %v3235 = vpop.f32.mrf.mxu0
    %v3236 = vadd.f32 %v1096, %v3235
    %3237 = vmatmul.bf16.gmra.mxu0 %v2918
    %v3238 = vpop.f32.mrf.mxu0
    %v3239 = vadd.f32 %v1096, %v3238
    %v3240 = vpop.f32.mrf.mxu0
    %v3241 = vadd.f32 %v1096, %v3240
    %3242 = vmatmul.bf16.gmra.mxu0 %v2921
    %v3243 = vpop.f32.mrf.mxu0
    %v3244 = vadd.f32 %v1096, %v3243
    %v3245 = vpop.f32.mrf.mxu0
    %v3246 = vadd.f32 %v1096, %v3245
    %3247 = vmatmul.bf16.gmra.mxu0 %v2924
    %v3248 = vpop.f32.mrf.mxu0
    %v3249 = vadd.f32 %v1096, %v3248
    %v3250 = vpop.f32.mrf.mxu0
    %v3251 = vadd.f32 %v1096, %v3250
    %3252 = vmatmul.bf16.gmra.mxu0 %v2927
    %v3253 = vpop.f32.mrf.mxu0
    %v3254 = vadd.f32 %v1096, %v3253
    %v3255 = vpop.f32.mrf.mxu0
    %v3256 = vadd.f32 %v1096, %v3255
    %3257 = vdwg.mxu0
    %v3258 = vmax.f32 %v2939, 0.0
    %v3259 = vmax.f32 %v2941, 0.0
    %v3260 = vmax.f32 %v2944, 0.0
    %v3261 = vmax.f32 %v2946, 0.0
    %v3262 = vmax.f32 %v2949, 0.0
    %v3263 = vmax.f32 %v2951, 0.0
    %v3264 = vmax.f32 %v2954, 0.0
    %v3265 = vmax.f32 %v2956, 0.0
    %v3266 = vmax.f32 %v2959, 0.0
    %v3267 = vmax.f32 %v2961, 0.0
    %v3268 = vmax.f32 %v2964, 0.0
    %v3269 = vmax.f32 %v2966, 0.0
    %v3270 = vmax.f32 %v2969, 0.0
    %v3271 = vmax.f32 %v2971, 0.0
    %v3272 = vmax.f32 %v2974, 0.0
    %v3273 = vmax.f32 %v2976, 0.0
    %v3274 = vmax.f32 %v2979, 0.0
    %v3275 = vmax.f32 %v2981, 0.0
    %v3276 = vmax.f32 %v2984, 0.0
    %v3277 = vmax.f32 %v2986, 0.0
    %v3278 = vmax.f32 %v2989, 0.0
    %v3279 = vmax.f32 %v2991, 0.0
    %v3280 = vmax.f32 %v2994, 0.0
    %v3281 = vmax.f32 %v2996, 0.0
    %v3282 = vmax.f32 %v2999, 0.0
    %v3283 = vmax.f32 %v3001, 0.0
    %v3284 = vmax.f32 %v3004, 0.0
    %v3285 = vmax.f32 %v3006, 0.0
    %v3286 = vmax.f32 %v3009, 0.0
    %v3287 = vmax.f32 %v3011, 0.0
    %v3288 = vmax.f32 %v3014, 0.0
    %v3289 = vmax.f32 %v3016, 0.0
    %v3290 = vmax.f32 %v3019, 0.0
    %v3291 = vmax.f32 %v3021, 0.0
    %v3292 = vmax.f32 %v3024, 0.0
    %v3293 = vmax.f32 %v3026, 0.0
    %v3294 = vmax.f32 %v3029, 0.0
    %v3295 = vmax.f32 %v3031, 0.0
    %v3296 = vmax.f32 %v3034, 0.0
    %v3297 = vmax.f32 %v3036, 0.0
    %v3298 = vmax.f32 %v3039, 0.0
    %v3299 = vmax.f32 %v3041, 0.0
    %v3300 = vmax.f32 %v3044, 0.0
    %v3301 = vmax.f32 %v3046, 0.0
    %v3302 = vmax.f32 %v3049, 0.0
    %v3303 = vmax.f32 %v3051, 0.0
    %v3304 = vmax.f32 %v3054, 0.0
    %v3305 = vmax.f32 %v3056, 0.0
    %v3306 = vmax.f32 %v3059, 0.0
    %v3307 = vmax.f32 %v3061, 0.0
    %v3308 = vmax.f32 %v3064, 0.0
    %v3309 = vmax.f32 %v3066, 0.0
    %v3310 = vmax.f32 %v3069, 0.0
    %v3311 = vmax.f32 %v3071, 0.0
    %v3312 = vmax.f32 %v3074, 0.0
    %v3313 = vmax.f32 %v3076, 0.0
    %v3314 = vmax.f32 %v3079, 0.0
    %v3315 = vmax.f32 %v3081, 0.0
    %v3316 = vmax.f32 %v3084, 0.0
    %v3317 = vmax.f32 %v3086, 0.0
    %v3318 = vmax.f32 %v3089, 0.0
    %v3319 = vmax.f32 %v3091, 0.0
    %v3320 = vmax.f32 %v3094, 0.0
    %v3321 = vmax.f32 %v3096, 0.0
    %v3322 = vmax.f32 %v3099, 0.0
    %v3323 = vmax.f32 %v3101, 0.0
    %v3324 = vmax.f32 %v3104, 0.0
    %v3325 = vmax.f32 %v3106, 0.0
    %v3326 = vmax.f32 %v3109, 0.0
    %v3327 = vmax.f32 %v3111, 0.0
    %v3328 = vmax.f32 %v3114, 0.0
    %v3329 = vmax.f32 %v3116, 0.0
    %v3330 = vmax.f32 %v3119, 0.0
    %v3331 = vmax.f32 %v3121, 0.0
    %v3332 = vmax.f32 %v3124, 0.0
    %v3333 = vmax.f32 %v3126, 0.0
    %v3334 = vmax.f32 %v3129, 0.0
    %v3335 = vmax.f32 %v3131, 0.0
    %v3336 = vmax.f32 %v3134, 0.0
    %v3337 = vmax.f32 %v3136, 0.0
    %v3338 = vmax.f32 %v3139, 0.0
    %v3339 = vmax.f32 %v3141, 0.0
    %v3340 = vmax.f32 %v3144, 0.0
    %v3341 = vmax.f32 %v3146, 0.0
    %v3342 = vmax.f32 %v3149, 0.0
    %v3343 = vmax.f32 %v3151, 0.0
    %v3344 = vmax.f32 %v3154, 0.0
    %v3345 = vmax.f32 %v3156, 0.0
    %v3346 = vmax.f32 %v3159, 0.0
    %v3347 = vmax.f32 %v3161, 0.0
    %v3348 = vmax.f32 %v3164, 0.0
    %v3349 = vmax.f32 %v3166, 0.0
    %v3350 = vmax.f32 %v3169, 0.0
    %v3351 = vmax.f32 %v3171, 0.0
    %v3352 = vmax.f32 %v3174, 0.0
    %v3353 = vmax.f32 %v3176, 0.0
    %v3354 = vmax.f32 %v3179, 0.0
    %v3355 = vmax.f32 %v3181, 0.0
    %v3356 = vmax.f32 %v3184, 0.0
    %v3357 = vmax.f32 %v3186, 0.0
    %v3358 = vmax.f32 %v3189, 0.0
    %v3359 = vmax.f32 %v3191, 0.0
    %v3360 = vmax.f32 %v3194, 0.0
    %v3361 = vmax.f32 %v3196, 0.0
    %v3362 = vmax.f32 %v3199, 0.0
    %v3363 = vmax.f32 %v3201, 0.0
    %v3364 = vmax.f32 %v3204, 0.0
    %v3365 = vmax.f32 %v3206, 0.0
    %v3366 = vmax.f32 %v3209, 0.0
    %v3367 = vmax.f32 %v3211, 0.0
    %v3368 = vmax.f32 %v3214, 0.0
    %v3369 = vmax.f32 %v3216, 0.0
    %v3370 = vmax.f32 %v3219, 0.0
    %v3371 = vmax.f32 %v3221, 0.0
    %v3372 = vmax.f32 %v3224, 0.0
    %v3373 = vmax.f32 %v3226, 0.0
    %v3374 = vmax.f32 %v3229, 0.0
    %v3375 = vmax.f32 %v3231, 0.0
    %v3376 = vmax.f32 %v3234, 0.0
    %v3377 = vmax.f32 %v3236, 0.0
    %v3378 = vmax.f32 %v3239, 0.0
    %v3379 = vmax.f32 %v3241, 0.0
    %v3380 = vmax.f32 %v3244, 0.0
    %v3381 = vmax.f32 %v3246, 0.0
    %v3382 = vmax.f32 %v3249, 0.0
    %v3383 = vmax.f32 %v3251, 0.0
    %v3384 = vmax.f32 %v3254, 0.0
    %v3385 = vmax.f32 %v3256, 0.0
    %v3386 = vpack.c.bf16 %v3259, %v3258
    %v3387 = vpack.c.bf16 %v3261, %v3260
    %v3388 = vpack.c.bf16 %v3263, %v3262
    %v3389 = vpack.c.bf16 %v3265, %v3264
    %v3390 = vpack.c.bf16 %v3267, %v3266
    %v3391 = vpack.c.bf16 %v3269, %v3268
    %v3392 = vpack.c.bf16 %v3271, %v3270
    %v3393 = vpack.c.bf16 %v3273, %v3272
    %v3394 = vpack.c.bf16 %v3275, %v3274
    %v3395 = vpack.c.bf16 %v3277, %v3276
    %v3396 = vpack.c.bf16 %v3279, %v3278
    %v3397 = vpack.c.bf16 %v3281, %v3280
    %v3398 = vpack.c.bf16 %v3283, %v3282
    %v3399 = vpack.c.bf16 %v3285, %v3284
    %v3400 = vpack.c.bf16 %v3287, %v3286
    %v3401 = vpack.c.bf16 %v3289, %v3288
    %v3402 = vpack.c.bf16 %v3291, %v3290
    %v3403 = vpack.c.bf16 %v3293, %v3292
    %v3404 = vpack.c.bf16 %v3295, %v3294
    %v3405 = vpack.c.bf16 %v3297, %v3296
    %v3406 = vpack.c.bf16 %v3299, %v3298
    %v3407 = vpack.c.bf16 %v3301, %v3300
    %v3408 = vpack.c.bf16 %v3303, %v3302
    %v3409 = vpack.c.bf16 %v3305, %v3304
    %v3410 = vpack.c.bf16 %v3307, %v3306
    %v3411 = vpack.c.bf16 %v3309, %v3308
    %v3412 = vpack.c.bf16 %v3311, %v3310
    %v3413 = vpack.c.bf16 %v3313, %v3312
    %v3414 = vpack.c.bf16 %v3315, %v3314
    %v3415 = vpack.c.bf16 %v3317, %v3316
    %v3416 = vpack.c.bf16 %v3319, %v3318
    %v3417 = vpack.c.bf16 %v3321, %v3320
    %v3418 = vpack.c.bf16 %v3323, %v3322
    %v3419 = vpack.c.bf16 %v3325, %v3324
    %v3420 = vpack.c.bf16 %v3327, %v3326
    %v3421 = vpack.c.bf16 %v3329, %v3328
    %v3422 = vpack.c.bf16 %v3331, %v3330
    %v3423 = vpack.c.bf16 %v3333, %v3332
    %v3424 = vpack.c.bf16 %v3335, %v3334
    %v3425 = vpack.c.bf16 %v3337, %v3336
    %v3426 = vpack.c.bf16 %v3339, %v3338
    %v3427 = vpack.c.bf16 %v3341, %v3340
    %v3428 = vpack.c.bf16 %v3343, %v3342
    %v3429 = vpack.c.bf16 %v3345, %v3344
    %v3430 = vpack.c.bf16 %v3347, %v3346
    %v3431 = vpack.c.bf16 %v3349, %v3348
    %v3432 = vpack.c.bf16 %v3351, %v3350
    %v3433 = vpack.c.bf16 %v3353, %v3352
    %v3434 = vpack.c.bf16 %v3355, %v3354
    %v3435 = vpack.c.bf16 %v3357, %v3356
    %v3436 = vpack.c.bf16 %v3359, %v3358
    %v3437 = vpack.c.bf16 %v3361, %v3360
    %v3438 = vpack.c.bf16 %v3363, %v3362
    %v3439 = vpack.c.bf16 %v3365, %v3364
    %v3440 = vpack.c.bf16 %v3367, %v3366
    %v3441 = vpack.c.bf16 %v3369, %v3368
    %v3442 = vpack.c.bf16 %v3371, %v3370
    %v3443 = vpack.c.bf16 %v3373, %v3372
    %v3444 = vpack.c.bf16 %v3375, %v3374
    %v3445 = vpack.c.bf16 %v3377, %v3376
    %v3446 = vpack.c.bf16 %v3379, %v3378
    %v3447 = vpack.c.bf16 %v3381, %v3380
    %v3448 = vpack.c.bf16 %v3383, %v3382
    %v3449 = vpack.c.bf16 %v3385, %v3384
    %v3451 = vsel %vm1855, %v3386, 0
    %v3454 = vsel %vm1855, %v3387, 0
    %v3457 = vsel %vm1855, %v3388, 0
    %v3460 = vsel %vm1855, %v3389, 0
    %v3463 = vsel %vm1855, %v3390, 0
    %v3466 = vsel %vm1855, %v3391, 0
    %v3469 = vsel %vm1855, %v3392, 0
    %v3472 = vsel %vm1855, %v3393, 0
    %v3475 = vsel %vm1855, %v3394, 0
    %v3478 = vsel %vm1855, %v3395, 0
    %v3481 = vsel %vm1855, %v3396, 0
    %v3484 = vsel %vm1855, %v3397, 0
    %v3487 = vsel %vm1855, %v3398, 0
    %v3490 = vsel %vm1855, %v3399, 0
    %v3493 = vsel %vm1855, %v3400, 0
    %v3496 = vsel %vm1855, %v3401, 0
    %v3499 = vsel %vm1855, %v3402, 0
    %v3502 = vsel %vm1855, %v3403, 0
    %v3505 = vsel %vm1855, %v3404, 0
    %v3508 = vsel %vm1855, %v3405, 0
    %v3511 = vsel %vm1855, %v3406, 0
    %v3514 = vsel %vm1855, %v3407, 0
    %v3517 = vsel %vm1855, %v3408, 0
    %v3520 = vsel %vm1855, %v3409, 0
    %v3523 = vsel %vm1855, %v3410, 0
    %v3526 = vsel %vm1855, %v3411, 0
    %v3529 = vsel %vm1855, %v3412, 0
    %v3532 = vsel %vm1855, %v3413, 0
    %v3535 = vsel %vm1855, %v3414, 0
    %v3538 = vsel %vm1855, %v3415, 0
    %v3541 = vsel %vm1855, %v3416, 0
    %v3544 = vsel %vm1855, %v3417, 0
    %v3547 = vsel %vm1855, %v3418, 0
    %v3550 = vsel %vm1855, %v3419, 0
    %v3553 = vsel %vm1855, %v3420, 0
    %v3556 = vsel %vm1855, %v3421, 0
    %v3559 = vsel %vm1855, %v3422, 0
    %v3562 = vsel %vm1855, %v3423, 0
    %v3565 = vsel %vm1855, %v3424, 0
    %v3568 = vsel %vm1855, %v3425, 0
    %v3571 = vsel %vm1855, %v3426, 0
    %v3574 = vsel %vm1855, %v3427, 0
    %v3577 = vsel %vm1855, %v3428, 0
    %v3580 = vsel %vm1855, %v3429, 0
    %v3583 = vsel %vm1855, %v3430, 0
    %v3586 = vsel %vm1855, %v3431, 0
    %v3589 = vsel %vm1855, %v3432, 0
    %v3592 = vsel %vm1855, %v3433, 0
    %v3595 = vsel %vm1855, %v3434, 0
    %v3598 = vsel %vm1855, %v3435, 0
    %v3601 = vsel %vm1855, %v3436, 0
    %v3604 = vsel %vm1855, %v3437, 0
    %v3607 = vsel %vm1855, %v3438, 0
    %v3610 = vsel %vm1855, %v3439, 0
    %v3613 = vsel %vm1855, %v3440, 0
    %v3616 = vsel %vm1855, %v3441, 0
    %v3619 = vsel %vm1855, %v3442, 0
    %v3622 = vsel %vm1855, %v3443, 0
    %v3625 = vsel %vm1855, %v3444, 0
    %v3628 = vsel %vm1855, %v3445, 0
    %v3631 = vsel %vm1855, %v3446, 0
    %v3634 = vsel %vm1855, %v3447, 0
    %v3637 = vsel %vm1855, %v3448, 0
    %v3640 = vsel %vm1855, %v3449, 0
    %3642 = vmatpush.bf16.msra.mxu0 0
    %3643 = vmatpush.bf16.msra.mxu0 0
    %3644 = vmatpush.bf16.msra.mxu0 0
    %3645 = vmatpush.bf16.msra.mxu0 0
    %3646 = vmatpush.bf16.msra.mxu0 %v1850
    %3647 = vmatpush.bf16.msra.mxu0 %v1849
    %3648 = vmatpush.bf16.msra.mxu0 %v1848
    %3649 = vmatpush.bf16.msra.mxu0 %v1847
    %3650 = vmatmul.bf16.gmra.mxu0 %v3451
    %v3651 = vpop.f32.mrf.mxu0
    %v3652 = vadd.f32 %v1829, %v3651
    %v3653 = vpop.f32.mrf.mxu0
    %v3654 = vadd.f32 %v1829, %v3653
    %3655 = vmatmul.bf16.gmra.mxu0 %v3454
    %v3656 = vpop.f32.mrf.mxu0
    %v3657 = vadd.f32 %v1829, %v3656
    %v3658 = vpop.f32.mrf.mxu0
    %v3659 = vadd.f32 %v1829, %v3658
    %3660 = vmatmul.bf16.gmra.mxu0 %v3457
    %v3661 = vpop.f32.mrf.mxu0
    %v3662 = vadd.f32 %v1829, %v3661
    %v3663 = vpop.f32.mrf.mxu0
    %v3664 = vadd.f32 %v1829, %v3663
    %3665 = vmatmul.bf16.gmra.mxu0 %v3460
    %v3666 = vpop.f32.mrf.mxu0
    %v3667 = vadd.f32 %v1829, %v3666
    %v3668 = vpop.f32.mrf.mxu0
    %v3669 = vadd.f32 %v1829, %v3668
    %3670 = vmatmul.bf16.gmra.mxu0 %v3463
    %v3671 = vpop.f32.mrf.mxu0
    %v3672 = vadd.f32 %v1829, %v3671
    %v3673 = vpop.f32.mrf.mxu0
    %v3674 = vadd.f32 %v1829, %v3673
    %3675 = vmatmul.bf16.gmra.mxu0 %v3466
    %v3676 = vpop.f32.mrf.mxu0
    %v3677 = vadd.f32 %v1829, %v3676
    %v3678 = vpop.f32.mrf.mxu0
    %v3679 = vadd.f32 %v1829, %v3678
    %3680 = vmatmul.bf16.gmra.mxu0 %v3469
    %v3681 = vpop.f32.mrf.mxu0
    %v3682 = vadd.f32 %v1829, %v3681
    %v3683 = vpop.f32.mrf.mxu0
    %v3684 = vadd.f32 %v1829, %v3683
    %3685 = vmatmul.bf16.gmra.mxu0 %v3472
    %v3686 = vpop.f32.mrf.mxu0
    %v3687 = vadd.f32 %v1829, %v3686
    %v3688 = vpop.f32.mrf.mxu0
    %v3689 = vadd.f32 %v1829, %v3688
    %3690 = vmatmul.bf16.gmra.mxu0 %v3475
    %v3691 = vpop.f32.mrf.mxu0
    %v3692 = vadd.f32 %v1829, %v3691
    %v3693 = vpop.f32.mrf.mxu0
    %v3694 = vadd.f32 %v1829, %v3693
    %3695 = vmatmul.bf16.gmra.mxu0 %v3478
    %v3696 = vpop.f32.mrf.mxu0
    %v3697 = vadd.f32 %v1829, %v3696
    %v3698 = vpop.f32.mrf.mxu0
    %v3699 = vadd.f32 %v1829, %v3698
    %3700 = vmatmul.bf16.gmra.mxu0 %v3481
    %v3701 = vpop.f32.mrf.mxu0
    %v3702 = vadd.f32 %v1829, %v3701
    %v3703 = vpop.f32.mrf.mxu0
    %v3704 = vadd.f32 %v1829, %v3703
    %3705 = vmatmul.bf16.gmra.mxu0 %v3484
    %v3706 = vpop.f32.mrf.mxu0
    %v3707 = vadd.f32 %v1829, %v3706
    %v3708 = vpop.f32.mrf.mxu0
    %v3709 = vadd.f32 %v1829, %v3708
    %3710 = vmatmul.bf16.gmra.mxu0 %v3487
    %v3711 = vpop.f32.mrf.mxu0
    %v3712 = vadd.f32 %v1829, %v3711
    %v3713 = vpop.f32.mrf.mxu0
    %v3714 = vadd.f32 %v1829, %v3713
    %3715 = vmatmul.bf16.gmra.mxu0 %v3490
    %v3716 = vpop.f32.mrf.mxu0
    %v3717 = vadd.f32 %v1829, %v3716
    %v3718 = vpop.f32.mrf.mxu0
    %v3719 = vadd.f32 %v1829, %v3718
    %3720 = vmatmul.bf16.gmra.mxu0 %v3493
    %v3721 = vpop.f32.mrf.mxu0
    %v3722 = vadd.f32 %v1829, %v3721
    %v3723 = vpop.f32.mrf.mxu0
    %v3724 = vadd.f32 %v1829, %v3723
    %3725 = vmatmul.bf16.gmra.mxu0 %v3496
    %v3726 = vpop.f32.mrf.mxu0
    %v3727 = vadd.f32 %v1829, %v3726
    %v3728 = vpop.f32.mrf.mxu0
    %v3729 = vadd.f32 %v1829, %v3728
    %3730 = vmatmul.bf16.gmra.mxu0 %v3499
    %v3731 = vpop.f32.mrf.mxu0
    %v3732 = vadd.f32 %v1829, %v3731
    %v3733 = vpop.f32.mrf.mxu0
    %v3734 = vadd.f32 %v1829, %v3733
    %3735 = vmatmul.bf16.gmra.mxu0 %v3502
    %v3736 = vpop.f32.mrf.mxu0
    %v3737 = vadd.f32 %v1829, %v3736
    %v3738 = vpop.f32.mrf.mxu0
    %v3739 = vadd.f32 %v1829, %v3738
    %3740 = vmatmul.bf16.gmra.mxu0 %v3505
    %v3741 = vpop.f32.mrf.mxu0
    %v3742 = vadd.f32 %v1829, %v3741
    %v3743 = vpop.f32.mrf.mxu0
    %v3744 = vadd.f32 %v1829, %v3743
    %3745 = vmatmul.bf16.gmra.mxu0 %v3508
    %v3746 = vpop.f32.mrf.mxu0
    %v3747 = vadd.f32 %v1829, %v3746
    %v3748 = vpop.f32.mrf.mxu0
    %v3749 = vadd.f32 %v1829, %v3748
    %3750 = vmatmul.bf16.gmra.mxu0 %v3511
    %v3751 = vpop.f32.mrf.mxu0
    %v3752 = vadd.f32 %v1829, %v3751
    %v3753 = vpop.f32.mrf.mxu0
    %v3754 = vadd.f32 %v1829, %v3753
    %3755 = vmatmul.bf16.gmra.mxu0 %v3514
    %v3756 = vpop.f32.mrf.mxu0
    %v3757 = vadd.f32 %v1829, %v3756
    %v3758 = vpop.f32.mrf.mxu0
    %v3759 = vadd.f32 %v1829, %v3758
    %3760 = vmatmul.bf16.gmra.mxu0 %v3517
    %v3761 = vpop.f32.mrf.mxu0
    %v3762 = vadd.f32 %v1829, %v3761
    %v3763 = vpop.f32.mrf.mxu0
    %v3764 = vadd.f32 %v1829, %v3763
    %3765 = vmatmul.bf16.gmra.mxu0 %v3520
    %v3766 = vpop.f32.mrf.mxu0
    %v3767 = vadd.f32 %v1829, %v3766
    %v3768 = vpop.f32.mrf.mxu0
    %v3769 = vadd.f32 %v1829, %v3768
    %3770 = vmatmul.bf16.gmra.mxu0 %v3523
    %v3771 = vpop.f32.mrf.mxu0
    %v3772 = vadd.f32 %v1829, %v3771
    %v3773 = vpop.f32.mrf.mxu0
    %v3774 = vadd.f32 %v1829, %v3773
    %3775 = vmatmul.bf16.gmra.mxu0 %v3526
    %v3776 = vpop.f32.mrf.mxu0
    %v3777 = vadd.f32 %v1829, %v3776
    %v3778 = vpop.f32.mrf.mxu0
    %v3779 = vadd.f32 %v1829, %v3778
    %3780 = vmatmul.bf16.gmra.mxu0 %v3529
    %v3781 = vpop.f32.mrf.mxu0
    %v3782 = vadd.f32 %v1829, %v3781
    %v3783 = vpop.f32.mrf.mxu0
    %v3784 = vadd.f32 %v1829, %v3783
    %3785 = vmatmul.bf16.gmra.mxu0 %v3532
    %v3786 = vpop.f32.mrf.mxu0
    %v3787 = vadd.f32 %v1829, %v3786
    %v3788 = vpop.f32.mrf.mxu0
    %v3789 = vadd.f32 %v1829, %v3788
    %3790 = vmatmul.bf16.gmra.mxu0 %v3535
    %v3791 = vpop.f32.mrf.mxu0
    %v3792 = vadd.f32 %v1829, %v3791
    %v3793 = vpop.f32.mrf.mxu0
    %v3794 = vadd.f32 %v1829, %v3793
    %3795 = vmatmul.bf16.gmra.mxu0 %v3538
    %v3796 = vpop.f32.mrf.mxu0
    %v3797 = vadd.f32 %v1829, %v3796
    %v3798 = vpop.f32.mrf.mxu0
    %v3799 = vadd.f32 %v1829, %v3798
    %3800 = vmatmul.bf16.gmra.mxu0 %v3541
    %v3801 = vpop.f32.mrf.mxu0
    %v3802 = vadd.f32 %v1829, %v3801
    %v3803 = vpop.f32.mrf.mxu0
    %v3804 = vadd.f32 %v1829, %v3803
    %3805 = vmatmul.bf16.gmra.mxu0 %v3544
    %v3806 = vpop.f32.mrf.mxu0
    %v3807 = vadd.f32 %v1829, %v3806
    %v3808 = vpop.f32.mrf.mxu0
    %v3809 = vadd.f32 %v1829, %v3808
    %3810 = vmatmul.bf16.gmra.mxu0 %v3547
    %v3811 = vpop.f32.mrf.mxu0
    %v3812 = vadd.f32 %v1829, %v3811
    %v3813 = vpop.f32.mrf.mxu0
    %v3814 = vadd.f32 %v1829, %v3813
    %3815 = vmatmul.bf16.gmra.mxu0 %v3550
    %v3816 = vpop.f32.mrf.mxu0
    %v3817 = vadd.f32 %v1829, %v3816
    %v3818 = vpop.f32.mrf.mxu0
    %v3819 = vadd.f32 %v1829, %v3818
    %3820 = vmatmul.bf16.gmra.mxu0 %v3553
    %v3821 = vpop.f32.mrf.mxu0
    %v3822 = vadd.f32 %v1829, %v3821
    %v3823 = vpop.f32.mrf.mxu0
    %v3824 = vadd.f32 %v1829, %v3823
    %3825 = vmatmul.bf16.gmra.mxu0 %v3556
    %v3826 = vpop.f32.mrf.mxu0
    %v3827 = vadd.f32 %v1829, %v3826
    %v3828 = vpop.f32.mrf.mxu0
    %v3829 = vadd.f32 %v1829, %v3828
    %3830 = vmatmul.bf16.gmra.mxu0 %v3559
    %v3831 = vpop.f32.mrf.mxu0
    %v3832 = vadd.f32 %v1829, %v3831
    %v3833 = vpop.f32.mrf.mxu0
    %v3834 = vadd.f32 %v1829, %v3833
    %3835 = vmatmul.bf16.gmra.mxu0 %v3562
    %v3836 = vpop.f32.mrf.mxu0
    %v3837 = vadd.f32 %v1829, %v3836
    %v3838 = vpop.f32.mrf.mxu0
    %v3839 = vadd.f32 %v1829, %v3838
    %3840 = vmatmul.bf16.gmra.mxu0 %v3565
    %v3841 = vpop.f32.mrf.mxu0
    %v3842 = vadd.f32 %v1829, %v3841
    %v3843 = vpop.f32.mrf.mxu0
    %v3844 = vadd.f32 %v1829, %v3843
    %3845 = vmatmul.bf16.gmra.mxu0 %v3568
    %v3846 = vpop.f32.mrf.mxu0
    %v3847 = vadd.f32 %v1829, %v3846
    %v3848 = vpop.f32.mrf.mxu0
    %v3849 = vadd.f32 %v1829, %v3848
    %3850 = vmatmul.bf16.gmra.mxu0 %v3571
    %v3851 = vpop.f32.mrf.mxu0
    %v3852 = vadd.f32 %v1829, %v3851
    %v3853 = vpop.f32.mrf.mxu0
    %v3854 = vadd.f32 %v1829, %v3853
    %3855 = vmatmul.bf16.gmra.mxu0 %v3574
    %v3856 = vpop.f32.mrf.mxu0
    %v3857 = vadd.f32 %v1829, %v3856
    %v3858 = vpop.f32.mrf.mxu0
    %v3859 = vadd.f32 %v1829, %v3858
    %3860 = vmatmul.bf16.gmra.mxu0 %v3577
    %v3861 = vpop.f32.mrf.mxu0
    %v3862 = vadd.f32 %v1829, %v3861
    %v3863 = vpop.f32.mrf.mxu0
    %v3864 = vadd.f32 %v1829, %v3863
    %3865 = vmatmul.bf16.gmra.mxu0 %v3580
    %v3866 = vpop.f32.mrf.mxu0
    %v3867 = vadd.f32 %v1829, %v3866
    %v3868 = vpop.f32.mrf.mxu0
    %v3869 = vadd.f32 %v1829, %v3868
    %3870 = vmatmul.bf16.gmra.mxu0 %v3583
    %v3871 = vpop.f32.mrf.mxu0
    %v3872 = vadd.f32 %v1829, %v3871
    %v3873 = vpop.f32.mrf.mxu0
    %v3874 = vadd.f32 %v1829, %v3873
    %3875 = vmatmul.bf16.gmra.mxu0 %v3586
    %v3876 = vpop.f32.mrf.mxu0
    %v3877 = vadd.f32 %v1829, %v3876
    %v3878 = vpop.f32.mrf.mxu0
    %v3879 = vadd.f32 %v1829, %v3878
    %3880 = vmatmul.bf16.gmra.mxu0 %v3589
    %v3881 = vpop.f32.mrf.mxu0
    %v3882 = vadd.f32 %v1829, %v3881
    %v3883 = vpop.f32.mrf.mxu0
    %v3884 = vadd.f32 %v1829, %v3883
    %3885 = vmatmul.bf16.gmra.mxu0 %v3592
    %v3886 = vpop.f32.mrf.mxu0
    %v3887 = vadd.f32 %v1829, %v3886
    %v3888 = vpop.f32.mrf.mxu0
    %v3889 = vadd.f32 %v1829, %v3888
    %3890 = vmatmul.bf16.gmra.mxu0 %v3595
    %v3891 = vpop.f32.mrf.mxu0
    %v3892 = vadd.f32 %v1829, %v3891
    %v3893 = vpop.f32.mrf.mxu0
    %v3894 = vadd.f32 %v1829, %v3893
    %3895 = vmatmul.bf16.gmra.mxu0 %v3598
    %v3896 = vpop.f32.mrf.mxu0
    %v3897 = vadd.f32 %v1829, %v3896
    %v3898 = vpop.f32.mrf.mxu0
    %v3899 = vadd.f32 %v1829, %v3898
    %3900 = vmatmul.bf16.gmra.mxu0 %v3601
    %v3901 = vpop.f32.mrf.mxu0
    %v3902 = vadd.f32 %v1829, %v3901
    %v3903 = vpop.f32.mrf.mxu0
    %v3904 = vadd.f32 %v1829, %v3903
    %3905 = vmatmul.bf16.gmra.mxu0 %v3604
    %v3906 = vpop.f32.mrf.mxu0
    %v3907 = vadd.f32 %v1829, %v3906
    %v3908 = vpop.f32.mrf.mxu0
    %v3909 = vadd.f32 %v1829, %v3908
    %3910 = vmatmul.bf16.gmra.mxu0 %v3607
    %v3911 = vpop.f32.mrf.mxu0
    %v3912 = vadd.f32 %v1829, %v3911
    %v3913 = vpop.f32.mrf.mxu0
    %v3914 = vadd.f32 %v1829, %v3913
    %3915 = vmatmul.bf16.gmra.mxu0 %v3610
    %v3916 = vpop.f32.mrf.mxu0
    %v3917 = vadd.f32 %v1829, %v3916
    %v3918 = vpop.f32.mrf.mxu0
    %v3919 = vadd.f32 %v1829, %v3918
    %3920 = vmatmul.bf16.gmra.mxu0 %v3613
    %v3921 = vpop.f32.mrf.mxu0
    %v3922 = vadd.f32 %v1829, %v3921
    %v3923 = vpop.f32.mrf.mxu0
    %v3924 = vadd.f32 %v1829, %v3923
    %3925 = vmatmul.bf16.gmra.mxu0 %v3616
    %v3926 = vpop.f32.mrf.mxu0
    %v3927 = vadd.f32 %v1829, %v3926
    %v3928 = vpop.f32.mrf.mxu0
    %v3929 = vadd.f32 %v1829, %v3928
    %3930 = vmatmul.bf16.gmra.mxu0 %v3619
    %v3931 = vpop.f32.mrf.mxu0
    %v3932 = vadd.f32 %v1829, %v3931
    %v3933 = vpop.f32.mrf.mxu0
    %v3934 = vadd.f32 %v1829, %v3933
    %3935 = vmatmul.bf16.gmra.mxu0 %v3622
    %v3936 = vpop.f32.mrf.mxu0
    %v3937 = vadd.f32 %v1829, %v3936
    %v3938 = vpop.f32.mrf.mxu0
    %v3939 = vadd.f32 %v1829, %v3938
    %3940 = vmatmul.bf16.gmra.mxu0 %v3625
    %v3941 = vpop.f32.mrf.mxu0
    %v3942 = vadd.f32 %v1829, %v3941
    %v3943 = vpop.f32.mrf.mxu0
    %v3944 = vadd.f32 %v1829, %v3943
    %3945 = vmatmul.bf16.gmra.mxu0 %v3628
    %v3946 = vpop.f32.mrf.mxu0
    %v3947 = vadd.f32 %v1829, %v3946
    %v3948 = vpop.f32.mrf.mxu0
    %v3949 = vadd.f32 %v1829, %v3948
    %3950 = vmatmul.bf16.gmra.mxu0 %v3631
    %v3951 = vpop.f32.mrf.mxu0
    %v3952 = vadd.f32 %v1829, %v3951
    %v3953 = vpop.f32.mrf.mxu0
    %v3954 = vadd.f32 %v1829, %v3953
    %3955 = vmatmul.bf16.gmra.mxu0 %v3634
    %v3956 = vpop.f32.mrf.mxu0
    %v3957 = vadd.f32 %v1829, %v3956
    %v3958 = vpop.f32.mrf.mxu0
    %v3959 = vadd.f32 %v1829, %v3958
    %3960 = vmatmul.bf16.gmra.mxu0 %v3637
    %v3961 = vpop.f32.mrf.mxu0
    %v3962 = vadd.f32 %v1829, %v3961
    %v3963 = vpop.f32.mrf.mxu0
    %v3964 = vadd.f32 %v1829, %v3963
    %3965 = vmatmul.bf16.gmra.mxu0 %v3640
    %v3966 = vpop.f32.mrf.mxu0
    %v3967 = vadd.f32 %v1829, %v3966
    %v3968 = vpop.f32.mrf.mxu0
    %v3969 = vadd.f32 %v1829, %v3968
    %3970 = vdwg.mxu0
    %v3971 = vmax.f32 %v3652, %v3654
    %v3972 = vmax.f32 %v3971, %v3657
    %v3973 = vmax.f32 %v3972, %v3659
    %v3974 = vmax.f32 %v3973, %v3662
    %v3975 = vmax.f32 %v3974, %v3664
    %v3976 = vmax.f32 %v3975, %v3667
    %v3977 = vmax.f32 %v3976, %v3669
    %v3978 = vmax.f32 %v3977, %v3672
    %v3979 = vmax.f32 %v3978, %v3674
    %v3980 = vmax.f32 %v3979, %v3677
    %v3981 = vmax.f32 %v3980, %v3679
    %v3982 = vmax.f32 %v3981, %v3682
    %v3983 = vmax.f32 %v3982, %v3684
    %v3984 = vmax.f32 %v3983, %v3687
    %v3985 = vmax.f32 %v3984, %v3689
    %v3986 = vrot.slane %v3985, 4
    %v3987 = vmax.f32 %v3985, %v3986
    %v3988 = vrot.slane %v3987, 2
    %v3989 = vmax.f32 %v3987, %v3988
    %v3990 = vrot.slane %v3989, 1
    %v3991 = vmax.f32 %v3989, %v3990
    %v3992 = vmax.f32 %v3692, %v3694
    %v3993 = vmax.f32 %v3992, %v3697
    %v3994 = vmax.f32 %v3993, %v3699
    %v3995 = vmax.f32 %v3994, %v3702
    %v3996 = vmax.f32 %v3995, %v3704
    %v3997 = vmax.f32 %v3996, %v3707
    %v3998 = vmax.f32 %v3997, %v3709
    %v3999 = vmax.f32 %v3998, %v3712
    %v4000 = vmax.f32 %v3999, %v3714
    %v4001 = vmax.f32 %v4000, %v3717
    %v4002 = vmax.f32 %v4001, %v3719
    %v4003 = vmax.f32 %v4002, %v3722
    %v4004 = vmax.f32 %v4003, %v3724
    %v4005 = vmax.f32 %v4004, %v3727
    %v4006 = vmax.f32 %v4005, %v3729
    %v4007 = vrot.slane %v4006, 4
    %v4008 = vmax.f32 %v4006, %v4007
    %v4009 = vrot.slane %v4008, 2
    %v4010 = vmax.f32 %v4008, %v4009
    %v4011 = vrot.slane %v4010, 1
    %v4012 = vmax.f32 %v4010, %v4011
    %v4013 = vmax.f32 %v3732, %v3734
    %v4014 = vmax.f32 %v4013, %v3737
    %v4015 = vmax.f32 %v4014, %v3739
    %v4016 = vmax.f32 %v4015, %v3742
    %v4017 = vmax.f32 %v4016, %v3744
    %v4018 = vmax.f32 %v4017, %v3747
    %v4019 = vmax.f32 %v4018, %v3749
    %v4020 = vmax.f32 %v4019, %v3752
    %v4021 = vmax.f32 %v4020, %v3754
    %v4022 = vmax.f32 %v4021, %v3757
    %v4023 = vmax.f32 %v4022, %v3759
    %v4024 = vmax.f32 %v4023, %v3762
    %v4025 = vmax.f32 %v4024, %v3764
    %v4026 = vmax.f32 %v4025, %v3767
    %v4027 = vmax.f32 %v4026, %v3769
    %v4028 = vrot.slane %v4027, 4
    %v4029 = vmax.f32 %v4027, %v4028
    %v4030 = vrot.slane %v4029, 2
    %v4031 = vmax.f32 %v4029, %v4030
    %v4032 = vrot.slane %v4031, 1
    %v4033 = vmax.f32 %v4031, %v4032
    %v4034 = vmax.f32 %v3772, %v3774
    %v4035 = vmax.f32 %v4034, %v3777
    %v4036 = vmax.f32 %v4035, %v3779
    %v4037 = vmax.f32 %v4036, %v3782
    %v4038 = vmax.f32 %v4037, %v3784
    %v4039 = vmax.f32 %v4038, %v3787
    %v4040 = vmax.f32 %v4039, %v3789
    %v4041 = vmax.f32 %v4040, %v3792
    %v4042 = vmax.f32 %v4041, %v3794
    %v4043 = vmax.f32 %v4042, %v3797
    %v4044 = vmax.f32 %v4043, %v3799
    %v4045 = vmax.f32 %v4044, %v3802
    %v4046 = vmax.f32 %v4045, %v3804
    %v4047 = vmax.f32 %v4046, %v3807
    %v4048 = vmax.f32 %v4047, %v3809
    %v4049 = vrot.slane %v4048, 4
    %v4050 = vmax.f32 %v4048, %v4049
    %v4051 = vrot.slane %v4050, 2
    %v4052 = vmax.f32 %v4050, %v4051
    %v4053 = vrot.slane %v4052, 1
    %v4054 = vmax.f32 %v4052, %v4053
    %v4055 = vmax.f32 %v3812, %v3814
    %v4056 = vmax.f32 %v4055, %v3817
    %v4057 = vmax.f32 %v4056, %v3819
    %v4058 = vmax.f32 %v4057, %v3822
    %v4059 = vmax.f32 %v4058, %v3824
    %v4060 = vmax.f32 %v4059, %v3827
    %v4061 = vmax.f32 %v4060, %v3829
    %v4062 = vmax.f32 %v4061, %v3832
    %v4063 = vmax.f32 %v4062, %v3834
    %v4064 = vmax.f32 %v4063, %v3837
    %v4065 = vmax.f32 %v4064, %v3839
    %v4066 = vmax.f32 %v4065, %v3842
    %v4067 = vmax.f32 %v4066, %v3844
    %v4068 = vmax.f32 %v4067, %v3847
    %v4069 = vmax.f32 %v4068, %v3849
    %v4070 = vrot.slane %v4069, 4
    %v4071 = vmax.f32 %v4069, %v4070
    %v4072 = vrot.slane %v4071, 2
    %v4073 = vmax.f32 %v4071, %v4072
    %v4074 = vrot.slane %v4073, 1
    %v4075 = vmax.f32 %v4073, %v4074
    %v4076 = vmax.f32 %v3852, %v3854
    %v4077 = vmax.f32 %v4076, %v3857
    %v4078 = vmax.f32 %v4077, %v3859
    %v4079 = vmax.f32 %v4078, %v3862
    %v4080 = vmax.f32 %v4079, %v3864
    %v4081 = vmax.f32 %v4080, %v3867
    %v4082 = vmax.f32 %v4081, %v3869
    %v4083 = vmax.f32 %v4082, %v3872
    %v4084 = vmax.f32 %v4083, %v3874
    %v4085 = vmax.f32 %v4084, %v3877
    %v4086 = vmax.f32 %v4085, %v3879
    %v4087 = vmax.f32 %v4086, %v3882
    %v4088 = vmax.f32 %v4087, %v3884
    %v4089 = vmax.f32 %v4088, %v3887
    %v4090 = vmax.f32 %v4089, %v3889
    %v4091 = vrot.slane %v4090, 4
    %v4092 = vmax.f32 %v4090, %v4091
    %v4093 = vrot.slane %v4092, 2
    %v4094 = vmax.f32 %v4092, %v4093
    %v4095 = vrot.slane %v4094, 1
    %v4096 = vmax.f32 %v4094, %v4095
    %v4097 = vmax.f32 %v3892, %v3894
    %v4098 = vmax.f32 %v4097, %v3897
    %v4099 = vmax.f32 %v4098, %v3899
    %v4100 = vmax.f32 %v4099, %v3902
    %v4101 = vmax.f32 %v4100, %v3904
    %v4102 = vmax.f32 %v4101, %v3907
    %v4103 = vmax.f32 %v4102, %v3909
    %v4104 = vmax.f32 %v4103, %v3912
    %v4105 = vmax.f32 %v4104, %v3914
    %v4106 = vmax.f32 %v4105, %v3917
    %v4107 = vmax.f32 %v4106, %v3919
    %v4108 = vmax.f32 %v4107, %v3922
    %v4109 = vmax.f32 %v4108, %v3924
    %v4110 = vmax.f32 %v4109, %v3927
    %v4111 = vmax.f32 %v4110, %v3929
    %v4112 = vrot.slane %v4111, 4
    %v4113 = vmax.f32 %v4111, %v4112
    %v4114 = vrot.slane %v4113, 2
    %v4115 = vmax.f32 %v4113, %v4114
    %v4116 = vrot.slane %v4115, 1
    %v4117 = vmax.f32 %v4115, %v4116
    %v4118 = vmax.f32 %v3932, %v3934
    %v4119 = vmax.f32 %v4118, %v3937
    %v4120 = vmax.f32 %v4119, %v3939
    %v4121 = vmax.f32 %v4120, %v3942
    %v4122 = vmax.f32 %v4121, %v3944
    %v4123 = vmax.f32 %v4122, %v3947
    %v4124 = vmax.f32 %v4123, %v3949
    %v4125 = vmax.f32 %v4124, %v3952
    %v4126 = vmax.f32 %v4125, %v3954
    %v4127 = vmax.f32 %v4126, %v3957
    %v4128 = vmax.f32 %v4127, %v3959
    %v4129 = vmax.f32 %v4128, %v3962
    %v4130 = vmax.f32 %v4129, %v3964
    %v4131 = vmax.f32 %v4130, %v3967
    %v4132 = vmax.f32 %v4131, %v3969
    %v4133 = vrot.slane %v4132, 4
    %v4134 = vmax.f32 %v4132, %v4133
    %v4135 = vrot.slane %v4134, 2
    %v4136 = vmax.f32 %v4134, %v4135
    %v4137 = vrot.slane %v4136, 1
    %v4138 = vmax.f32 %v4136, %v4137
    %vm4147 = vcmask 1041409
    %v4148 = vsel %vm4147, %v2418, %v2397
    %vm4149 = vcmask 1042434
    %v4150 = vsel %vm4149, %v2439, %v4148
    %vm4151 = vcmask 1043459
    %v4152 = vsel %vm4151, %v2460, %v4150
    %vm4153 = vcmask 1044484
    %v4154 = vsel %vm4153, %v2481, %v4152
    %vm4155 = vcmask 1045509
    %v4156 = vsel %vm4155, %v2502, %v4154
    %vm4157 = vcmask 1046534
    %v4158 = vsel %vm4157, %v2523, %v4156
    %vm4159 = vcmask 1047559
    %v4160 = vsel %vm4159, %v2544, %v4158
    %v4162 = vsub.f32 %v900, %v4160
    %v4163 = vadd.f32 %v4162, 1e-06
    %v4164 = vmul.f32 %v4163, %v4163
    %4165 = vadd.xlane.f32.xlu0 %v4164
    %v4166 = vpop.xlane.xlu0 %4165
    %v4167 = vrsqrt.pop %v4166
    %v4168 = vmul.f32 %v4167, %v4166
    %v4169 = vmul.f32 %v4168, %v4167
    %v4170 = vmul.f32 0.5, %v4169
    %v4171 = vsub.f32 1.5, %v4170
    %v4172 = vmul.f32 %v4167, %v4171
    %v4173 = vmul.f32 %v4166, %v4172
    %vm4174 = vcmp.eq.f32.partialorder %v4166, inf
    %v4175 = vsel %vm4174, %v4166, %v4173
    %vm4176 = vcmp.eq.f32.partialorder %v4166, 0.0
    %v4177 = vand.u32 %v4166, 2147483648
    %v4178 = vsel %vm4176, %v4177, %v4175
    %v4187 = vsel %vm4147, %v4012, %v3991
    %v4188 = vsel %vm4149, %v4033, %v4187
    %v4189 = vsel %vm4151, %v4054, %v4188
    %v4190 = vsel %vm4153, %v4075, %v4189
    %v4191 = vsel %vm4155, %v4096, %v4190
    %v4192 = vsel %vm4157, %v4117, %v4191
    %v4193 = vsel %vm4159, %v4138, %v4192
    %v4195 = vsub.f32 %v900, %v4193
    %v4196 = vadd.f32 %v4195, 1e-06
    %v4197 = vmul.f32 %v4196, %v4196
    %4198 = vadd.xlane.f32.xlu0 %v4197
    %v4199 = vpop.xlane.xlu0 %4198
    %v4200 = vrsqrt.pop %v4199
    %v4201 = vmul.f32 %v4200, %v4199
    %v4202 = vmul.f32 %v4201, %v4200
    %v4203 = vmul.f32 0.5, %v4202
    %v4204 = vsub.f32 1.5, %v4203
    %v4205 = vmul.f32 %v4200, %v4204
    %v4206 = vmul.f32 %v4199, %v4205
    %vm4207 = vcmp.eq.f32.partialorder %v4199, inf
    %v4208 = vsel %vm4207, %v4199, %v4206
    %vm4209 = vcmp.eq.f32.partialorder %v4199, 0.0
    %v4210 = vand.u32 %v4199, 2147483648
    %v4211 = vsel %vm4209, %v4210, %v4208
    %v4212 = vsub.f32 %v4178, %v4211
    %v4213 = vadd.f32 %v4212, 0.5
    %v4214 = vmax.f32 %v4213, 0.0
    %v4215 = vrot.slane %v4214, 4
    %v4216 = vadd.f32 %v4214, %v4215
    %v4217 = vrot.slane %v4216, 2
    %v4218 = vadd.f32 %v4216, %v4217
    %v4219 = vrot.slane %v4218, 1
    %v4220 = vadd.f32 %v4218, %v4219
    %v4221 = vmul.f32 %v4220, 0.125
    %vm4222 = vcmask 0
    %4223 = vst.msk [vmem:[#allocation2] sm:$0x1] %vm4222, %v4221
    // Predicated region
    $region46: #{retrieval_head_forward_train.1} parent=1 // pred_check
      _
    $region47: #{retrieval_head_forward_train.1} parent=1 // pred_check_branch
      %4225 = sbr.rel (0) target = $region49
    $region48: #{retrieval_head_forward_train.1} parent=1 // pred_region
      %4227 = vsyncadd [#allocation3], 0
      %s4229 = sshll.u32 [#allocation2], 4
      %s4230 = int_to_ptr.vmem [resolvable:$true] %s4229
      %s4231 = sshll.u32 %s11, 4
      %s4232 = int_to_ptr.hbm [resolvable:$true] %s4231
      %4234 = dma.vmem_to_hbm [thread:$0]  %s4230, 16, %s4232, [#allocation3]
    $region49: #{retrieval_head_forward_train.1} parent=1 // pred_fallthru
      _
    // Predicated region
    $region50: #{retrieval_head_forward_train.1} parent=1 // pred_check
      _
    $region51: #{retrieval_head_forward_train.1} parent=1 // pred_check_branch
      %4236 = sbr.rel (0) target = $region53
    $region52: #{retrieval_head_forward_train.1} parent=1 // pred_region
      %4238 = dma.done [#allocation3], 16
    $region53: #{retrieval_head_forward_train.1} parent=1 // pred_fallthru
      _
    %4239 = vsyncpa [#allocation3], 1

</llo_original>
